<compile_context>
chip_gen: v7x
topology: tpu7x:2x2x1
jax: 0.10.0
libtpu: 0.0.40
codegen_flags: <defaults>
</compile_context>

<pallas_src>
import functools

import jax
import jax.numpy as jnp
from jax import lax
from jax.experimental import pallas as pl
from jax.experimental.pallas import tpu as pltpu

# ----------------------------- config ---------------------------------------
NUM_CELLS = 4
EMBED = 32
HID_ROUTER = 16
PATH_HID = 128
NUM_LAYER_ROUTING = 3
TOTAL_PATHS = NUM_CELLS ** 2 * (NUM_LAYER_ROUTING - 1) + NUM_CELLS  # 36

_C = NUM_CELLS
_D = EMBED
_H = HID_ROUTER
_CD = _C * _D            # 128: lane-packed cell axis
_CC = _C * _C            # 16

# ---- small-parameter slab layout (rows x 128 lanes) ----
_SPR_W1 = 0                    # rows [0, D): router w1 (lanes r*H:(r+1)*H)
_SPR_W2 = _D                   # rows [D, D+H): router w2
_SPR_B1 = _D + _H              # row 48: router b1
_SPR_B2 = _SPR_B1 + 1          # row 49: router b2
_SPR_C0B = _SPR_B2 + 1         # row 50: layer-0 cell bias (lane-packed)
_SPR_C1B = _SPR_C0B + 1        # row 51
_SPR_C2B = _SPR_C1B + 1        # row 52
_SPR_PB = _SPR_C2B + 1         # row 53: path_mapping bias
SP_ROWS = 56

# ---- big-weight slab layout (rows x 128 lanes) ----
_W_C0 = 0                      # (D, CD)  layer-0 lane-concatenated cells
_W_C1 = _W_C0 + _D             # (CD, CD) layer-1 block-diagonal cells
_W_C2 = _W_C1 + _CD            # (CD, CD) layer-2 block-diagonal cells
_W_PW = _W_C2 + _CD            # (TOTAL_PATHS, PATH_HID) path_mapping weight
WSL_ROWS = _W_PW + TOTAL_PATHS  # 324

# ---- constant slab layout (rows x 128 lanes) ----
_K_S = 0                       # 4 selector mats S_j (CC, CD) at rows j*CC
_K_S2 = _C * _CC               # 64: selector for the 4->1 layer (C, CD)
_K_ONES = 72                   # block-diag ones (CC, CC) in lanes [0, CC)
_K_PLACE = 96                  # 4 place mats (CD, CD) at rows 96 + j*CD
_K_FOLD = _K_PLACE + _C * _CD  # 608: cell-fold (CD, CD), identity in lanes [0, D)
CSL_ROWS = _K_FOLD + _CD       # 736


# ------------------------------ fused kernel ---------------------------------
def _interaction_kernel(x_ref, rm_ref, wsl_ref, sp_ref, csl_ref, out_ref,
                        *, n_stc, want_pairs):
    f32 = jnp.float32
    BS = x_ref.shape[0]

    def dotf(a, b):
        return jnp.dot(a, b, preferred_element_type=f32)

    # per-block routing constants (identical for every image block)
    pool_img = rm_ref[0:1, :]                              # (1, BS) image mean
    pool_stc = rm_ref[1:1 + n_stc, :]                      # (n_stc, BS) per-sentence mean
    exp_stc = rm_ref[1 + n_stc:1 + n_stc + BS, 0:n_stc]    # (BS, n_stc) one-hot expand

    ones_grp = csl_ref[_K_ONES:_K_ONES + _CC, 0:_CC]       # (16,16) group-sum matrix
    fold = csl_ref[_K_FOLD:_K_FOLD + _CD, :]               # (CD,CD) sum-over-cells fold

    def router(inp, r):
        lane = r * _H
        n_out = _CC if r < 2 else _C
        w1 = sp_ref[_SPR_W1:_SPR_W1 + _D, lane:lane + _H]
        b1 = sp_ref[_SPR_B1:_SPR_B1 + 1, lane:lane + _H]
        w2 = sp_ref[_SPR_W2:_SPR_W2 + _H, lane:lane + n_out]
        b2 = sp_ref[_SPR_B2:_SPR_B2 + 1, lane:lane + n_out]
        h = jnp.maximum(dotf(inp, w1) + b1, 0.0)
        return dotf(h, w2) + b2

    def grouped_softmax(logits):            # softmax over each C-wide lane group
        m = jnp.max(logits, axis=-1, keepdims=True)   # row-constant: per-group safe
        e = jnp.exp(logits - m)
        denom = dotf(e, ones_grp)                      # group sums, lane-expanded (MXU)
        return e * pl.reciprocal(denom, approx=True)   # EUP

    def plain_softmax(logits):
        m = jnp.max(logits, axis=-1, keepdims=True)
        e = jnp.exp(logits - m)
        return e * pl.reciprocal(jnp.sum(e, axis=-1, keepdims=True), approx=True)

    def aggregate(y, wexp):
        # out chunk j = sum_c p[., c*C + j] * y chunk c  (all on MXU via place mats)
        acc = None
        for j in range(_C):
            place_j = csl_ref[_K_PLACE + j * _CD:_K_PLACE + (j + 1) * _CD, :]
            term = dotf(y * wexp[j], place_j)
            acc = term if acc is None else acc + term
        return acc

    x = x_ref[...].astype(f32)                             # (BS, D)

    # ---- Router 0 (per image) + DynamicInteraction_Layer0 (shared input) ----
    p0 = grouped_softmax(router(dotf(pool_img, x), 0))     # (1, CC)
    y0 = jnp.maximum(dotf(x, wsl_ref[_W_C0:_W_C0 + _D, :])
                     + sp_ref[_SPR_C0B:_SPR_C0B + 1, :], 0.0)            # (BS, CD)
    wexp0 = [dotf(p0, csl_ref[_K_S + j * _CC:_K_S + (j + 1) * _CC, :])   # (1, CD)
             for j in range(_C)]
    out0 = aggregate(y0, wexp0)                            # (BS, CD)

    # ---- Router 1 (per sentence) + DynamicInteraction_Layer (4 -> 4) ----
    pair0 = dotf(dotf(pool_stc, out0), fold)[:, 0:_D] * (1.0 / _C)       # (n_stc, D)
    p1 = grouped_softmax(router(pair0, 1))                 # (n_stc, CC)
    y1 = jnp.maximum(dotf(out0, wsl_ref[_W_C1:_W_C1 + _CD, :])
                     + sp_ref[_SPR_C1B:_SPR_C1B + 1, :], 0.0)
    wexp1 = [dotf(exp_stc, dotf(p1, csl_ref[_K_S + j * _CC:_K_S + (j + 1) * _CC, :]))
             for j in range(_C)]                           # (BS, CD) each, MXU expand
    out1 = aggregate(y1, wexp1)

    # ---- Router 2 ----
    pair1 = dotf(dotf(pool_stc, out1), fold)[:, 0:_D] * (1.0 / _C)
    p2 = plain_softmax(router(pair1, 2))                   # (n_stc, C)

    if want_pairs:
        # ---- DynamicInteraction_Layer (4 -> 1): pairs_emb_lst[0] ----
        y2 = jnp.maximum(dotf(out1, wsl_ref[_W_C2:_W_C2 + _CD, :])
                         + sp_ref[_SPR_C2B:_SPR_C2B + 1, :], 0.0)
        wexp2 = dotf(exp_stc, dotf(p2, csl_ref[_K_S2:_K_S2 + _C, :]))    # (BS, CD)
        out_ref[...] = dotf(y2 * wexp2, fold)[:, 0:_D].astype(out_ref.dtype)
    else:
        # ---- path aggregation -> path_mapping -> F.normalize (per image) ----
        p1m = jnp.mean(p1, axis=0, keepdims=True)          # mean over sentences
        p2m = jnp.mean(p2, axis=0, keepdims=True)
        proj = (dotf(p0, wsl_ref[_W_PW:_W_PW + _CC, :])
                + dotf(p1m, wsl_ref[_W_PW + _CC:_W_PW + 2 * _CC, :])
                + dotf(p2m, wsl_ref[_W_PW + 2 * _CC:_W_PW + 2 * _CC + _C, :])
                + sp_ref[_SPR_PB:_SPR_PB + 1, :])          # (1, PATH_HID)
        normed = proj * lax.rsqrt(jnp.maximum(
            jnp.sum(proj * proj, axis=-1, keepdims=True), 1e-24))
        out_ref[...] = jnp.broadcast_to(normed, out_ref.shape).astype(out_ref.dtype)


# ------------------------------ pallas_call builder ---------------------------
def _build_call(n_img, n_stc, L, want_pairs):
    BS = n_stc * L
    M = n_img * BS
    rm_rows = 1 + n_stc + BS

    if want_pairs:
        out_shape = jax.ShapeDtypeStruct((M, _D), jnp.float32)
        out_spec = pl.BlockSpec((BS, _D), lambda i: (i, 0))
    else:
        # one sublane-padded normalized path row per image (row 0 of each block)
        out_shape = jax.ShapeDtypeStruct((n_img * 8, PATH_HID), jnp.float32)
        out_spec = pl.BlockSpec((8, PATH_HID), lambda i: (i, 0))

    kern = functools.partial(_interaction_kernel, n_stc=n_stc, want_pairs=want_pairs)
    return pl.pallas_call(
        kern,
        out_shape=out_shape,
        grid_spec=pltpu.PrefetchScalarGridSpec(
            num_scalar_prefetch=0,
            grid=(n_img,),
            in_specs=[
                pl.BlockSpec((BS, _D), lambda i: (i, 0)),          # x rows of image i
                pl.BlockSpec((rm_rows, BS), lambda i: (0, 0)),     # pool/expand consts
                pl.BlockSpec((WSL_ROWS, _CD), lambda i: (0, 0)),   # big weights slab
                pl.BlockSpec((SP_ROWS, _CD), lambda i: (0, 0)),    # small params slab
                pl.BlockSpec((CSL_ROWS, _CD), lambda i: (0, 0)),   # selector/place/fold
            ],
            out_specs=out_spec,
        ),
        compiler_params=pltpu.CompilerParams(
            dimension_semantics=("parallel",),   # shard images across TCs on v7x
            vmem_limit_bytes=32 * 1024 * 1024,
        ),
    )


# ------------------------------ forward ---------------------------------------
@functools.partial(jax.jit, static_argnums=(1,))
def interaction_module_forward(x, a, packed):
    n_img, n_stc, L, D = x.shape
    x_flat = x.reshape(n_img * n_stc * L, D).astype(jnp.float32)
    call = _build_call(n_img, n_stc, L, want_pairs=bool(a))
    out = call(x_flat, packed["route_mat"], packed["weights"],
               packed["small"], packed["consts"])
    if a:   # mirrors `if a == True: return pairs_emb_lst[0]`
        return out.reshape(n_img, n_stc, L, D)
    normed = out.reshape(n_img, 8, PATH_HID)[:, 0, :]
    return normed @ normed.T    # tiny (n_img,128)@(128,n_img) epilogue in XLA


# --------------------------- host-side packing (once) -------------------------
def _block_diag(w):  # (C, D, D) -> (C*D, C*D), w[c] at block (c, c)
    C, D, _ = w.shape
    eye = jnp.eye(C, dtype=w.dtype)
    return (eye[:, :, None, None] * w[:, None, :, :]).transpose(0, 2, 1, 3).reshape(C * D, C * D)


def pack_params(params, n_stc, L):
    """One-time packing of parameters + routing constants (hoisted out of forward)."""
    f32 = jnp.float32
    BS = n_stc * L

    # per-block pooling / expansion (shared by every image block)
    stc_of_row = jnp.repeat(jnp.arange(n_stc), L)
    exp_stc = (stc_of_row[:, None] == jnp.arange(n_stc)[None, :]).astype(f32)  # (BS, n_stc)
    route_mat = jnp.concatenate([
        jnp.full((1, BS), 1.0 / BS, f32),               # image-mean row
        exp_stc.T / float(L),                           # per-sentence mean rows
        jnp.pad(exp_stc, ((0, 0), (0, BS - n_stc))),    # one-hot expand (lane padded)
    ], axis=0)                                          # (1 + n_stc + BS, BS)

    # big weights slab
    c0w = jnp.transpose(params["cells0_w"], (1, 0, 2)).reshape(_D, _CD)
    weights = jnp.concatenate([
        c0w,
        _block_diag(params["cells1_w"]),
        _block_diag(params["cells2_w"]),
        params["path_w"],
    ], axis=0).astype(f32)                              # (WSL_ROWS, CD)

    # small parameter slab
    sp = jnp.zeros((SP_ROWS, _CD), f32)
    for r, (w1, b1, w2, b2) in enumerate(
            [params["router0"], params["router1"], params["router2"]]):
        lane = r * _H
        n_out = w2.shape[1]
        sp = sp.at[_SPR_W1:_SPR_W1 + _D, lane:lane + _H].set(w1)
        sp = sp.at[_SPR_W2:_SPR_W2 + _H, lane:lane + n_out].set(w2)
        sp = sp.at[_SPR_B1, lane:lane + _H].set(b1[0])
        sp = sp.at[_SPR_B2, lane:lane + n_out].set(b2[0])
    sp = sp.at[_SPR_C0B].set(params["cells0_b"].reshape(_CD))
    sp = sp.at[_SPR_C1B].set(params["cells1_b"].reshape(_CD))
    sp = sp.at[_SPR_C2B].set(params["cells2_b"].reshape(_CD))
    sp = sp.at[_SPR_PB].set(params["path_b"].reshape(PATH_HID))

    # constant selector / place / fold matrices
    lane_i = jnp.arange(_CD)
    cell_of_lane = lane_i // _D
    p_idx = jnp.arange(_CC)
    # S_j[p, l] = 1 iff p % C == j and p // C == l // D   (lane-expand path weights)
    s_stack = ((p_idx[None, :, None] % _C == jnp.arange(_C)[:, None, None]) &
               (p_idx[None, :, None] // _C == cell_of_lane[None, None, :])
               ).astype(f32).reshape(_C * _CC, _CD)
    s2 = (jnp.arange(_C)[:, None] == cell_of_lane[None, :]).astype(f32)      # (C, CD)
    grp = p_idx // _C
    ones_grp = jnp.pad((grp[:, None] == grp[None, :]).astype(f32),
                       ((0, 0), (0, _CD - _CC)))                             # (CC, CD)
    # Place_j[r, l] = 1 iff l // D == j and r % D == l % D  (fold cells into chunk j)
    place_stack = ((lane_i[None, None, :] // _D == jnp.arange(_C)[:, None, None]) &
                   (lane_i[None, :, None] % _D == lane_i[None, None, :] % _D)
                   ).astype(f32).reshape(_C * _CD, _CD)
    fold = ((lane_i[None, :] < _D) &
            (lane_i[:, None] % _D == lane_i[None, :])).astype(f32)           # (CD, CD)
    consts = jnp.concatenate([
        s_stack,                                            # rows [0, 64)
        s2,                                                 # [64, 68)
        jnp.zeros((_K_ONES - (_K_S2 + _C), _CD), f32),      # pad -> 72
        ones_grp,                                           # [72, 88)
        jnp.zeros((_K_PLACE - (_K_ONES + _CC), _CD), f32),  # pad -> 96
        place_stack,                                        # [96, 608)
        fold,                                               # [608, 736)
    ], axis=0)

    return {"route_mat": route_mat, "weights": weights, "small": sp, "consts": consts}


# ------------------------------ parameters ------------------------------------
def init_params(key):
    C, D, H = NUM_CELLS, EMBED, HID_ROUTER
    ks = iter(jax.random.split(key, 16))

    def nrm(shape, fan_in):
        return jax.random.normal(next(ks), shape, jnp.float32) / (float(fan_in) ** 0.5)

    return {
        "router0": (nrm((D, H), D), jnp.zeros((1, H), jnp.float32),
                    nrm((H, C * C), H), jnp.zeros((1, C * C), jnp.float32)),
        "router1": (nrm((D, H), D), jnp.zeros((1, H), jnp.float32),
                    nrm((H, C * C), H), jnp.zeros((1, C * C), jnp.float32)),
        "router2": (nrm((D, H), D), jnp.zeros((1, H), jnp.float32),
                    nrm((H, C), H), jnp.zeros((1, C), jnp.float32)),
        "cells0_w": nrm((C, D, D), D), "cells0_b": jnp.zeros((C, 1, D), jnp.float32),
        "cells1_w": nrm((C, D, D), D), "cells1_b": jnp.zeros((C, 1, D), jnp.float32),
        "cells2_w": nrm((C, D, D), D), "cells2_b": jnp.zeros((C, 1, D), jnp.float32),
        "path_w": nrm((TOTAL_PATHS, PATH_HID), TOTAL_PATHS),
        "path_b": jnp.zeros((1, PATH_HID), jnp.float32),
    }


# --------------------------- pure-JAX reference --------------------------------
def _reference_forward(x, params):
    n_img, n_stc, L, D = x.shape
    C = NUM_CELLS
    M = n_img * n_stc * L

    def router(inp, w1, b1, w2, b2):
        return jnp.maximum(inp @ w1 + b1, 0.0) @ w2 + b2

    def interaction(x_cells, w, b, p_rows):
        y = jnp.maximum(jnp.einsum("cmd,cde->cme", x_cells, w) + b, 0.0)
        return jnp.einsum("cjm,cmd->jmd", p_rows[..., 0], y)

    img_pool = jnp.mean(x, axis=(1, 2))
    paths_l0 = jax.nn.softmax(router(img_pool, *params["router0"]).reshape(n_img, C, C), axis=-1)
    x_flat = x.reshape(M, D)
    x_cells0 = jnp.broadcast_to(x_flat[None], (C, M, D))
    p0_rows = (jnp.broadcast_to(paths_l0[:, None, None], (n_img, n_stc, L, C, C))
               .reshape(M, C, C).transpose(1, 2, 0)[..., None])
    out0 = interaction(x_cells0, params["cells0_w"], params["cells0_b"], p0_rows)

    pair_pool = jnp.mean(out0.reshape(C, n_img, n_stc, L, D), axis=(0, 3))
    paths_l1 = jax.nn.softmax(router(pair_pool.reshape(-1, D), *params["router1"])
                              .reshape(n_img, n_stc, C, C), axis=-1)
    p1_rows = (jnp.broadcast_to(paths_l1[:, :, None], (n_img, n_stc, L, C, C))
               .reshape(M, C, C).transpose(1, 2, 0)[..., None])
    out1 = interaction(out0, params["cells1_w"], params["cells1_b"], p1_rows)

    pair_pool2 = jnp.mean(out1.reshape(C, n_img, n_stc, L, D), axis=(0, 3))
    paths_l2 = jax.nn.softmax(router(pair_pool2.reshape(-1, D), *params["router2"])
                              .reshape(n_img, n_stc, C, 1), axis=-2)
    p2_rows = (jnp.broadcast_to(paths_l2[:, :, None], (n_img, n_stc, L, C, 1))
               .reshape(M, C, 1).transpose(1, 2, 0)[..., None])
    out2 = interaction(out1, params["cells2_w"], params["cells2_b"], p2_rows)
    pairs = out2[0].reshape(n_img, n_stc, L, D)

    p_l0 = jnp.broadcast_to(paths_l0.reshape(n_img, 1, C * C), (n_img, n_stc, C * C))
    paths = jnp.concatenate([p_l0, paths_l1.reshape(n_img, n_stc, C * C),
                             paths_l2.reshape(n_img, n_stc, C)], axis=-1).mean(axis=1)
    proj = paths @ params["path_w"] + params["path_b"]
    nrm_ = jnp.sqrt(jnp.sum(proj * proj, axis=-1, keepdims=True))
    normed = proj / jnp.maximum(nrm_, 1e-12)
    return pairs, normed @ normed.T


# ------------------------------- main -----------------------------------------
if __name__ == "__main__":
    key = jax.random.PRNGKey(0)
    kx, kp = jax.random.split(key)

    n_img, n_stc, L = 4, 4, 8
    x = jax.random.normal(kx, (n_img, n_stc, L, EMBED), jnp.float32)
    params = init_params(kp)
    packed = pack_params(params, n_stc, L)        # one-time host-side packing

    sim = interaction_module_forward(x, False, packed)    # a == False -> sim_paths
    pairs = interaction_module_forward(x, True, packed)   # a == True  -> pairs_emb_lst[0]
    jax.block_until_ready((sim, pairs))

    assert sim.shape == (n_img, n_img)
    assert pairs.shape == (n_img, n_stc, L, EMBED)
    # diagonal of cosine-similarity matrix must be ~1 after F.normalize
    assert jnp.allclose(jnp.diag(sim), 1.0, atol=1e-3)

    # numerics must match the unfused pure-JAX reference
    pairs_ref, sim_ref = _reference_forward(x, params)
    assert jnp.allclose(sim, sim_ref, atol=5e-3, rtol=5e-3)
    assert jnp.allclose(pairs, pairs_ref, atol=5e-3, rtol=5e-3)

    print("KERNEL_OK")
</pallas_src>

<mosaic_0001>
module attributes {stable_mosaic.version = 11 : i64} {
  func.func @_interaction_kernel(%arg0: i32, %arg1: memref<32x32xf32, #tpu.memory_space<vmem>>, %arg2: memref<37x32xf32, #tpu.memory_space<vmem>>, %arg3: memref<324x128xf32, #tpu.memory_space<vmem>>, %arg4: memref<56x128xf32, #tpu.memory_space<vmem>>, %arg5: memref<736x128xf32, #tpu.memory_space<vmem>>, %arg6: memref<8x128xf32, #tpu.memory_space<vmem>>) attributes {dimension_semantics = [#tpu.dimension_semantics<parallel>], iteration_bounds = array<i64: 4>, scalar_prefetch = 0 : i64, scratch_operands = 0 : i64, tpu.core_type = #tpu.core_type<tc>, window_params = [{transform_indices = @transform_0, window_bounds = array<i64: 32, 32>}, {pipeline_mode = #tpu.pipeline_mode<synchronous>, transform_indices = @transform_1, window_bounds = array<i64: 37, 32>}, {pipeline_mode = #tpu.pipeline_mode<synchronous>, transform_indices = @transform_2, window_bounds = array<i64: 324, 128>}, {pipeline_mode = #tpu.pipeline_mode<synchronous>, transform_indices = @transform_3, window_bounds = array<i64: 56, 128>}, {pipeline_mode = #tpu.pipeline_mode<synchronous>, transform_indices = @transform_4, window_bounds = array<i64: 736, 128>}, {transform_indices = @transform_5, window_bounds = array<i64: 8, 128>}]} {
    %c0 = arith.constant 0 : index
    %c0_0 = arith.constant 0 : index
    %0 = vector.load %arg2[%c0, %c0_0] : memref<37x32xf32, #tpu.memory_space<vmem>>, vector<1x32xf32>
    %c1 = arith.constant 1 : index
    %c0_1 = arith.constant 0 : index
    %1 = vector.load %arg2[%c1, %c0_1] : memref<37x32xf32, #tpu.memory_space<vmem>>, vector<4x32xf32>
    %c5 = arith.constant 5 : index
    %c0_2 = arith.constant 0 : index
    %2 = vector.load %arg2[%c5, %c0_2] : memref<37x32xf32, #tpu.memory_space<vmem>>, vector<32x4xf32>
    %c72 = arith.constant 72 : index
    %c0_3 = arith.constant 0 : index
    %3 = vector.load %arg5[%c72, %c0_3] : memref<736x128xf32, #tpu.memory_space<vmem>>, vector<16x16xf32>
    %c608 = arith.constant 608 : index
    %c0_4 = arith.constant 0 : index
    %4 = vector.load %arg5[%c608, %c0_4] : memref<736x128xf32, #tpu.memory_space<vmem>>, vector<128x128xf32>
    %c0_5 = arith.constant 0 : index
    %c0_6 = arith.constant 0 : index
    %5 = vector.load %arg1[%c0_5, %c0_6] : memref<32x32xf32, #tpu.memory_space<vmem>>, vector<32x32xf32>
    %cst = arith.constant dense<0.000000e+00> : vector<1x32xf32>
    %6 = tpu.matmul %0, %5, %cst {dimension_numbers = #tpu.dot_dimension_numbers<[1], [0], [0], [1], [0, 0, 1, 1], [], []>} : vector<1x32xf32>, vector<32x32xf32>, vector<1x32xf32> -> vector<1x32xf32>
    %c0_7 = arith.constant 0 : index
    %c0_8 = arith.constant 0 : index
    %7 = vector.load %arg4[%c0_7, %c0_8] : memref<56x128xf32, #tpu.memory_space<vmem>>, vector<32x16xf32>
    %c48 = arith.constant 48 : index
    %c0_9 = arith.constant 0 : index
    %8 = vector.load %arg4[%c48, %c0_9] : memref<56x128xf32, #tpu.memory_space<vmem>>, vector<1x16xf32>
    %c32 = arith.constant 32 : index
    %c0_10 = arith.constant 0 : index
    %9 = vector.load %arg4[%c32, %c0_10] : memref<56x128xf32, #tpu.memory_space<vmem>>, vector<16x16xf32>
    %c49 = arith.constant 49 : index
    %c0_11 = arith.constant 0 : index
    %10 = vector.load %arg4[%c49, %c0_11] : memref<56x128xf32, #tpu.memory_space<vmem>>, vector<1x16xf32>
    %cst_12 = arith.constant dense<0.000000e+00> : vector<1x16xf32>
    %11 = tpu.matmul %6, %7, %cst_12 {dimension_numbers = #tpu.dot_dimension_numbers<[1], [0], [0], [1], [0, 0, 1, 1], [], []>} : vector<1x32xf32>, vector<32x16xf32>, vector<1x16xf32> -> vector<1x16xf32>
    %12 = arith.addf %11, %8 : vector<1x16xf32>
    %cst_13 = arith.constant 0.000000e+00 : f32
    %13 = vector.broadcast %cst_13 : f32 to vector<1x16xf32>
    %14 = arith.maximumf %12, %13 : vector<1x16xf32>
    %cst_14 = arith.constant dense<0.000000e+00> : vector<1x16xf32>
    %15 = tpu.matmul %14, %9, %cst_14 {dimension_numbers = #tpu.dot_dimension_numbers<[1], [0], [0], [1], [0, 0, 1, 1], [], []>} : vector<1x16xf32>, vector<16x16xf32>, vector<1x16xf32> -> vector<1x16xf32>
    %16 = arith.addf %15, %10 : vector<1x16xf32>
    %cst_15 = arith.constant dense<0xFF800000> : vector<1xf32>
    %17 = vector.multi_reduction <maximumf>, %16, %cst_15 [1] : vector<1x16xf32> to vector<1xf32>
    %18 = vector.shape_cast %17 : vector<1xf32> to vector<1x1xf32>
    %19 = vector.broadcast %18 : vector<1x1xf32> to vector<1x16xf32>
    %20 = arith.subf %16, %19 : vector<1x16xf32>
    %21 = math.exp %20 : vector<1x16xf32>
    %cst_16 = arith.constant dense<0.000000e+00> : vector<1x16xf32>
    %22 = tpu.matmul %21, %3, %cst_16 {dimension_numbers = #tpu.dot_dimension_numbers<[1], [0], [0], [1], [0, 0, 1, 1], [], []>} : vector<1x16xf32>, vector<16x16xf32>, vector<1x16xf32> -> vector<1x16xf32>
    %23 = tpu.reciprocal %22 {approx = true} : vector<1x16xf32> -> vector<1x16xf32>
    %24 = arith.mulf %21, %23 : vector<1x16xf32>
    %c0_17 = arith.constant 0 : index
    %c0_18 = arith.constant 0 : index
    %25 = vector.load %arg3[%c0_17, %c0_18] : memref<324x128xf32, #tpu.memory_space<vmem>>, vector<32x128xf32>
    %cst_19 = arith.constant dense<0.000000e+00> : vector<32x128xf32>
    %26 = tpu.matmul %5, %25, %cst_19 {dimension_numbers = #tpu.dot_dimension_numbers<[1], [0], [0], [1], [0, 0, 1, 1], [], []>} : vector<32x32xf32>, vector<32x128xf32>, vector<32x128xf32> -> vector<32x128xf32>
    %c50 = arith.constant 50 : index
    %c0_20 = arith.constant 0 : index
    %27 = vector.load %arg4[%c50, %c0_20] : memref<56x128xf32, #tpu.memory_space<vmem>>, vector<1x128xf32>
    %28 = vector.broadcast %27 : vector<1x128xf32> to vector<32x128xf32>
    %29 = arith.addf %26, %28 : vector<32x128xf32>
    %cst_21 = arith.constant 0.000000e+00 : f32
    %30 = vector.broadcast %cst_21 : f32 to vector<32x128xf32>
    %31 = arith.maximumf %29, %30 : vector<32x128xf32>
    %c0_22 = arith.constant 0 : index
    %c0_23 = arith.constant 0 : index
    %32 = vector.load %arg5[%c0_22, %c0_23] : memref<736x128xf32, #tpu.memory_space<vmem>>, vector<16x128xf32>
    %cst_24 = arith.constant dense<0.000000e+00> : vector<1x128xf32>
    %33 = tpu.matmul %24, %32, %cst_24 {dimension_numbers = #tpu.dot_dimension_numbers<[1], [0], [0], [1], [0, 0, 1, 1], [], []>} : vector<1x16xf32>, vector<16x128xf32>, vector<1x128xf32> -> vector<1x128xf32>
    %c16 = arith.constant 16 : index
    %c0_25 = arith.constant 0 : index
    %34 = vector.load %arg5[%c16, %c0_25] : memref<736x128xf32, #tpu.memory_space<vmem>>, vector<16x128xf32>
    %cst_26 = arith.constant dense<0.000000e+00> : vector<1x128xf32>
    %35 = tpu.matmul %24, %34, %cst_26 {dimension_numbers = #tpu.dot_dimension_numbers<[1], [0], [0], [1], [0, 0, 1, 1], [], []>} : vector<1x16xf32>, vector<16x128xf32>, vector<1x128xf32> -> vector<1x128xf32>
    %c32_27 = arith.constant 32 : index
    %c0_28 = arith.constant 0 : index
    %36 = vector.load %arg5[%c32_27, %c0_28] : memref<736x128xf32, #tpu.memory_space<vmem>>, vector<16x128xf32>
    %cst_29 = arith.constant dense<0.000000e+00> : vector<1x128xf32>
    %37 = tpu.matmul %24, %36, %cst_29 {dimension_numbers = #tpu.dot_dimension_numbers<[1], [0], [0], [1], [0, 0, 1, 1], [], []>} : vector<1x16xf32>, vector<16x128xf32>, vector<1x128xf32> -> vector<1x128xf32>
    %c48_30 = arith.constant 48 : index
    %c0_31 = arith.constant 0 : index
    %38 = vector.load %arg5[%c48_30, %c0_31] : memref<736x128xf32, #tpu.memory_space<vmem>>, vector<16x128xf32>
    %cst_32 = arith.constant dense<0.000000e+00> : vector<1x128xf32>
    %39 = tpu.matmul %24, %38, %cst_32 {dimension_numbers = #tpu.dot_dimension_numbers<[1], [0], [0], [1], [0, 0, 1, 1], [], []>} : vector<1x16xf32>, vector<16x128xf32>, vector<1x128xf32> -> vector<1x128xf32>
    %c96 = arith.constant 96 : index
    %c0_33 = arith.constant 0 : index
    %40 = vector.load %arg5[%c96, %c0_33] : memref<736x128xf32, #tpu.memory_space<vmem>>, vector<128x128xf32>
    %41 = vector.broadcast %33 : vector<1x128xf32> to vector<32x128xf32>
    %42 = arith.mulf %31, %41 : vector<32x128xf32>
    %cst_34 = arith.constant dense<0.000000e+00> : vector<32x128xf32>
    %43 = tpu.matmul %42, %40, %cst_34 {dimension_numbers = #tpu.dot_dimension_numbers<[1], [0], [0], [1], [0, 0, 1, 1], [], []>} : vector<32x128xf32>, vector<128x128xf32>, vector<32x128xf32> -> vector<32x128xf32>
    %c224 = arith.constant 224 : index
    %c0_35 = arith.constant 0 : index
    %44 = vector.load %arg5[%c224, %c0_35] : memref<736x128xf32, #tpu.memory_space<vmem>>, vector<128x128xf32>
    %45 = vector.broadcast %35 : vector<1x128xf32> to vector<32x128xf32>
    %46 = arith.mulf %31, %45 : vector<32x128xf32>
    %cst_36 = arith.constant dense<0.000000e+00> : vector<32x128xf32>
    %47 = tpu.matmul %46, %44, %cst_36 {dimension_numbers = #tpu.dot_dimension_numbers<[1], [0], [0], [1], [0, 0, 1, 1], [], []>} : vector<32x128xf32>, vector<128x128xf32>, vector<32x128xf32> -> vector<32x128xf32>
    %48 = arith.addf %43, %47 : vector<32x128xf32>
    %c352 = arith.constant 352 : index
    %c0_37 = arith.constant 0 : index
    %49 = vector.load %arg5[%c352, %c0_37] : memref<736x128xf32, #tpu.memory_space<vmem>>, vector<128x128xf32>
    %50 = vector.broadcast %37 : vector<1x128xf32> to vector<32x128xf32>
    %51 = arith.mulf %31, %50 : vector<32x128xf32>
    %cst_38 = arith.constant dense<0.000000e+00> : vector<32x128xf32>
    %52 = tpu.matmul %51, %49, %cst_38 {dimension_numbers = #tpu.dot_dimension_numbers<[1], [0], [0], [1], [0, 0, 1, 1], [], []>} : vector<32x128xf32>, vector<128x128xf32>, vector<32x128xf32> -> vector<32x128xf32>
    %53 = arith.addf %48, %52 : vector<32x128xf32>
    %c480 = arith.constant 480 : index
    %c0_39 = arith.constant 0 : index
    %54 = vector.load %arg5[%c480, %c0_39] : memref<736x128xf32, #tpu.memory_space<vmem>>, vector<128x128xf32>
    %55 = vector.broadcast %39 : vector<1x128xf32> to vector<32x128xf32>
    %56 = arith.mulf %31, %55 : vector<32x128xf32>
    %cst_40 = arith.constant dense<0.000000e+00> : vector<32x128xf32>
    %57 = tpu.matmul %56, %54, %cst_40 {dimension_numbers = #tpu.dot_dimension_numbers<[1], [0], [0], [1], [0, 0, 1, 1], [], []>} : vector<32x128xf32>, vector<128x128xf32>, vector<32x128xf32> -> vector<32x128xf32>
    %58 = arith.addf %53, %57 : vector<32x128xf32>
    %cst_41 = arith.constant dense<0.000000e+00> : vector<4x128xf32>
    %59 = tpu.matmul %1, %58, %cst_41 {dimension_numbers = #tpu.dot_dimension_numbers<[1], [0], [0], [1], [0, 0, 1, 1], [], []>} : vector<4x32xf32>, vector<32x128xf32>, vector<4x128xf32> -> vector<4x128xf32>
    %cst_42 = arith.constant dense<0.000000e+00> : vector<4x128xf32>
    %60 = tpu.matmul %59, %4, %cst_42 {dimension_numbers = #tpu.dot_dimension_numbers<[1], [0], [0], [1], [0, 0, 1, 1], [], []>} : vector<4x128xf32>, vector<128x128xf32>, vector<4x128xf32> -> vector<4x128xf32>
    %61 = vector.extract_strided_slice %60 {offsets = [0, 0], sizes = [4, 32], strides = [1, 1]} : vector<4x128xf32> to vector<4x32xf32>
    %cst_43 = arith.constant 2.500000e-01 : f32
    %62 = vector.broadcast %cst_43 : f32 to vector<4x32xf32>
    %63 = arith.mulf %61, %62 : vector<4x32xf32>
    %c0_44 = arith.constant 0 : index
    %c16_45 = arith.constant 16 : index
    %64 = vector.load %arg4[%c0_44, %c16_45] : memref<56x128xf32, #tpu.memory_space<vmem>>, vector<32x16xf32>
    %c48_46 = arith.constant 48 : index
    %c16_47 = arith.constant 16 : index
    %65 = vector.load %arg4[%c48_46, %c16_47] : memref<56x128xf32, #tpu.memory_space<vmem>>, vector<1x16xf32>
    %c32_48 = arith.constant 32 : index
    %c16_49 = arith.constant 16 : index
    %66 = vector.load %arg4[%c32_48, %c16_49] : memref<56x128xf32, #tpu.memory_space<vmem>>, vector<16x16xf32>
    %c49_50 = arith.constant 49 : index
    %c16_51 = arith.constant 16 : index
    %67 = vector.load %arg4[%c49_50, %c16_51] : memref<56x128xf32, #tpu.memory_space<vmem>>, vector<1x16xf32>
    %cst_52 = arith.constant dense<0.000000e+00> : vector<4x16xf32>
    %68 = tpu.matmul %63, %64, %cst_52 {dimension_numbers = #tpu.dot_dimension_numbers<[1], [0], [0], [1], [0, 0, 1, 1], [], []>} : vector<4x32xf32>, vector<32x16xf32>, vector<4x16xf32> -> vector<4x16xf32>
    %69 = vector.broadcast %65 : vector<1x16xf32> to vector<4x16xf32>
    %70 = arith.addf %68, %69 : vector<4x16xf32>
    %cst_53 = arith.constant 0.000000e+00 : f32
    %71 = vector.broadcast %cst_53 : f32 to vector<4x16xf32>
    %72 = arith.maximumf %70, %71 : vector<4x16xf32>
    %cst_54 = arith.constant dense<0.000000e+00> : vector<4x16xf32>
    %73 = tpu.matmul %72, %66, %cst_54 {dimension_numbers = #tpu.dot_dimension_numbers<[1], [0], [0], [1], [0, 0, 1, 1], [], []>} : vector<4x16xf32>, vector<16x16xf32>, vector<4x16xf32> -> vector<4x16xf32>
    %74 = vector.broadcast %67 : vector<1x16xf32> to vector<4x16xf32>
    %75 = arith.addf %73, %74 : vector<4x16xf32>
    %cst_55 = arith.constant dense<0xFF800000> : vector<4xf32>
    %76 = vector.multi_reduction <maximumf>, %75, %cst_55 [1] : vector<4x16xf32> to vector<4xf32>
    %77 = vector.shape_cast %76 : vector<4xf32> to vector<4x1xf32>
    %78 = vector.broadcast %77 : vector<4x1xf32> to vector<4x16xf32>
    %79 = arith.subf %75, %78 : vector<4x16xf32>
    %80 = math.exp %79 : vector<4x16xf32>
    %cst_56 = arith.constant dense<0.000000e+00> : vector<4x16xf32>
    %81 = tpu.matmul %80, %3, %cst_56 {dimension_numbers = #tpu.dot_dimension_numbers<[1], [0], [0], [1], [0, 0, 1, 1], [], []>} : vector<4x16xf32>, vector<16x16xf32>, vector<4x16xf32> -> vector<4x16xf32>
    %82 = tpu.reciprocal %81 {approx = true} : vector<4x16xf32> -> vector<4x16xf32>
    %83 = arith.mulf %80, %82 : vector<4x16xf32>
    %c32_57 = arith.constant 32 : index
    %c0_58 = arith.constant 0 : index
    %84 = vector.load %arg3[%c32_57, %c0_58] : memref<324x128xf32, #tpu.memory_space<vmem>>, vector<128x128xf32>
    %cst_59 = arith.constant dense<0.000000e+00> : vector<32x128xf32>
    %85 = tpu.matmul %58, %84, %cst_59 {dimension_numbers = #tpu.dot_dimension_numbers<[1], [0], [0], [1], [0, 0, 1, 1], [], []>} : vector<32x128xf32>, vector<128x128xf32>, vector<32x128xf32> -> vector<32x128xf32>
    %c51 = arith.constant 51 : index
    %c0_60 = arith.constant 0 : index
    %86 = vector.load %arg4[%c51, %c0_60] : memref<56x128xf32, #tpu.memory_space<vmem>>, vector<1x128xf32>
    %87 = vector.broadcast %86 : vector<1x128xf32> to vector<32x128xf32>
    %88 = arith.addf %85, %87 : vector<32x128xf32>
    %cst_61 = arith.constant 0.000000e+00 : f32
    %89 = vector.broadcast %cst_61 : f32 to vector<32x128xf32>
    %90 = arith.maximumf %88, %89 : vector<32x128xf32>
    %c0_62 = arith.constant 0 : index
    %c0_63 = arith.constant 0 : index
    %91 = vector.load %arg5[%c0_62, %c0_63] : memref<736x128xf32, #tpu.memory_space<vmem>>, vector<16x128xf32>
    %cst_64 = arith.constant dense<0.000000e+00> : vector<4x128xf32>
    %92 = tpu.matmul %83, %91, %cst_64 {dimension_numbers = #tpu.dot_dimension_numbers<[1], [0], [0], [1], [0, 0, 1, 1], [], []>} : vector<4x16xf32>, vector<16x128xf32>, vector<4x128xf32> -> vector<4x128xf32>
    %cst_65 = arith.constant dense<0.000000e+00> : vector<32x128xf32>
    %93 = tpu.matmul %2, %92, %cst_65 {dimension_numbers = #tpu.dot_dimension_numbers<[1], [0], [0], [1], [0, 0, 1, 1], [], []>} : vector<32x4xf32>, vector<4x128xf32>, vector<32x128xf32> -> vector<32x128xf32>
    %c16_66 = arith.constant 16 : index
    %c0_67 = arith.constant 0 : index
    %94 = vector.load %arg5[%c16_66, %c0_67] : memref<736x128xf32, #tpu.memory_space<vmem>>, vector<16x128xf32>
    %cst_68 = arith.constant dense<0.000000e+00> : vector<4x128xf32>
    %95 = tpu.matmul %83, %94, %cst_68 {dimension_numbers = #tpu.dot_dimension_numbers<[1], [0], [0], [1], [0, 0, 1, 1], [], []>} : vector<4x16xf32>, vector<16x128xf32>, vector<4x128xf32> -> vector<4x128xf32>
    %cst_69 = arith.constant dense<0.000000e+00> : vector<32x128xf32>
    %96 = tpu.matmul %2, %95, %cst_69 {dimension_numbers = #tpu.dot_dimension_numbers<[1], [0], [0], [1], [0, 0, 1, 1], [], []>} : vector<32x4xf32>, vector<4x128xf32>, vector<32x128xf32> -> vector<32x128xf32>
    %c32_70 = arith.constant 32 : index
    %c0_71 = arith.constant 0 : index
    %97 = vector.load %arg5[%c32_70, %c0_71] : memref<736x128xf32, #tpu.memory_space<vmem>>, vector<16x128xf32>
    %cst_72 = arith.constant dense<0.000000e+00> : vector<4x128xf32>
    %98 = tpu.matmul %83, %97, %cst_72 {dimension_numbers = #tpu.dot_dimension_numbers<[1], [0], [0], [1], [0, 0, 1, 1], [], []>} : vector<4x16xf32>, vector<16x128xf32>, vector<4x128xf32> -> vector<4x128xf32>
    %cst_73 = arith.constant dense<0.000000e+00> : vector<32x128xf32>
    %99 = tpu.matmul %2, %98, %cst_73 {dimension_numbers = #tpu.dot_dimension_numbers<[1], [0], [0], [1], [0, 0, 1, 1], [], []>} : vector<32x4xf32>, vector<4x128xf32>, vector<32x128xf32> -> vector<32x128xf32>
    %c48_74 = arith.constant 48 : index
    %c0_75 = arith.constant 0 : index
    %100 = vector.load %arg5[%c48_74, %c0_75] : memref<736x128xf32, #tpu.memory_space<vmem>>, vector<16x128xf32>
    %cst_76 = arith.constant dense<0.000000e+00> : vector<4x128xf32>
    %101 = tpu.matmul %83, %100, %cst_76 {dimension_numbers = #tpu.dot_dimension_numbers<[1], [0], [0], [1], [0, 0, 1, 1], [], []>} : vector<4x16xf32>, vector<16x128xf32>, vector<4x128xf32> -> vector<4x128xf32>
    %cst_77 = arith.constant dense<0.000000e+00> : vector<32x128xf32>
    %102 = tpu.matmul %2, %101, %cst_77 {dimension_numbers = #tpu.dot_dimension_numbers<[1], [0], [0], [1], [0, 0, 1, 1], [], []>} : vector<32x4xf32>, vector<4x128xf32>, vector<32x128xf32> -> vector<32x128xf32>
    %c96_78 = arith.constant 96 : index
    %c0_79 = arith.constant 0 : index
    %103 = vector.load %arg5[%c96_78, %c0_79] : memref<736x128xf32, #tpu.memory_space<vmem>>, vector<128x128xf32>
    %104 = arith.mulf %90, %93 : vector<32x128xf32>
    %cst_80 = arith.constant dense<0.000000e+00> : vector<32x128xf32>
    %105 = tpu.matmul %104, %103, %cst_80 {dimension_numbers = #tpu.dot_dimension_numbers<[1], [0], [0], [1], [0, 0, 1, 1], [], []>} : vector<32x128xf32>, vector<128x128xf32>, vector<32x128xf32> -> vector<32x128xf32>
    %c224_81 = arith.constant 224 : index
    %c0_82 = arith.constant 0 : index
    %106 = vector.load %arg5[%c224_81, %c0_82] : memref<736x128xf32, #tpu.memory_space<vmem>>, vector<128x128xf32>
    %107 = arith.mulf %90, %96 : vector<32x128xf32>
    %cst_83 = arith.constant dense<0.000000e+00> : vector<32x128xf32>
    %108 = tpu.matmul %107, %106, %cst_83 {dimension_numbers = #tpu.dot_dimension_numbers<[1], [0], [0], [1], [0, 0, 1, 1], [], []>} : vector<32x128xf32>, vector<128x128xf32>, vector<32x128xf32> -> vector<32x128xf32>
    %109 = arith.addf %105, %108 : vector<32x128xf32>
    %c352_84 = arith.constant 352 : index
    %c0_85 = arith.constant 0 : index
    %110 = vector.load %arg5[%c352_84, %c0_85] : memref<736x128xf32, #tpu.memory_space<vmem>>, vector<128x128xf32>
    %111 = arith.mulf %90, %99 : vector<32x128xf32>
    %cst_86 = arith.constant dense<0.000000e+00> : vector<32x128xf32>
    %112 = tpu.matmul %111, %110, %cst_86 {dimension_numbers = #tpu.dot_dimension_numbers<[1], [0], [0], [1], [0, 0, 1, 1], [], []>} : vector<32x128xf32>, vector<128x128xf32>, vector<32x128xf32> -> vector<32x128xf32>
    %113 = arith.addf %109, %112 : vector<32x128xf32>
    %c480_87 = arith.constant 480 : index
    %c0_88 = arith.constant 0 : index
    %114 = vector.load %arg5[%c480_87, %c0_88] : memref<736x128xf32, #tpu.memory_space<vmem>>, vector<128x128xf32>
    %115 = arith.mulf %90, %102 : vector<32x128xf32>
    %cst_89 = arith.constant dense<0.000000e+00> : vector<32x128xf32>
    %116 = tpu.matmul %115, %114, %cst_89 {dimension_numbers = #tpu.dot_dimension_numbers<[1], [0], [0], [1], [0, 0, 1, 1], [], []>} : vector<32x128xf32>, vector<128x128xf32>, vector<32x128xf32> -> vector<32x128xf32>
    %117 = arith.addf %113, %116 : vector<32x128xf32>
    %cst_90 = arith.constant dense<0.000000e+00> : vector<4x128xf32>
    %118 = tpu.matmul %1, %117, %cst_90 {dimension_numbers = #tpu.dot_dimension_numbers<[1], [0], [0], [1], [0, 0, 1, 1], [], []>} : vector<4x32xf32>, vector<32x128xf32>, vector<4x128xf32> -> vector<4x128xf32>
    %cst_91 = arith.constant dense<0.000000e+00> : vector<4x128xf32>
    %119 = tpu.matmul %118, %4, %cst_91 {dimension_numbers = #tpu.dot_dimension_numbers<[1], [0], [0], [1], [0, 0, 1, 1], [], []>} : vector<4x128xf32>, vector<128x128xf32>, vector<4x128xf32> -> vector<4x128xf32>
    %120 = vector.extract_strided_slice %119 {offsets = [0, 0], sizes = [4, 32], strides = [1, 1]} : vector<4x128xf32> to vector<4x32xf32>
    %cst_92 = arith.constant 2.500000e-01 : f32
    %121 = vector.broadcast %cst_92 : f32 to vector<4x32xf32>
    %122 = arith.mulf %120, %121 : vector<4x32xf32>
    %c0_93 = arith.constant 0 : index
    %c32_94 = arith.constant 32 : index
    %123 = vector.load %arg4[%c0_93, %c32_94] : memref<56x128xf32, #tpu.memory_space<vmem>>, vector<32x16xf32>
    %c48_95 = arith.constant 48 : index
    %c32_96 = arith.constant 32 : index
    %124 = vector.load %arg4[%c48_95, %c32_96] : memref<56x128xf32, #tpu.memory_space<vmem>>, vector<1x16xf32>
    %c32_97 = arith.constant 32 : index
    %c32_98 = arith.constant 32 : index
    %125 = vector.load %arg4[%c32_97, %c32_98] : memref<56x128xf32, #tpu.memory_space<vmem>>, vector<16x4xf32>
    %c49_99 = arith.constant 49 : index
    %c32_100 = arith.constant 32 : index
    %126 = vector.load %arg4[%c49_99, %c32_100] : memref<56x128xf32, #tpu.memory_space<vmem>>, vector<1x4xf32>
    %cst_101 = arith.constant dense<0.000000e+00> : vector<4x16xf32>
    %127 = tpu.matmul %122, %123, %cst_101 {dimension_numbers = #tpu.dot_dimension_numbers<[1], [0], [0], [1], [0, 0, 1, 1], [], []>} : vector<4x32xf32>, vector<32x16xf32>, vector<4x16xf32> -> vector<4x16xf32>
    %128 = vector.broadcast %124 : vector<1x16xf32> to vector<4x16xf32>
    %129 = arith.addf %127, %128 : vector<4x16xf32>
    %cst_102 = arith.constant 0.000000e+00 : f32
    %130 = vector.broadcast %cst_102 : f32 to vector<4x16xf32>
    %131 = arith.maximumf %129, %130 : vector<4x16xf32>
    %cst_103 = arith.constant dense<0.000000e+00> : vector<4x4xf32>
    %132 = tpu.matmul %131, %125, %cst_103 {dimension_numbers = #tpu.dot_dimension_numbers<[1], [0], [0], [1], [0, 0, 1, 1], [], []>} : vector<4x16xf32>, vector<16x4xf32>, vector<4x4xf32> -> vector<4x4xf32>
    %133 = vector.broadcast %126 : vector<1x4xf32> to vector<4x4xf32>
    %134 = arith.addf %132, %133 : vector<4x4xf32>
    %cst_104 = arith.constant dense<0xFF800000> : vector<4xf32>
    %135 = vector.multi_reduction <maximumf>, %134, %cst_104 [1] : vector<4x4xf32> to vector<4xf32>
    %136 = vector.shape_cast %135 : vector<4xf32> to vector<4x1xf32>
    %137 = vector.broadcast %136 : vector<4x1xf32> to vector<4x4xf32>
    %138 = arith.subf %134, %137 : vector<4x4xf32>
    %139 = math.exp %138 : vector<4x4xf32>
    %cst_105 = arith.constant dense<0.000000e+00> : vector<4xf32>
    %140 = vector.multi_reduction <add>, %139, %cst_105 [1] : vector<4x4xf32> to vector<4xf32>
    %141 = vector.shape_cast %140 : vector<4xf32> to vector<4x1xf32>
    %142 = tpu.reciprocal %141 {approx = true} : vector<4x1xf32> -> vector<4x1xf32>
    %143 = vector.broadcast %142 : vector<4x1xf32> to vector<4x4xf32>
    %144 = arith.mulf %139, %143 : vector<4x4xf32>
    %cst_106 = arith.constant dense<0.000000e+00> : vector<16xf32>
    %145 = vector.multi_reduction <add>, %83, %cst_106 [0] : vector<4x16xf32> to vector<16xf32>
    %146 = vector.shape_cast %145 : vector<16xf32> to vector<1x16xf32>
    %cst_107 = arith.constant 4.000000e+00 : f32
    %147 = vector.broadcast %cst_107 : f32 to vector<1x16xf32>
    %148 = arith.divf %146, %147 : vector<1x16xf32>
    %cst_108 = arith.constant dense<0.000000e+00> : vector<4xf32>
    %149 = vector.multi_reduction <add>, %144, %cst_108 [0] : vector<4x4xf32> to vector<4xf32>
    %150 = vector.shape_cast %149 : vector<4xf32> to vector<1x4xf32>
    %cst_109 = arith.constant 4.000000e+00 : f32
    %151 = vector.broadcast %cst_109 : f32 to vector<1x4xf32>
    %152 = arith.divf %150, %151 : vector<1x4xf32>
    %c288 = arith.constant 288 : index
    %c0_110 = arith.constant 0 : index
    %153 = vector.load %arg3[%c288, %c0_110] : memref<324x128xf32, #tpu.memory_space<vmem>>, vector<16x128xf32>
    %cst_111 = arith.constant dense<0.000000e+00> : vector<1x128xf32>
    %154 = tpu.matmul %24, %153, %cst_111 {dimension_numbers = #tpu.dot_dimension_numbers<[1], [0], [0], [1], [0, 0, 1, 1], [], []>} : vector<1x16xf32>, vector<16x128xf32>, vector<1x128xf32> -> vector<1x128xf32>
    %c304 = arith.constant 304 : index
    %c0_112 = arith.constant 0 : index
    %155 = vector.load %arg3[%c304, %c0_112] : memref<324x128xf32, #tpu.memory_space<vmem>>, vector<16x128xf32>
    %cst_113 = arith.constant dense<0.000000e+00> : vector<1x128xf32>
    %156 = tpu.matmul %148, %155, %cst_113 {dimension_numbers = #tpu.dot_dimension_numbers<[1], [0], [0], [1], [0, 0, 1, 1], [], []>} : vector<1x16xf32>, vector<16x128xf32>, vector<1x128xf32> -> vector<1x128xf32>
    %157 = arith.addf %154, %156 : vector<1x128xf32>
    %c320 = arith.constant 320 : index
    %c0_114 = arith.constant 0 : index
    %158 = vector.load %arg3[%c320, %c0_114] : memref<324x128xf32, #tpu.memory_space<vmem>>, vector<4x128xf32>
    %cst_115 = arith.constant dense<0.000000e+00> : vector<1x128xf32>
    %159 = tpu.matmul %152, %158, %cst_115 {dimension_numbers = #tpu.dot_dimension_numbers<[1], [0], [0], [1], [0, 0, 1, 1], [], []>} : vector<1x4xf32>, vector<4x128xf32>, vector<1x128xf32> -> vector<1x128xf32>
    %160 = arith.addf %157, %159 : vector<1x128xf32>
    %c53 = arith.constant 53 : index
    %c0_116 = arith.constant 0 : index
    %161 = vector.load %arg4[%c53, %c0_116] : memref<56x128xf32, #tpu.memory_space<vmem>>, vector<1x128xf32>
    %162 = arith.addf %160, %161 : vector<1x128xf32>
    %163 = arith.mulf %162, %162 : vector<1x128xf32>
    %cst_117 = arith.constant dense<0.000000e+00> : vector<1xf32>
    %164 = vector.multi_reduction <add>, %163, %cst_117 [1] : vector<1x128xf32> to vector<1xf32>
    %165 = vector.shape_cast %164 : vector<1xf32> to vector<1x1xf32>
    %cst_118 = arith.constant 1.000000e-24 : f32
    %166 = vector.broadcast %cst_118 : f32 to vector<1x1xf32>
    %167 = arith.maximumf %165, %166 : vector<1x1xf32>
    %168 = math.rsqrt %167 : vector<1x1xf32>
    %169 = vector.broadcast %168 : vector<1x1xf32> to vector<1x128xf32>
    %170 = arith.mulf %162, %169 : vector<1x128xf32>
    %171 = vector.shape_cast %170 : vector<1x128xf32> to vector<1x128xf32>
    %172 = vector.broadcast %171 : vector<1x128xf32> to vector<8x128xf32>
    %c0_119 = arith.constant 0 : index
    %c0_120 = arith.constant 0 : index
    %173 = vector.load %arg6[%c0_119, %c0_120] : memref<8x128xf32, #tpu.memory_space<vmem>>, vector<8x128xf32>
    tpu.vector_store %arg6[%c0_119, %c0_120], %172 {strides = array<i32>} : memref<8x128xf32, #tpu.memory_space<vmem>>, vector<8x128xf32>,
    return
  }
  func.func @transform_0(%arg0: i32) -> (i32, i32) {
    %c0_i32 = arith.constant 0 : i32
    %c0_i32_0 = arith.constant 0 : i32
    return %arg0, %c0_i32 : i32, i32
  }
  func.func @transform_1(%arg0: i32) -> (i32, i32) {
    %c0_i32 = arith.constant 0 : i32
    %c0_i32_0 = arith.constant 0 : i32
    %c0_i32_1 = arith.constant 0 : i32
    return %c0_i32, %c0_i32_0 : i32, i32
  }
  func.func @transform_2(%arg0: i32) -> (i32, i32) {
    %c0_i32 = arith.constant 0 : i32
    %c0_i32_0 = arith.constant 0 : i32
    %c0_i32_1 = arith.constant 0 : i32
    return %c0_i32, %c0_i32_0 : i32, i32
  }
  func.func @transform_3(%arg0: i32) -> (i32, i32) {
    %c0_i32 = arith.constant 0 : i32
    %c0_i32_0 = arith.constant 0 : i32
    %c0_i32_1 = arith.constant 0 : i32
    return %c0_i32, %c0_i32_0 : i32, i32
  }
  func.func @transform_4(%arg0: i32) -> (i32, i32) {
    %c0_i32 = arith.constant 0 : i32
    %c0_i32_0 = arith.constant 0 : i32
    %c0_i32_1 = arith.constant 0 : i32
    return %c0_i32, %c0_i32_0 : i32, i32
  }
  func.func @transform_5(%arg0: i32) -> (i32, i32) {
    %c0_i32 = arith.constant 0 : i32
    %c0_i32_0 = arith.constant 0 : i32
    return %arg0, %c0_i32 : i32, i32
  }
}

</mosaic_0001>

<llo_original>
// kernel: interaction_module_forward.1
$region0: #{interaction_module_forward.1}
  #allocation0 [shape = 'u32[]', space=smem, size = 0x4, offset = 0x4, fixed_abs, tag = 'smem constant byte address 0x4 - core index']
  #allocation1 [shape = 'u32[144,128]{1,0:T(1,128)}', space=vmem, size = 0x12000, scoped, tag = 'internal scratch']
  %s0 = inlined_call_operand.hbm [shape: f32[128,32], index: 0, kind: input, shape index: {}]
  %s1 = inlined_call_operand.vmem [shape: f32[37,32], index: 1, kind: input, shape index: {}]
  %s2 = inlined_call_operand.hbm [shape: f32[324,128], index: 2, kind: input, shape index: {}]
  %s3 = inlined_call_operand.vmem [shape: f32[56,128], index: 3, kind: input, shape index: {}]
  %s4 = inlined_call_operand.hbm [shape: f32[736,128], index: 4, kind: input, shape index: {}]
  %s5 = inlined_call_operand.vmem [shape: f32[32,128], index: 5, kind: output, shape index: {}]
  %s6 = sld [smem:[#allocation0]]
  $region65: #{interaction_module_forward.1} parent=0
    _
  %s8 = ssub.s32 1, %s6
  %s9 = scalar_select 0, %s8, %s6
  $region1: #{interaction_module_forward.1} parent=0
    #allocation2 [shape = 'u8[32768]{0}', space=vmem, size = 0x8000, scoped, tag = 'input window, operand 0']
    #allocation3 [shape = 's32[2]{0}', space=sflag, size = 0x8, scoped, tag = 'scoped memory for interaction_module_forward.1']
    #allocation4 [shape = 'u8[167936]{0}', space=vmem, size = 0x29000, scoped, tag = 'input window, operand 2, single buffered']
    #allocation5 [shape = 's32[1]{0}', space=sflag, size = 0x4, scoped, tag = 'scoped memory for interaction_module_forward.1']
    #allocation6 [shape = 'u8[376832]{0}', space=vmem, size = 0x5c000, scoped, tag = 'input window, operand 4, single buffered']
    %10 = vsyncpa [#allocation3], 0
    %s11 = scalar_lea.sflag [#allocation3], 1
    %12 = vsyncpa %s11, 0
    %13 = vsyncpa [#allocation5], 0
    loop: start=0, step=1, limit=6
    $region2: #{interaction_module_forward.1} parent=1 // loop_pre_header
      _
    $region3: #{interaction_module_forward.1} parent=1 // loop_header
      %s15 = sphi 0, %s19
      %p16 = scmp.ge.s32.totalorder %s15, 6
      %s25 = sphi 0, %s27
      %s28 = sphi 0, %s25
      %s29 = sphi 0, %s28
      %s45 = sphi 0, %s29
      %s49 = sphi 0, %s49
      %s51 = sphi 0, %s49
      %s52 = sphi 0, %s51
      %s66 = sphi 0, %s52
      %s70 = sphi 0, %s70
      %s72 = sphi 0, %s70
      %s73 = sphi 0, %s72
      %s87 = sphi 0, %s73
      %s91 = sphi 0, %s91
      %s93 = sphi 0, %s91
      %s94 = sphi 0, %s93
      %s108 = sphi 0, %s94
      %s112 = sphi 0, %s112
      %s114 = sphi 0, %s112
      %s115 = sphi 0, %s114
      %s129 = sphi 0, %s115
      %s135 = sphi 0, %s137
      %s138 = sphi 0, %s135
      %s139 = sphi 0, %s138
      %s155 = sphi 0, %s139
    $region4: #{interaction_module_forward.1} parent=1 // loop_header_branch
      %18 = sbr.rel (%p16) target = $region8
    $region5: #{interaction_module_forward.1} parent=1 // loop_body
      %s20 = ssub.s32 %s15, 1
      %s21 = ssub.s32 %s15, 2
      %s22 = sadd.s32 %s15, 1
      %s23 = ssub.s32 %s15, %s22
      %p24 = scmp.eq.s32.totalorder %s23, 0
      %s26 = sadd.s32 %s25, 1
      %s27 = scalar_select %p24, %s25, %s26
      %p30 = pneg %p24
      %p31 = scmp.eq.s32.totalorder %s15, 3
      %p32 = por %p30, %p31
      %p33 = scmp.ne.s32.totalorder %s25, %s28
      %p34 = scmp.eq.s32.totalorder %s15, 0
      %p35 = por %p33, %p34
      %p36 = scmp.ne.s32.totalorder %s25, %s28
      %p37 = scmp.eq.s32.totalorder %s20, 3
      %p38 = por %p36, %p37
      %p39 = scmp.ne.s32.totalorder %s28, %s29
      %p40 = scmp.eq.s32.totalorder %s20, 0
      %p41 = por %p39, %p40
      %p42 = scmp.ne.s32.totalorder %s28, %s29
      %p43 = scmp.eq.s32.totalorder %s21, 3
      %p44 = por %p42, %p43
      %p46 = scmp.ne.s32.totalorder %s29, %s45
      %p47 = scmp.eq.s32.totalorder %s21, 0
      %p48 = por %p46, %p47
      %s50 = sadd.s32 %s49, 1
      %p53 = scmp.eq.s32.totalorder %s15, 3
      %p54 = scmp.ne.s32.totalorder %s49, %s51
      %p55 = scmp.eq.s32.totalorder %s15, 0
      %p56 = por %p54, %p55
      %p57 = scmp.ne.s32.totalorder %s49, %s51
      %p58 = scmp.eq.s32.totalorder %s20, 3
      %p59 = por %p57, %p58
      %p60 = scmp.ne.s32.totalorder %s51, %s52
      %p61 = scmp.eq.s32.totalorder %s20, 0
      %p62 = por %p60, %p61
      %p63 = scmp.ne.s32.totalorder %s51, %s52
      %p64 = scmp.eq.s32.totalorder %s21, 3
      %p65 = por %p63, %p64
      %p67 = scmp.ne.s32.totalorder %s52, %s66
      %p68 = scmp.eq.s32.totalorder %s21, 0
      %p69 = por %p67, %p68
      %s71 = sadd.s32 %s70, 1
      %p74 = scmp.eq.s32.totalorder %s15, 3
      %p75 = scmp.ne.s32.totalorder %s70, %s72
      %p76 = scmp.eq.s32.totalorder %s15, 0
      %p77 = por %p75, %p76
      %p78 = scmp.ne.s32.totalorder %s70, %s72
      %p79 = scmp.eq.s32.totalorder %s20, 3
      %p80 = por %p78, %p79
      %p81 = scmp.ne.s32.totalorder %s72, %s73
      %p82 = scmp.eq.s32.totalorder %s20, 0
      %p83 = por %p81, %p82
      %p84 = scmp.ne.s32.totalorder %s72, %s73
      %p85 = scmp.eq.s32.totalorder %s21, 3
      %p86 = por %p84, %p85
      %p88 = scmp.ne.s32.totalorder %s73, %s87
      %p89 = scmp.eq.s32.totalorder %s21, 0
      %p90 = por %p88, %p89
      %s92 = sadd.s32 %s91, 1
      %p95 = scmp.eq.s32.totalorder %s15, 3
      %p96 = scmp.ne.s32.totalorder %s91, %s93
      %p97 = scmp.eq.s32.totalorder %s15, 0
      %p98 = por %p96, %p97
      %p99 = scmp.ne.s32.totalorder %s91, %s93
      %p100 = scmp.eq.s32.totalorder %s20, 3
      %p101 = por %p99, %p100
      %p102 = scmp.ne.s32.totalorder %s93, %s94
      %p103 = scmp.eq.s32.totalorder %s20, 0
      %p104 = por %p102, %p103
      %p105 = scmp.ne.s32.totalorder %s93, %s94
      %p106 = scmp.eq.s32.totalorder %s21, 3
      %p107 = por %p105, %p106
      %p109 = scmp.ne.s32.totalorder %s94, %s108
      %p110 = scmp.eq.s32.totalorder %s21, 0
      %p111 = por %p109, %p110
      %s113 = sadd.s32 %s112, 1
      %p116 = scmp.eq.s32.totalorder %s15, 3
      %p117 = scmp.ne.s32.totalorder %s112, %s114
      %p118 = scmp.eq.s32.totalorder %s15, 0
      %p119 = por %p117, %p118
      %p120 = scmp.ne.s32.totalorder %s112, %s114
      %p121 = scmp.eq.s32.totalorder %s20, 3
      %p122 = por %p120, %p121
      %p123 = scmp.ne.s32.totalorder %s114, %s115
      %p124 = scmp.eq.s32.totalorder %s20, 0
      %p125 = por %p123, %p124
      %p126 = scmp.ne.s32.totalorder %s114, %s115
      %p127 = scmp.eq.s32.totalorder %s21, 3
      %p128 = por %p126, %p127
      %p130 = scmp.ne.s32.totalorder %s115, %s129
      %p131 = scmp.eq.s32.totalorder %s21, 0
      %p132 = por %p130, %p131
      %s133 = ssub.s32 %s15, %s22
      %p134 = scmp.eq.s32.totalorder %s133, 0
      %s136 = sadd.s32 %s135, 1
      %s137 = scalar_select %p134, %s135, %s136
      %p140 = pneg %p134
      %p141 = scmp.eq.s32.totalorder %s15, 3
      %p142 = por %p140, %p141
      %p143 = scmp.ne.s32.totalorder %s135, %s138
      %p144 = scmp.eq.s32.totalorder %s15, 0
      %p145 = por %p143, %p144
      %p146 = scmp.ne.s32.totalorder %s135, %s138
      %p147 = scmp.eq.s32.totalorder %s20, 3
      %p148 = por %p146, %p147
      %p149 = scmp.ne.s32.totalorder %s138, %s139
      %p150 = scmp.eq.s32.totalorder %s20, 0
      %p151 = por %p149, %p150
      %p152 = scmp.ne.s32.totalorder %s138, %s139
      %p153 = scmp.eq.s32.totalorder %s21, 3
      %p154 = por %p152, %p153
      %p156 = scmp.ne.s32.totalorder %s139, %s155
      %p157 = scmp.eq.s32.totalorder %s21, 0
      %p158 = por %p156, %p157
      %p159 = scmp.le.s32.totalorder 1, %s15
      %p160 = scmp.lt.s32.totalorder %s15, 5
      %p161 = pnand %p159, %p160
      %p162 = pneg %p161
      // Predicated region
      $region9: #{interaction_module_forward.1} parent=5 // pred_check
        _
      $region10: #{interaction_module_forward.1} parent=5 // pred_check_branch
        %164 = sbr.rel (%p161) target = $region12
      $region11: #{interaction_module_forward.1} parent=5 // pred_region
        %s165 = ssub.s32 %s15, 1
        // Predicated region
        $region13: #{interaction_module_forward.1} parent=11 // pred_check
          %p166 = pneg %p62
        $region14: #{interaction_module_forward.1} parent=11 // pred_check_branch
          %168 = sbr.rel (%p166) target = $region16
        $region15: #{interaction_module_forward.1} parent=11 // pred_region
          _
        $region16: #{interaction_module_forward.1} parent=11 // pred_fallthru
          _
        // Predicated region
        $region17: #{interaction_module_forward.1} parent=11 // pred_check
          %p169 = pneg %p83
        $region18: #{interaction_module_forward.1} parent=11 // pred_check_branch
          %171 = sbr.rel (%p169) target = $region20
        $region19: #{interaction_module_forward.1} parent=11 // pred_region
          %s173 = ssub.s32 5248, 5248
          %174 = vsyncadd [#allocation5], %s173
          %s175 = sshll.u32 [#allocation4], 4
          %s176 = int_to_ptr.vmem [resolvable:$true] %s175
          %181 = dma.hbm_to_vmem [thread:$0]  %s2, 5248, %s176, [#allocation5], 128, 128, 8
        $region20: #{interaction_module_forward.1} parent=11 // pred_fallthru
          _
        // Predicated region
        $region21: #{interaction_module_forward.1} parent=11 // pred_check
          %p182 = pneg %p104
        $region22: #{interaction_module_forward.1} parent=11 // pred_check_branch
          %184 = sbr.rel (%p182) target = $region24
        $region23: #{interaction_module_forward.1} parent=11 // pred_region
          _
        $region24: #{interaction_module_forward.1} parent=11 // pred_fallthru
          _
        // Predicated region
        $region25: #{interaction_module_forward.1} parent=11 // pred_check
          %p185 = pneg %p125
        $region26: #{interaction_module_forward.1} parent=11 // pred_check_branch
          %187 = sbr.rel (%p185) target = $region28
        $region27: #{interaction_module_forward.1} parent=11 // pred_region
          %s189 = ssub.s32 11776, 11776
          %190 = vsyncadd [#allocation5], %s189
          %s191 = sshll.u32 [#allocation6], 4
          %s192 = int_to_ptr.vmem [resolvable:$true] %s191
          %197 = dma.hbm_to_vmem [thread:$0]  %s4, 11776, %s192, [#allocation5], 128, 128, 8
        $region28: #{interaction_module_forward.1} parent=11 // pred_fallthru
          _
      $region12: #{interaction_module_forward.1} parent=5 // pred_fallthru
        _
      %p198 = scmp.lt.s32.totalorder %s15, 4
      // Predicated region
      $region29: #{interaction_module_forward.1} parent=5 // pred_check
        %p199 = pneg %p198
      $region30: #{interaction_module_forward.1} parent=5 // pred_check_branch
        %201 = sbr.rel (%p199) target = $region32
      $region31: #{interaction_module_forward.1} parent=5 // pred_region
        // Predicated region
        $region33: #{interaction_module_forward.1} parent=31 // pred_check
          %p202 = pneg %p35
        $region34: #{interaction_module_forward.1} parent=31 // pred_check_branch
          %204 = sbr.rel (%p202) target = $region36
        $region35: #{interaction_module_forward.1} parent=31 // pred_region
          %s205 = sand.u32 %s25, 1
          %s206 = scalar_lea.sflag [#allocation3], %s205
          %s207 = sand.u32 %s25, 1
          %s208 = smul.addr %s207, 32
          %s209 = scalar_lea.vmem [#allocation2], %s208
          %s210 = smul.u32 4, %s15
          %s212 = ssub.s32 512, 512
          %213 = vsyncadd %s206, %s212
          %s214 = smul.addr %s210, 128
          %s215 = scalar_lea.hbm %s0, %s214
          %s216 = sshll.u32 %s209, 4
          %s217 = int_to_ptr.vmem [resolvable:$true] %s216
          %222 = dma.hbm_to_vmem [thread:$0]  %s215, 512, %s217, %s206, 128, 128, 8
        $region36: #{interaction_module_forward.1} parent=31 // pred_fallthru
          _
      $region32: #{interaction_module_forward.1} parent=5 // pred_fallthru
        _
      %p223 = scmp.le.s32.totalorder 1, %s15
      %p224 = scmp.lt.s32.totalorder %s15, 5
      %p225 = pnand %p223, %p224
      %p226 = pneg %p225
      // Predicated region
      $region37: #{interaction_module_forward.1} parent=5 // pred_check
        _
      $region38: #{interaction_module_forward.1} parent=5 // pred_check_branch
        %228 = sbr.rel (%p225) target = $region40
      $region39: #{interaction_module_forward.1} parent=5 // pred_region
        %s229 = ssub.s32 %s15, 1
        %s230 = sand.u32 %s28, 1
        %s231 = scalar_lea.sflag [#allocation3], %s230
        %s232 = sand.u32 %s28, 1
        %s233 = smul.addr %s232, 32
        %s234 = scalar_lea.vmem [#allocation2], %s233
        // Predicated region
        $region41: #{interaction_module_forward.1} parent=39 // pred_check
          %p235 = pneg %p41
        $region42: #{interaction_module_forward.1} parent=39 // pred_check_branch
          %237 = sbr.rel (%p235) target = $region44
        $region43: #{interaction_module_forward.1} parent=39 // pred_region
          %238 = dma.done %s231, 512
        $region44: #{interaction_module_forward.1} parent=39 // pred_fallthru
          _
        // Predicated region
        $region45: #{interaction_module_forward.1} parent=39 // pred_check
          %p239 = pneg %p83
        $region46: #{interaction_module_forward.1} parent=39 // pred_check_branch
          %241 = sbr.rel (%p239) target = $region48
        $region47: #{interaction_module_forward.1} parent=39 // pred_region
          %242 = dma.done [#allocation5], 5248
        $region48: #{interaction_module_forward.1} parent=39 // pred_fallthru
          _
        // Predicated region
        $region49: #{interaction_module_forward.1} parent=39 // pred_check
          %p243 = pneg %p125
        $region50: #{interaction_module_forward.1} parent=39 // pred_check_branch
          %245 = sbr.rel (%p243) target = $region52
        $region51: #{interaction_module_forward.1} parent=39 // pred_region
          %246 = dma.done [#allocation5], 11776
        $region52: #{interaction_module_forward.1} parent=39 // pred_fallthru
          _
        %s247 = sand.u32 %s28, 1
        %s248 = scalar_lea.sflag [#allocation3], %s247
        %s249 = sand.u32 %s28, 1
        %s250 = smul.addr %s249, 32
        %s251 = scalar_lea.vmem [#allocation2], %s250
        %p252 = pneg %p41
        %p253 = pneg %p38
        %p254 = pneg %p62
        %p255 = pneg %p59
        %p256 = pneg %p83
        %p257 = pneg %p80
        %p258 = pneg %p104
        %p259 = pneg %p101
        %p260 = pneg %p125
        %p261 = pneg %p122
        %p262 = pneg %p151
        %p263 = pneg %p148
        %p264 = scmp.lt.s32.totalorder %s20, 3
        %s265 = scalar_select %p264, %s20, 3
        %s266 = smul.addr %s265, 8
        %s267 = scalar_lea.vmem %s5, %s266
        %s268 = smul.u32 4, %s20
        %p269 = scmp.lt.s32.totalorder %s20, 3
        %s270 = scalar_select %p269, %s20, 3
        %s271 = smul.addr %s270, 8
        %s272 = scalar_lea.vmem %s5, %s271
        %v273 = vld [vmem:[%s1] sm:$0x1]
        %v274 = vld [vmem:[%s1 + $0x1] sm:$0xf]
        %v275 = vld [vmem:[%s1 + $0x5] sm:$0xff]
        %v276 = vld [vmem:[%s1 + $0xd] sm:$0xff]
        %v277 = vld [vmem:[%s1 + $0x15] sm:$0xff]
        %v278 = vld [vmem:[%s1 + $0x1d] sm:$0xff]
        %v279 = vld [vmem:[#allocation6 + $0x48] sm:$0xff]
        %v280 = vld [vmem:[#allocation6 + $0x50] sm:$0xff]
        %v281 = vld [vmem:[#allocation6 + $0x260] sm:$0xff]
        %v282 = vld [vmem:[#allocation6 + $0x268] sm:$0xff]
        %v283 = vld [vmem:[#allocation6 + $0x270] sm:$0xff]
        %v284 = vld [vmem:[#allocation6 + $0x278] sm:$0xff]
        %v285 = vld [vmem:[#allocation6 + $0x280] sm:$0xff]
        %v286 = vld [vmem:[#allocation6 + $0x288] sm:$0xff]
        %v287 = vld [vmem:[#allocation6 + $0x290] sm:$0xff]
        %v288 = vld [vmem:[#allocation6 + $0x298] sm:$0xff]
        %v289 = vld [vmem:[#allocation6 + $0x2a0] sm:$0xff]
        %v290 = vld [vmem:[#allocation6 + $0x2a8] sm:$0xff]
        %v291 = vld [vmem:[#allocation6 + $0x2b0] sm:$0xff]
        %v292 = vld [vmem:[#allocation6 + $0x2b8] sm:$0xff]
        %v293 = vld [vmem:[#allocation6 + $0x2c0] sm:$0xff]
        %v294 = vld [vmem:[#allocation6 + $0x2c8] sm:$0xff]
        %v295 = vld [vmem:[#allocation6 + $0x2d0] sm:$0xff]
        %v296 = vld [vmem:[#allocation6 + $0x2d8] sm:$0xff]
        %v297 = vld [vmem:[%s234] sm:$0xff]
        %v298 = vld [vmem:[%s234 + $0x8] sm:$0xff]
        %v299 = vld [vmem:[%s234 + $0x10] sm:$0xff]
        %v300 = vld [vmem:[%s234 + $0x18] sm:$0xff]
        %vm301 = vcmask 261120
        %v303 = vsel %vm301, %v273, 0
        %305 = vmatprep.subr.mxu0 0.0
        %306 = vmatpush1.msra.mxu0 %v297
        %307 = vmatprep.subr.mxu0 0.0
        %308 = vmatpush1.msra.mxu0 %v298
        %309 = vmatprep.subr.mxu0 0.0
        %310 = vmatpush1.msra.mxu0 %v299
        %311 = vmatprep.subr.mxu0 0.0
        %312 = vmatpush1.msra.mxu0 %v300
        %313 = vmatprep.subr.mxu0 0.0
        %314 = vmatpush1.msra.mxu0 0.0
        %315 = vmatprep.subr.mxu0 0.0
        %316 = vmatpush1.msra.mxu0 0.0
        %317 = vmatprep.subr.mxu0 0.0
        %318 = vmatpush1.msra.mxu0 0.0
        %319 = vmatprep.subr.mxu0 0.0
        %320 = vmatpush1.msra.mxu0 0.0
        %321 = vmatprep.subr.mxu0 0.0
        %322 = vmatpush1.msra.mxu0 0.0
        %323 = vmatprep.subr.mxu0 0.0
        %324 = vmatpush1.msra.mxu0 0.0
        %325 = vmatprep.subr.mxu0 0.0
        %326 = vmatpush1.msra.mxu0 0.0
        %327 = vmatprep.subr.mxu0 0.0
        %328 = vmatpush1.msra.mxu0 0.0
        %329 = vmatprep.subr.mxu0 0.0
        %330 = vmatpush1.msra.mxu0 0.0
        %331 = vmatprep.subr.mxu0 0.0
        %332 = vmatpush1.msra.mxu0 0.0
        %333 = vmatprep.subr.mxu0 0.0
        %334 = vmatpush1.msra.mxu0 0.0
        %335 = vmatprep.subr.mxu0 0.0
        %336 = vmatpush1.msra.mxu0 0.0
        %337 = vmatprep.subr.mxu0 0.0
        %338 = vmatpush1.msra.mxu0 0.0
        %339 = vmatprep.subr.mxu0 0.0
        %340 = vmatpush1.msra.mxu0 0.0
        %341 = vmatprep.subr.mxu0 0.0
        %342 = vmatpush1.msra.mxu0 0.0
        %343 = vmatprep.subr.mxu0 0.0
        %344 = vmatpush1.msra.mxu0 0.0
        %345 = vmatprep.subr.mxu0 0.0
        %346 = vmatpush1.msra.mxu0 0.0
        %347 = vmatprep.subr.mxu0 0.0
        %348 = vmatpush1.msra.mxu0 0.0
        %349 = vmatprep.subr.mxu0 0.0
        %350 = vmatpush1.msra.mxu0 0.0
        %351 = vmatprep.subr.mxu0 0.0
        %352 = vmatpush1.msra.mxu0 0.0
        %353 = vmatprep.subr.mxu0 0.0
        %354 = vmatpush1.msra.mxu0 0.0
        %355 = vmatprep.subr.mxu0 0.0
        %356 = vmatpush1.msra.mxu0 0.0
        %357 = vmatprep.subr.mxu0 0.0
        %358 = vmatpush1.msra.mxu0 0.0
        %359 = vmatprep.subr.mxu0 0.0
        %360 = vmatpush1.msra.mxu0 0.0
        %361 = vmatprep.subr.mxu0 0.0
        %362 = vmatpush1.msra.mxu0 0.0
        %363 = vmatprep.subr.mxu0 0.0
        %364 = vmatpush1.msra.mxu0 0.0
        %365 = vmatprep.subr.mxu0 0.0
        %366 = vmatpush1.msra.mxu0 0.0
        %367 = vmatprep.subr.mxu0 0.0
        %368 = vmatpush1.msra.mxu0 0.0
        %369 = vmatprep.mubr.f32.mxu0 0.0
        %370 = vmatmul.mubr.f32.gmra.mrb[0].mxu0 %v303
        %v371 = vpop.f32.mrb[0].mxu0
        %v372 = vadd.f32 0.0, %v371
        %v373 = vpop.f32.mrb[0].mxu0
        %374 = vdwg.mxu0
        %v375 = vld [vmem:[%s3] sm:$0xff]
        %v376 = vld [vmem:[%s3 + $0x8] sm:$0xff]
        %v377 = vld [vmem:[%s3 + $0x10] sm:$0xff]
        %v378 = vld [vmem:[%s3 + $0x18] sm:$0xff]
        %v379 = vld [vmem:[%s3 + $0x30] sm:$0x1]
        %v380 = vld [vmem:[%s3 + $0x20] sm:$0xff]
        %v381 = vld [vmem:[%s3 + $0x28] sm:$0xff]
        %v382 = vld [vmem:[%s3 + $0x31] sm:$0x1]
        %v384 = vsel %vm301, %v372, 0
        %386 = vmatprep.subr.mxu0 0.0
        %387 = vmatpush1.msra.mxu0 %v375
        %388 = vmatprep.subr.mxu0 0.0
        %389 = vmatpush1.msra.mxu0 %v376
        %390 = vmatprep.subr.mxu0 0.0
        %391 = vmatpush1.msra.mxu0 %v377
        %392 = vmatprep.subr.mxu0 0.0
        %393 = vmatpush1.msra.mxu0 %v378
        %394 = vmatprep.subr.mxu0 0.0
        %395 = vmatpush1.msra.mxu0 0.0
        %396 = vmatprep.subr.mxu0 0.0
        %397 = vmatpush1.msra.mxu0 0.0
        %398 = vmatprep.subr.mxu0 0.0
        %399 = vmatpush1.msra.mxu0 0.0
        %400 = vmatprep.subr.mxu0 0.0
        %401 = vmatpush1.msra.mxu0 0.0
        %402 = vmatprep.subr.mxu0 0.0
        %403 = vmatpush1.msra.mxu0 0.0
        %404 = vmatprep.subr.mxu0 0.0
        %405 = vmatpush1.msra.mxu0 0.0
        %406 = vmatprep.subr.mxu0 0.0
        %407 = vmatpush1.msra.mxu0 0.0
        %408 = vmatprep.subr.mxu0 0.0
        %409 = vmatpush1.msra.mxu0 0.0
        %410 = vmatprep.subr.mxu0 0.0
        %411 = vmatpush1.msra.mxu0 0.0
        %412 = vmatprep.subr.mxu0 0.0
        %413 = vmatpush1.msra.mxu0 0.0
        %414 = vmatprep.subr.mxu0 0.0
        %415 = vmatpush1.msra.mxu0 0.0
        %416 = vmatprep.subr.mxu0 0.0
        %417 = vmatpush1.msra.mxu0 0.0
        %418 = vmatprep.subr.mxu0 0.0
        %419 = vmatpush1.msra.mxu0 0.0
        %420 = vmatprep.subr.mxu0 0.0
        %421 = vmatpush1.msra.mxu0 0.0
        %422 = vmatprep.subr.mxu0 0.0
        %423 = vmatpush1.msra.mxu0 0.0
        %424 = vmatprep.subr.mxu0 0.0
        %425 = vmatpush1.msra.mxu0 0.0
        %426 = vmatprep.subr.mxu0 0.0
        %427 = vmatpush1.msra.mxu0 0.0
        %428 = vmatprep.subr.mxu0 0.0
        %429 = vmatpush1.msra.mxu0 0.0
        %430 = vmatprep.subr.mxu0 0.0
        %431 = vmatpush1.msra.mxu0 0.0
        %432 = vmatprep.subr.mxu0 0.0
        %433 = vmatpush1.msra.mxu0 0.0
        %434 = vmatprep.subr.mxu0 0.0
        %435 = vmatpush1.msra.mxu0 0.0
        %436 = vmatprep.subr.mxu0 0.0
        %437 = vmatpush1.msra.mxu0 0.0
        %438 = vmatprep.subr.mxu0 0.0
        %439 = vmatpush1.msra.mxu0 0.0
        %440 = vmatprep.subr.mxu0 0.0
        %441 = vmatpush1.msra.mxu0 0.0
        %442 = vmatprep.subr.mxu0 0.0
        %443 = vmatpush1.msra.mxu0 0.0
        %444 = vmatprep.subr.mxu0 0.0
        %445 = vmatpush1.msra.mxu0 0.0
        %446 = vmatprep.subr.mxu0 0.0
        %447 = vmatpush1.msra.mxu0 0.0
        %448 = vmatprep.subr.mxu0 0.0
        %449 = vmatpush1.msra.mxu0 0.0
        %450 = vmatprep.mubr.f32.mxu0 0.0
        %451 = vmatmul.mubr.f32.gmra.mrb[0].mxu0 %v384
        %v452 = vpop.f32.mrb[0].mxu0
        %v453 = vadd.f32 %v379, %v452
        %v454 = vpop.f32.mrb[0].mxu0
        %455 = vdwg.mxu0
        %v456 = vmax.f32 %v453, 0.0
        %vm457 = vcmask 130048
        %v459 = vsel %vm457, %v456, 0
        %461 = vmatprep.subr.mxu0 0.0
        %462 = vmatpush1.msra.mxu0 %v380
        %463 = vmatprep.subr.mxu0 0.0
        %464 = vmatpush1.msra.mxu0 %v381
        %465 = vmatprep.subr.mxu0 0.0
        %466 = vmatpush1.msra.mxu0 0.0
        %467 = vmatprep.subr.mxu0 0.0
        %468 = vmatpush1.msra.mxu0 0.0
        %469 = vmatprep.subr.mxu0 0.0
        %470 = vmatpush1.msra.mxu0 0.0
        %471 = vmatprep.subr.mxu0 0.0
        %472 = vmatpush1.msra.mxu0 0.0
        %473 = vmatprep.subr.mxu0 0.0
        %474 = vmatpush1.msra.mxu0 0.0
        %475 = vmatprep.subr.mxu0 0.0
        %476 = vmatpush1.msra.mxu0 0.0
        %477 = vmatprep.subr.mxu0 0.0
        %478 = vmatpush1.msra.mxu0 0.0
        %479 = vmatprep.subr.mxu0 0.0
        %480 = vmatpush1.msra.mxu0 0.0
        %481 = vmatprep.subr.mxu0 0.0
        %482 = vmatpush1.msra.mxu0 0.0
        %483 = vmatprep.subr.mxu0 0.0
        %484 = vmatpush1.msra.mxu0 0.0
        %485 = vmatprep.subr.mxu0 0.0
        %486 = vmatpush1.msra.mxu0 0.0
        %487 = vmatprep.subr.mxu0 0.0
        %488 = vmatpush1.msra.mxu0 0.0
        %489 = vmatprep.subr.mxu0 0.0
        %490 = vmatpush1.msra.mxu0 0.0
        %491 = vmatprep.subr.mxu0 0.0
        %492 = vmatpush1.msra.mxu0 0.0
        %493 = vmatprep.subr.mxu0 0.0
        %494 = vmatpush1.msra.mxu0 0.0
        %495 = vmatprep.subr.mxu0 0.0
        %496 = vmatpush1.msra.mxu0 0.0
        %497 = vmatprep.subr.mxu0 0.0
        %498 = vmatpush1.msra.mxu0 0.0
        %499 = vmatprep.subr.mxu0 0.0
        %500 = vmatpush1.msra.mxu0 0.0
        %501 = vmatprep.subr.mxu0 0.0
        %502 = vmatpush1.msra.mxu0 0.0
        %503 = vmatprep.subr.mxu0 0.0
        %504 = vmatpush1.msra.mxu0 0.0
        %505 = vmatprep.subr.mxu0 0.0
        %506 = vmatpush1.msra.mxu0 0.0
        %507 = vmatprep.subr.mxu0 0.0
        %508 = vmatpush1.msra.mxu0 0.0
        %509 = vmatprep.subr.mxu0 0.0
        %510 = vmatpush1.msra.mxu0 0.0
        %511 = vmatprep.subr.mxu0 0.0
        %512 = vmatpush1.msra.mxu0 0.0
        %513 = vmatprep.subr.mxu0 0.0
        %514 = vmatpush1.msra.mxu0 0.0
        %515 = vmatprep.subr.mxu0 0.0
        %516 = vmatpush1.msra.mxu0 0.0
        %517 = vmatprep.subr.mxu0 0.0
        %518 = vmatpush1.msra.mxu0 0.0
        %519 = vmatprep.subr.mxu0 0.0
        %520 = vmatpush1.msra.mxu0 0.0
        %521 = vmatprep.subr.mxu0 0.0
        %522 = vmatpush1.msra.mxu0 0.0
        %523 = vmatprep.subr.mxu0 0.0
        %524 = vmatpush1.msra.mxu0 0.0
        %525 = vmatprep.mubr.f32.mxu0 0.0
        %526 = vmatmul.mubr.f32.gmra.mrb[0].mxu0 %v459
        %v527 = vpop.f32.mrb[0].mxu0
        %v528 = vadd.f32 %v382, %v527
        %v529 = vpop.f32.mrb[0].mxu0
        %530 = vdwg.mxu0
        %vm531 = vcmask 122880
        %v532 = vsel %vm531, %v528, -inf
        %533 = vmax.xlane.f32.xlu0 %v532
        %v534 = vpop.xlane.xlu0 %533
        %v535 = vsub.f32 %v528, %v534
        %v536 = vmul.f32 %v535, 1.442695
        %v537 = vpow.pop %v536
        %v539 = vsel %vm457, %v537, 0
        %541 = vmatprep.subr.mxu0 0.0
        %542 = vmatpush1.msra.mxu0 %v279
        %543 = vmatprep.subr.mxu0 0.0
        %544 = vmatpush1.msra.mxu0 %v280
        %545 = vmatprep.subr.mxu0 0.0
        %546 = vmatpush1.msra.mxu0 0.0
        %547 = vmatprep.subr.mxu0 0.0
        %548 = vmatpush1.msra.mxu0 0.0
        %549 = vmatprep.subr.mxu0 0.0
        %550 = vmatpush1.msra.mxu0 0.0
        %551 = vmatprep.subr.mxu0 0.0
        %552 = vmatpush1.msra.mxu0 0.0
        %553 = vmatprep.subr.mxu0 0.0
        %554 = vmatpush1.msra.mxu0 0.0
        %555 = vmatprep.subr.mxu0 0.0
        %556 = vmatpush1.msra.mxu0 0.0
        %557 = vmatprep.subr.mxu0 0.0
        %558 = vmatpush1.msra.mxu0 0.0
        %559 = vmatprep.subr.mxu0 0.0
        %560 = vmatpush1.msra.mxu0 0.0
        %561 = vmatprep.subr.mxu0 0.0
        %562 = vmatpush1.msra.mxu0 0.0
        %563 = vmatprep.subr.mxu0 0.0
        %564 = vmatpush1.msra.mxu0 0.0
        %565 = vmatprep.subr.mxu0 0.0
        %566 = vmatpush1.msra.mxu0 0.0
        %567 = vmatprep.subr.mxu0 0.0
        %568 = vmatpush1.msra.mxu0 0.0
        %569 = vmatprep.subr.mxu0 0.0
        %570 = vmatpush1.msra.mxu0 0.0
        %571 = vmatprep.subr.mxu0 0.0
        %572 = vmatpush1.msra.mxu0 0.0
        %573 = vmatprep.subr.mxu0 0.0
        %574 = vmatpush1.msra.mxu0 0.0
        %575 = vmatprep.subr.mxu0 0.0
        %576 = vmatpush1.msra.mxu0 0.0
        %577 = vmatprep.subr.mxu0 0.0
        %578 = vmatpush1.msra.mxu0 0.0
        %579 = vmatprep.subr.mxu0 0.0
        %580 = vmatpush1.msra.mxu0 0.0
        %581 = vmatprep.subr.mxu0 0.0
        %582 = vmatpush1.msra.mxu0 0.0
        %583 = vmatprep.subr.mxu0 0.0
        %584 = vmatpush1.msra.mxu0 0.0
        %585 = vmatprep.subr.mxu0 0.0
        %586 = vmatpush1.msra.mxu0 0.0
        %587 = vmatprep.subr.mxu0 0.0
        %588 = vmatpush1.msra.mxu0 0.0
        %589 = vmatprep.subr.mxu0 0.0
        %590 = vmatpush1.msra.mxu0 0.0
        %591 = vmatprep.subr.mxu0 0.0
        %592 = vmatpush1.msra.mxu0 0.0
        %593 = vmatprep.subr.mxu0 0.0
        %594 = vmatpush1.msra.mxu0 0.0
        %595 = vmatprep.subr.mxu0 0.0
        %596 = vmatpush1.msra.mxu0 0.0
        %597 = vmatprep.subr.mxu0 0.0
        %598 = vmatpush1.msra.mxu0 0.0
        %599 = vmatprep.subr.mxu0 0.0
        %600 = vmatpush1.msra.mxu0 0.0
        %601 = vmatprep.subr.mxu0 0.0
        %602 = vmatpush1.msra.mxu0 0.0
        %603 = vmatprep.subr.mxu0 0.0
        %604 = vmatpush1.msra.mxu0 0.0
        %605 = vmatprep.mubr.f32.mxu0 0.0
        %606 = vmatmul.mubr.f32.gmra.mrb[0].mxu0 %v539
        %v607 = vpop.f32.mrb[0].mxu0
        %v608 = vadd.f32 0.0, %v607
        %v609 = vpop.f32.mrb[0].mxu0
        %610 = vdwg.mxu0
        %v611 = vrcp.pop %v608
        %v612 = vmul.f32 %v537, %v611
        %v613 = vld [vmem:[#allocation4] sm:$0xff]
        %v614 = vld [vmem:[#allocation4 + $0x8] sm:$0xff]
        %v615 = vld [vmem:[#allocation4 + $0x10] sm:$0xff]
        %v616 = vld [vmem:[#allocation4 + $0x18] sm:$0xff]
        %v617 = vld [vmem:[%s3 + $0x32] sm:$0x1]
        %v618 = vlaneseq
        %v619 = vshrl.u32 %v618, 7
        %v620 = vsub.s32 0, %v619
        %v621 = vrot.slane %v617, %v620
        %v623 = vsel %vm301, %v297, 0
        %v626 = vsel %vm301, %v298, 0
        %v629 = vsel %vm301, %v299, 0
        %v632 = vsel %vm301, %v300, 0
        %634 = vmatprep.subr.mxu0 0.0
        %635 = vmatpush1.msra.mxu0 %v613
        %636 = vmatprep.subr.mxu0 0.0
        %637 = vmatpush1.msra.mxu0 %v614
        %638 = vmatprep.subr.mxu0 0.0
        %639 = vmatpush1.msra.mxu0 %v615
        %640 = vmatprep.subr.mxu0 0.0
        %641 = vmatpush1.msra.mxu0 %v616
        %642 = vmatprep.subr.mxu0 0.0
        %643 = vmatpush1.msra.mxu0 0.0
        %644 = vmatprep.subr.mxu0 0.0
        %645 = vmatpush1.msra.mxu0 0.0
        %646 = vmatprep.subr.mxu0 0.0
        %647 = vmatpush1.msra.mxu0 0.0
        %648 = vmatprep.subr.mxu0 0.0
        %649 = vmatpush1.msra.mxu0 0.0
        %650 = vmatprep.subr.mxu0 0.0
        %651 = vmatpush1.msra.mxu0 0.0
        %652 = vmatprep.subr.mxu0 0.0
        %653 = vmatpush1.msra.mxu0 0.0
        %654 = vmatprep.subr.mxu0 0.0
        %655 = vmatpush1.msra.mxu0 0.0
        %656 = vmatprep.subr.mxu0 0.0
        %657 = vmatpush1.msra.mxu0 0.0
        %658 = vmatprep.subr.mxu0 0.0
        %659 = vmatpush1.msra.mxu0 0.0
        %660 = vmatprep.subr.mxu0 0.0
        %661 = vmatpush1.msra.mxu0 0.0
        %662 = vmatprep.subr.mxu0 0.0
        %663 = vmatpush1.msra.mxu0 0.0
        %664 = vmatprep.subr.mxu0 0.0
        %665 = vmatpush1.msra.mxu0 0.0
        %666 = vmatprep.subr.mxu0 0.0
        %667 = vmatpush1.msra.mxu0 0.0
        %668 = vmatprep.subr.mxu0 0.0
        %669 = vmatpush1.msra.mxu0 0.0
        %670 = vmatprep.subr.mxu0 0.0
        %671 = vmatpush1.msra.mxu0 0.0
        %672 = vmatprep.subr.mxu0 0.0
        %673 = vmatpush1.msra.mxu0 0.0
        %674 = vmatprep.subr.mxu0 0.0
        %675 = vmatpush1.msra.mxu0 0.0
        %676 = vmatprep.subr.mxu0 0.0
        %677 = vmatpush1.msra.mxu0 0.0
        %678 = vmatprep.subr.mxu0 0.0
        %679 = vmatpush1.msra.mxu0 0.0
        %680 = vmatprep.subr.mxu0 0.0
        %681 = vmatpush1.msra.mxu0 0.0
        %682 = vmatprep.subr.mxu0 0.0
        %683 = vmatpush1.msra.mxu0 0.0
        %684 = vmatprep.subr.mxu0 0.0
        %685 = vmatpush1.msra.mxu0 0.0
        %686 = vmatprep.subr.mxu0 0.0
        %687 = vmatpush1.msra.mxu0 0.0
        %688 = vmatprep.subr.mxu0 0.0
        %689 = vmatpush1.msra.mxu0 0.0
        %690 = vmatprep.subr.mxu0 0.0
        %691 = vmatpush1.msra.mxu0 0.0
        %692 = vmatprep.subr.mxu0 0.0
        %693 = vmatpush1.msra.mxu0 0.0
        %694 = vmatprep.subr.mxu0 0.0
        %695 = vmatpush1.msra.mxu0 0.0
        %696 = vmatprep.subr.mxu0 0.0
        %697 = vmatpush1.msra.mxu0 0.0
        %698 = vmatprep.mubr.f32.mxu0 0.0
        %699 = vmatmul.mubr.f32.gmra.mrb[0].mxu0 %v623
        %v700 = vpop.f32.mrb[0].mxu0
        %v701 = vadd.f32 %v621, %v700
        %v702 = vpop.f32.mrb[0].mxu0
        %703 = vmatprep.mubr.f32.mxu0 0.0
        %704 = vmatmul.mubr.f32.gmra.mrb[0].mxu0 %v626
        %v705 = vpop.f32.mrb[0].mxu0
        %v706 = vadd.f32 %v621, %v705
        %v707 = vpop.f32.mrb[0].mxu0
        %708 = vmatprep.mubr.f32.mxu0 0.0
        %709 = vmatmul.mubr.f32.gmra.mrb[0].mxu0 %v629
        %v710 = vpop.f32.mrb[0].mxu0
        %v711 = vadd.f32 %v621, %v710
        %v712 = vpop.f32.mrb[0].mxu0
        %713 = vmatprep.mubr.f32.mxu0 0.0
        %714 = vmatmul.mubr.f32.gmra.mrb[0].mxu0 %v632
        %v715 = vpop.f32.mrb[0].mxu0
        %v716 = vadd.f32 %v621, %v715
        %v717 = vpop.f32.mrb[0].mxu0
        %718 = vdwg.mxu0
        %v719 = vmax.f32 %v701, 0.0
        %v720 = vmax.f32 %v706, 0.0
        %v721 = vmax.f32 %v711, 0.0
        %v722 = vmax.f32 %v716, 0.0
        %v723 = vld [vmem:[#allocation6] sm:$0xff]
        %v724 = vld [vmem:[#allocation6 + $0x8] sm:$0xff]
        %v726 = vsel %vm457, %v612, 0
        %728 = vmatprep.subr.mxu0 0.0
        %729 = vmatpush1.msra.mxu0 %v723
        %730 = vmatprep.subr.mxu0 0.0
        %731 = vmatpush1.msra.mxu0 %v724
        %732 = vmatprep.subr.mxu0 0.0
        %733 = vmatpush1.msra.mxu0 0.0
        %734 = vmatprep.subr.mxu0 0.0
        %735 = vmatpush1.msra.mxu0 0.0
        %736 = vmatprep.subr.mxu0 0.0
        %737 = vmatpush1.msra.mxu0 0.0
        %738 = vmatprep.subr.mxu0 0.0
        %739 = vmatpush1.msra.mxu0 0.0
        %740 = vmatprep.subr.mxu0 0.0
        %741 = vmatpush1.msra.mxu0 0.0
        %742 = vmatprep.subr.mxu0 0.0
        %743 = vmatpush1.msra.mxu0 0.0
        %744 = vmatprep.subr.mxu0 0.0
        %745 = vmatpush1.msra.mxu0 0.0
        %746 = vmatprep.subr.mxu0 0.0
        %747 = vmatpush1.msra.mxu0 0.0
        %748 = vmatprep.subr.mxu0 0.0
        %749 = vmatpush1.msra.mxu0 0.0
        %750 = vmatprep.subr.mxu0 0.0
        %751 = vmatpush1.msra.mxu0 0.0
        %752 = vmatprep.subr.mxu0 0.0
        %753 = vmatpush1.msra.mxu0 0.0
        %754 = vmatprep.subr.mxu0 0.0
        %755 = vmatpush1.msra.mxu0 0.0
        %756 = vmatprep.subr.mxu0 0.0
        %757 = vmatpush1.msra.mxu0 0.0
        %758 = vmatprep.subr.mxu0 0.0
        %759 = vmatpush1.msra.mxu0 0.0
        %760 = vmatprep.subr.mxu0 0.0
        %761 = vmatpush1.msra.mxu0 0.0
        %762 = vmatprep.subr.mxu0 0.0
        %763 = vmatpush1.msra.mxu0 0.0
        %764 = vmatprep.subr.mxu0 0.0
        %765 = vmatpush1.msra.mxu0 0.0
        %766 = vmatprep.subr.mxu0 0.0
        %767 = vmatpush1.msra.mxu0 0.0
        %768 = vmatprep.subr.mxu0 0.0
        %769 = vmatpush1.msra.mxu0 0.0
        %770 = vmatprep.subr.mxu0 0.0
        %771 = vmatpush1.msra.mxu0 0.0
        %772 = vmatprep.subr.mxu0 0.0
        %773 = vmatpush1.msra.mxu0 0.0
        %774 = vmatprep.subr.mxu0 0.0
        %775 = vmatpush1.msra.mxu0 0.0
        %776 = vmatprep.subr.mxu0 0.0
        %777 = vmatpush1.msra.mxu0 0.0
        %778 = vmatprep.subr.mxu0 0.0
        %779 = vmatpush1.msra.mxu0 0.0
        %780 = vmatprep.subr.mxu0 0.0
        %781 = vmatpush1.msra.mxu0 0.0
        %782 = vmatprep.subr.mxu0 0.0
        %783 = vmatpush1.msra.mxu0 0.0
        %784 = vmatprep.subr.mxu0 0.0
        %785 = vmatpush1.msra.mxu0 0.0
        %786 = vmatprep.subr.mxu0 0.0
        %787 = vmatpush1.msra.mxu0 0.0
        %788 = vmatprep.subr.mxu0 0.0
        %789 = vmatpush1.msra.mxu0 0.0
        %790 = vmatprep.subr.mxu0 0.0
        %791 = vmatpush1.msra.mxu0 0.0
        %792 = vmatprep.mubr.f32.mxu0 0.0
        %793 = vmatmul.mubr.f32.gmra.mrb[0].mxu0 %v726
        %v794 = vpop.f32.mrb[0].mxu0
        %v795 = vadd.f32 0.0, %v794
        %v796 = vpop.f32.mrb[0].mxu0
        %797 = vdwg.mxu0
        %v798 = vld [vmem:[#allocation6 + $0x10] sm:$0xff]
        %v799 = vld [vmem:[#allocation6 + $0x18] sm:$0xff]
        %800 = vmatprep.subr.mxu0 0.0
        %801 = vmatpush1.msra.mxu0 %v798
        %802 = vmatprep.subr.mxu0 0.0
        %803 = vmatpush1.msra.mxu0 %v799
        %804 = vmatprep.subr.mxu0 0.0
        %805 = vmatpush1.msra.mxu0 0.0
        %806 = vmatprep.subr.mxu0 0.0
        %807 = vmatpush1.msra.mxu0 0.0
        %808 = vmatprep.subr.mxu0 0.0
        %809 = vmatpush1.msra.mxu0 0.0
        %810 = vmatprep.subr.mxu0 0.0
        %811 = vmatpush1.msra.mxu0 0.0
        %812 = vmatprep.subr.mxu0 0.0
        %813 = vmatpush1.msra.mxu0 0.0
        %814 = vmatprep.subr.mxu0 0.0
        %815 = vmatpush1.msra.mxu0 0.0
        %816 = vmatprep.subr.mxu0 0.0
        %817 = vmatpush1.msra.mxu0 0.0
        %818 = vmatprep.subr.mxu0 0.0
        %819 = vmatpush1.msra.mxu0 0.0
        %820 = vmatprep.subr.mxu0 0.0
        %821 = vmatpush1.msra.mxu0 0.0
        %822 = vmatprep.subr.mxu0 0.0
        %823 = vmatpush1.msra.mxu0 0.0
        %824 = vmatprep.subr.mxu0 0.0
        %825 = vmatpush1.msra.mxu0 0.0
        %826 = vmatprep.subr.mxu0 0.0
        %827 = vmatpush1.msra.mxu0 0.0
        %828 = vmatprep.subr.mxu0 0.0
        %829 = vmatpush1.msra.mxu0 0.0
        %830 = vmatprep.subr.mxu0 0.0
        %831 = vmatpush1.msra.mxu0 0.0
        %832 = vmatprep.subr.mxu0 0.0
        %833 = vmatpush1.msra.mxu0 0.0
        %834 = vmatprep.subr.mxu0 0.0
        %835 = vmatpush1.msra.mxu0 0.0
        %836 = vmatprep.subr.mxu0 0.0
        %837 = vmatpush1.msra.mxu0 0.0
        %838 = vmatprep.subr.mxu0 0.0
        %839 = vmatpush1.msra.mxu0 0.0
        %840 = vmatprep.subr.mxu0 0.0
        %841 = vmatpush1.msra.mxu0 0.0
        %842 = vmatprep.subr.mxu0 0.0
        %843 = vmatpush1.msra.mxu0 0.0
        %844 = vmatprep.subr.mxu0 0.0
        %845 = vmatpush1.msra.mxu0 0.0
        %846 = vmatprep.subr.mxu0 0.0
        %847 = vmatpush1.msra.mxu0 0.0
        %848 = vmatprep.subr.mxu0 0.0
        %849 = vmatpush1.msra.mxu0 0.0
        %850 = vmatprep.subr.mxu0 0.0
        %851 = vmatpush1.msra.mxu0 0.0
        %852 = vmatprep.subr.mxu0 0.0
        %853 = vmatpush1.msra.mxu0 0.0
        %854 = vmatprep.subr.mxu0 0.0
        %855 = vmatpush1.msra.mxu0 0.0
        %856 = vmatprep.subr.mxu0 0.0
        %857 = vmatpush1.msra.mxu0 0.0
        %858 = vmatprep.subr.mxu0 0.0
        %859 = vmatpush1.msra.mxu0 0.0
        %860 = vmatprep.subr.mxu0 0.0
        %861 = vmatpush1.msra.mxu0 0.0
        %862 = vmatprep.subr.mxu0 0.0
        %863 = vmatpush1.msra.mxu0 0.0
        %864 = vmatprep.mubr.f32.mxu0 0.0
        %865 = vmatmul.mubr.f32.gmra.mrb[0].mxu0 %v726
        %v866 = vpop.f32.mrb[0].mxu0
        %v867 = vadd.f32 0.0, %v866
        %v868 = vpop.f32.mrb[0].mxu0
        %869 = vdwg.mxu0
        %v870 = vld [vmem:[#allocation6 + $0x20] sm:$0xff]
        %v871 = vld [vmem:[#allocation6 + $0x28] sm:$0xff]
        %872 = vmatprep.subr.mxu0 0.0
        %873 = vmatpush1.msra.mxu0 %v870
        %874 = vmatprep.subr.mxu0 0.0
        %875 = vmatpush1.msra.mxu0 %v871
        %876 = vmatprep.subr.mxu0 0.0
        %877 = vmatpush1.msra.mxu0 0.0
        %878 = vmatprep.subr.mxu0 0.0
        %879 = vmatpush1.msra.mxu0 0.0
        %880 = vmatprep.subr.mxu0 0.0
        %881 = vmatpush1.msra.mxu0 0.0
        %882 = vmatprep.subr.mxu0 0.0
        %883 = vmatpush1.msra.mxu0 0.0
        %884 = vmatprep.subr.mxu0 0.0
        %885 = vmatpush1.msra.mxu0 0.0
        %886 = vmatprep.subr.mxu0 0.0
        %887 = vmatpush1.msra.mxu0 0.0
        %888 = vmatprep.subr.mxu0 0.0
        %889 = vmatpush1.msra.mxu0 0.0
        %890 = vmatprep.subr.mxu0 0.0
        %891 = vmatpush1.msra.mxu0 0.0
        %892 = vmatprep.subr.mxu0 0.0
        %893 = vmatpush1.msra.mxu0 0.0
        %894 = vmatprep.subr.mxu0 0.0
        %895 = vmatpush1.msra.mxu0 0.0
        %896 = vmatprep.subr.mxu0 0.0
        %897 = vmatpush1.msra.mxu0 0.0
        %898 = vmatprep.subr.mxu0 0.0
        %899 = vmatpush1.msra.mxu0 0.0
        %900 = vmatprep.subr.mxu0 0.0
        %901 = vmatpush1.msra.mxu0 0.0
        %902 = vmatprep.subr.mxu0 0.0
        %903 = vmatpush1.msra.mxu0 0.0
        %904 = vmatprep.subr.mxu0 0.0
        %905 = vmatpush1.msra.mxu0 0.0
        %906 = vmatprep.subr.mxu0 0.0
        %907 = vmatpush1.msra.mxu0 0.0
        %908 = vmatprep.subr.mxu0 0.0
        %909 = vmatpush1.msra.mxu0 0.0
        %910 = vmatprep.subr.mxu0 0.0
        %911 = vmatpush1.msra.mxu0 0.0
        %912 = vmatprep.subr.mxu0 0.0
        %913 = vmatpush1.msra.mxu0 0.0
        %914 = vmatprep.subr.mxu0 0.0
        %915 = vmatpush1.msra.mxu0 0.0
        %916 = vmatprep.subr.mxu0 0.0
        %917 = vmatpush1.msra.mxu0 0.0
        %918 = vmatprep.subr.mxu0 0.0
        %919 = vmatpush1.msra.mxu0 0.0
        %920 = vmatprep.subr.mxu0 0.0
        %921 = vmatpush1.msra.mxu0 0.0
        %922 = vmatprep.subr.mxu0 0.0
        %923 = vmatpush1.msra.mxu0 0.0
        %924 = vmatprep.subr.mxu0 0.0
        %925 = vmatpush1.msra.mxu0 0.0
        %926 = vmatprep.subr.mxu0 0.0
        %927 = vmatpush1.msra.mxu0 0.0
        %928 = vmatprep.subr.mxu0 0.0
        %929 = vmatpush1.msra.mxu0 0.0
        %930 = vmatprep.subr.mxu0 0.0
        %931 = vmatpush1.msra.mxu0 0.0
        %932 = vmatprep.subr.mxu0 0.0
        %933 = vmatpush1.msra.mxu0 0.0
        %934 = vmatprep.subr.mxu0 0.0
        %935 = vmatpush1.msra.mxu0 0.0
        %936 = vmatprep.mubr.f32.mxu0 0.0
        %937 = vmatmul.mubr.f32.gmra.mrb[0].mxu0 %v726
        %v938 = vpop.f32.mrb[0].mxu0
        %v939 = vadd.f32 0.0, %v938
        %v940 = vpop.f32.mrb[0].mxu0
        %941 = vdwg.mxu0
        %v942 = vld [vmem:[#allocation6 + $0x30] sm:$0xff]
        %v943 = vld [vmem:[#allocation6 + $0x38] sm:$0xff]
        %944 = vmatprep.subr.mxu0 0.0
        %945 = vmatpush1.msra.mxu0 %v942
        %946 = vmatprep.subr.mxu0 0.0
        %947 = vmatpush1.msra.mxu0 %v943
        %948 = vmatprep.subr.mxu0 0.0
        %949 = vmatpush1.msra.mxu0 0.0
        %950 = vmatprep.subr.mxu0 0.0
        %951 = vmatpush1.msra.mxu0 0.0
        %952 = vmatprep.subr.mxu0 0.0
        %953 = vmatpush1.msra.mxu0 0.0
        %954 = vmatprep.subr.mxu0 0.0
        %955 = vmatpush1.msra.mxu0 0.0
        %956 = vmatprep.subr.mxu0 0.0
        %957 = vmatpush1.msra.mxu0 0.0
        %958 = vmatprep.subr.mxu0 0.0
        %959 = vmatpush1.msra.mxu0 0.0
        %960 = vmatprep.subr.mxu0 0.0
        %961 = vmatpush1.msra.mxu0 0.0
        %962 = vmatprep.subr.mxu0 0.0
        %963 = vmatpush1.msra.mxu0 0.0
        %964 = vmatprep.subr.mxu0 0.0
        %965 = vmatpush1.msra.mxu0 0.0
        %966 = vmatprep.subr.mxu0 0.0
        %967 = vmatpush1.msra.mxu0 0.0
        %968 = vmatprep.subr.mxu0 0.0
        %969 = vmatpush1.msra.mxu0 0.0
        %970 = vmatprep.subr.mxu0 0.0
        %971 = vmatpush1.msra.mxu0 0.0
        %972 = vmatprep.subr.mxu0 0.0
        %973 = vmatpush1.msra.mxu0 0.0
        %974 = vmatprep.subr.mxu0 0.0
        %975 = vmatpush1.msra.mxu0 0.0
        %976 = vmatprep.subr.mxu0 0.0
        %977 = vmatpush1.msra.mxu0 0.0
        %978 = vmatprep.subr.mxu0 0.0
        %979 = vmatpush1.msra.mxu0 0.0
        %980 = vmatprep.subr.mxu0 0.0
        %981 = vmatpush1.msra.mxu0 0.0
        %982 = vmatprep.subr.mxu0 0.0
        %983 = vmatpush1.msra.mxu0 0.0
        %984 = vmatprep.subr.mxu0 0.0
        %985 = vmatpush1.msra.mxu0 0.0
        %986 = vmatprep.subr.mxu0 0.0
        %987 = vmatpush1.msra.mxu0 0.0
        %988 = vmatprep.subr.mxu0 0.0
        %989 = vmatpush1.msra.mxu0 0.0
        %990 = vmatprep.subr.mxu0 0.0
        %991 = vmatpush1.msra.mxu0 0.0
        %992 = vmatprep.subr.mxu0 0.0
        %993 = vmatpush1.msra.mxu0 0.0
        %994 = vmatprep.subr.mxu0 0.0
        %995 = vmatpush1.msra.mxu0 0.0
        %996 = vmatprep.subr.mxu0 0.0
        %997 = vmatpush1.msra.mxu0 0.0
        %998 = vmatprep.subr.mxu0 0.0
        %999 = vmatpush1.msra.mxu0 0.0
        %1000 = vmatprep.subr.mxu0 0.0
        %1001 = vmatpush1.msra.mxu0 0.0
        %1002 = vmatprep.subr.mxu0 0.0
        %1003 = vmatpush1.msra.mxu0 0.0
        %1004 = vmatprep.subr.mxu0 0.0
        %1005 = vmatpush1.msra.mxu0 0.0
        %1006 = vmatprep.subr.mxu0 0.0
        %1007 = vmatpush1.msra.mxu0 0.0
        %1008 = vmatprep.mubr.f32.mxu0 0.0
        %1009 = vmatmul.mubr.f32.gmra.mrb[0].mxu0 %v726
        %v1010 = vpop.f32.mrb[0].mxu0
        %v1011 = vadd.f32 0.0, %v1010
        %v1012 = vpop.f32.mrb[0].mxu0
        %1013 = vdwg.mxu0
        %v1014 = vld [vmem:[#allocation6 + $0x60] sm:$0xff]
        %v1015 = vld [vmem:[#allocation6 + $0x68] sm:$0xff]
        %v1016 = vld [vmem:[#allocation6 + $0x70] sm:$0xff]
        %v1017 = vld [vmem:[#allocation6 + $0x78] sm:$0xff]
        %v1018 = vld [vmem:[#allocation6 + $0x80] sm:$0xff]
        %v1019 = vld [vmem:[#allocation6 + $0x88] sm:$0xff]
        %v1020 = vld [vmem:[#allocation6 + $0x90] sm:$0xff]
        %v1021 = vld [vmem:[#allocation6 + $0x98] sm:$0xff]
        %v1022 = vld [vmem:[#allocation6 + $0xa0] sm:$0xff]
        %v1023 = vld [vmem:[#allocation6 + $0xa8] sm:$0xff]
        %v1024 = vld [vmem:[#allocation6 + $0xb0] sm:$0xff]
        %v1025 = vld [vmem:[#allocation6 + $0xb8] sm:$0xff]
        %v1026 = vld [vmem:[#allocation6 + $0xc0] sm:$0xff]
        %v1027 = vld [vmem:[#allocation6 + $0xc8] sm:$0xff]
        %v1028 = vld [vmem:[#allocation6 + $0xd0] sm:$0xff]
        %v1029 = vld [vmem:[#allocation6 + $0xd8] sm:$0xff]
        %v1030 = vlaneseq
        %v1031 = vshrl.u32 %v1030, 7
        %v1032 = vsub.s32 0, %v1031
        %v1033 = vrot.slane %v795, %v1032
        %v1034 = vmul.f32 %v719, %v1033
        %v1035 = vmul.f32 %v720, %v1033
        %v1036 = vmul.f32 %v721, %v1033
        %v1037 = vmul.f32 %v722, %v1033
        %v1038 = vld [vmem:[#allocation6 + $0xe0] sm:$0xff]
        %v1039 = vld [vmem:[#allocation6 + $0xe8] sm:$0xff]
        %v1040 = vld [vmem:[#allocation6 + $0xf0] sm:$0xff]
        %v1041 = vld [vmem:[#allocation6 + $0xf8] sm:$0xff]
        %v1042 = vld [vmem:[#allocation6 + $0x100] sm:$0xff]
        %v1043 = vld [vmem:[#allocation6 + $0x108] sm:$0xff]
        %v1044 = vld [vmem:[#allocation6 + $0x110] sm:$0xff]
        %v1045 = vld [vmem:[#allocation6 + $0x118] sm:$0xff]
        %v1046 = vld [vmem:[#allocation6 + $0x120] sm:$0xff]
        %v1047 = vld [vmem:[#allocation6 + $0x128] sm:$0xff]
        %v1048 = vld [vmem:[#allocation6 + $0x130] sm:$0xff]
        %v1049 = vld [vmem:[#allocation6 + $0x138] sm:$0xff]
        %v1050 = vld [vmem:[#allocation6 + $0x140] sm:$0xff]
        %v1051 = vld [vmem:[#allocation6 + $0x148] sm:$0xff]
        %v1052 = vld [vmem:[#allocation6 + $0x150] sm:$0xff]
        %v1053 = vld [vmem:[#allocation6 + $0x158] sm:$0xff]
        %v1054 = vlaneseq
        %v1055 = vshrl.u32 %v1054, 7
        %v1056 = vsub.s32 0, %v1055
        %v1057 = vrot.slane %v867, %v1056
        %v1058 = vmul.f32 %v719, %v1057
        %v1059 = vmul.f32 %v720, %v1057
        %v1060 = vmul.f32 %v721, %v1057
        %v1061 = vmul.f32 %v722, %v1057
        %1062 = vmatprep.subr.mxu0 0.0
        %1063 = vmatpush1.msra.mxu0 %v1038
        %1064 = vmatprep.subr.mxu0 0.0
        %1065 = vmatpush1.msra.mxu0 %v1039
        %1066 = vmatprep.subr.mxu0 0.0
        %1067 = vmatpush1.msra.mxu0 %v1040
        %1068 = vmatprep.subr.mxu0 0.0
        %1069 = vmatpush1.msra.mxu0 %v1041
        %1070 = vmatprep.subr.mxu0 0.0
        %1071 = vmatpush1.msra.mxu0 %v1042
        %1072 = vmatprep.subr.mxu0 0.0
        %1073 = vmatpush1.msra.mxu0 %v1043
        %1074 = vmatprep.subr.mxu0 0.0
        %1075 = vmatpush1.msra.mxu0 %v1044
        %1076 = vmatprep.subr.mxu0 0.0
        %1077 = vmatpush1.msra.mxu0 %v1045
        %1078 = vmatprep.subr.mxu0 0.0
        %1079 = vmatpush1.msra.mxu0 %v1046
        %1080 = vmatprep.subr.mxu0 0.0
        %1081 = vmatpush1.msra.mxu0 %v1047
        %1082 = vmatprep.subr.mxu0 0.0
        %1083 = vmatpush1.msra.mxu0 %v1048
        %1084 = vmatprep.subr.mxu0 0.0
        %1085 = vmatpush1.msra.mxu0 %v1049
        %1086 = vmatprep.subr.mxu0 0.0
        %1087 = vmatpush1.msra.mxu0 %v1050
        %1088 = vmatprep.subr.mxu0 0.0
        %1089 = vmatpush1.msra.mxu0 %v1051
        %1090 = vmatprep.subr.mxu0 0.0
        %1091 = vmatpush1.msra.mxu0 %v1052
        %1092 = vmatprep.subr.mxu0 0.0
        %1093 = vmatpush1.msra.mxu0 %v1053
        %1094 = vmatprep.subr.mxu0 0.0
        %1095 = vmatpush1.msra.mxu0 0.0
        %1096 = vmatprep.subr.mxu0 0.0
        %1097 = vmatpush1.msra.mxu0 0.0
        %1098 = vmatprep.subr.mxu0 0.0
        %1099 = vmatpush1.msra.mxu0 0.0
        %1100 = vmatprep.subr.mxu0 0.0
        %1101 = vmatpush1.msra.mxu0 0.0
        %1102 = vmatprep.subr.mxu0 0.0
        %1103 = vmatpush1.msra.mxu0 0.0
        %1104 = vmatprep.subr.mxu0 0.0
        %1105 = vmatpush1.msra.mxu0 0.0
        %1106 = vmatprep.subr.mxu0 0.0
        %1107 = vmatpush1.msra.mxu0 0.0
        %1108 = vmatprep.subr.mxu0 0.0
        %1109 = vmatpush1.msra.mxu0 0.0
        %1110 = vmatprep.subr.mxu0 0.0
        %1111 = vmatpush1.msra.mxu0 0.0
        %1112 = vmatprep.subr.mxu0 0.0
        %1113 = vmatpush1.msra.mxu0 0.0
        %1114 = vmatprep.subr.mxu0 0.0
        %1115 = vmatpush1.msra.mxu0 0.0
        %1116 = vmatprep.subr.mxu0 0.0
        %1117 = vmatpush1.msra.mxu0 0.0
        %1118 = vmatprep.subr.mxu0 0.0
        %1119 = vmatpush1.msra.mxu0 0.0
        %1120 = vmatprep.subr.mxu0 0.0
        %1121 = vmatpush1.msra.mxu0 0.0
        %1122 = vmatprep.subr.mxu0 0.0
        %1123 = vmatpush1.msra.mxu0 0.0
        %1124 = vmatprep.subr.mxu0 0.0
        %1125 = vmatpush1.msra.mxu0 0.0
        %1126 = vmatprep.mubr.f32.mxu0 0.0
        %1127 = vmatmul.mubr.f32.gmra.mrb[0].mxu0 %v1058
        %v1128 = vpop.f32.mrb[0].mxu0
        %v1129 = vadd.f32 0.0, %v1128
        %v1130 = vpop.f32.mrb[0].mxu0
        %1131 = vmatprep.mubr.f32.mxu0 0.0
        %1132 = vmatmul.mubr.f32.gmra.mrb[0].mxu0 %v1059
        %v1133 = vpop.f32.mrb[0].mxu0
        %v1134 = vadd.f32 0.0, %v1133
        %v1135 = vpop.f32.mrb[0].mxu0
        %1136 = vmatprep.mubr.f32.mxu0 0.0
        %1137 = vmatmul.mubr.f32.gmra.mrb[0].mxu0 %v1060
        %v1138 = vpop.f32.mrb[0].mxu0
        %v1139 = vadd.f32 0.0, %v1138
        %v1140 = vpop.f32.mrb[0].mxu0
        %1141 = vmatprep.mubr.f32.mxu0 0.0
        %1142 = vmatmul.mubr.f32.gmra.mrb[0].mxu0 %v1061
        %v1143 = vpop.f32.mrb[0].mxu0
        %v1144 = vadd.f32 0.0, %v1143
        %v1145 = vpop.f32.mrb[0].mxu0
        %1146 = vdwg.mxu0
        %1147 = vmatprep.subr.mxu0 0.0
        %1148 = vmatpush1.msra.mxu0 %v1014
        %1149 = vmatprep.subr.mxu0 0.0
        %1150 = vmatpush1.msra.mxu0 %v1015
        %1151 = vmatprep.subr.mxu0 0.0
        %1152 = vmatpush1.msra.mxu0 %v1016
        %1153 = vmatprep.subr.mxu0 0.0
        %1154 = vmatpush1.msra.mxu0 %v1017
        %1155 = vmatprep.subr.mxu0 0.0
        %1156 = vmatpush1.msra.mxu0 %v1018
        %1157 = vmatprep.subr.mxu0 0.0
        %1158 = vmatpush1.msra.mxu0 %v1019
        %1159 = vmatprep.subr.mxu0 0.0
        %1160 = vmatpush1.msra.mxu0 %v1020
        %1161 = vmatprep.subr.mxu0 0.0
        %1162 = vmatpush1.msra.mxu0 %v1021
        %1163 = vmatprep.subr.mxu0 0.0
        %1164 = vmatpush1.msra.mxu0 %v1022
        %1165 = vmatprep.subr.mxu0 0.0
        %1166 = vmatpush1.msra.mxu0 %v1023
        %1167 = vmatprep.subr.mxu0 0.0
        %1168 = vmatpush1.msra.mxu0 %v1024
        %1169 = vmatprep.subr.mxu0 0.0
        %1170 = vmatpush1.msra.mxu0 %v1025
        %1171 = vmatprep.subr.mxu0 0.0
        %1172 = vmatpush1.msra.mxu0 %v1026
        %1173 = vmatprep.subr.mxu0 0.0
        %1174 = vmatpush1.msra.mxu0 %v1027
        %1175 = vmatprep.subr.mxu0 0.0
        %1176 = vmatpush1.msra.mxu0 %v1028
        %1177 = vmatprep.subr.mxu0 0.0
        %1178 = vmatpush1.msra.mxu0 %v1029
        %1179 = vmatprep.subr.mxu0 0.0
        %1180 = vmatpush1.msra.mxu0 0.0
        %1181 = vmatprep.subr.mxu0 0.0
        %1182 = vmatpush1.msra.mxu0 0.0
        %1183 = vmatprep.subr.mxu0 0.0
        %1184 = vmatpush1.msra.mxu0 0.0
        %1185 = vmatprep.subr.mxu0 0.0
        %1186 = vmatpush1.msra.mxu0 0.0
        %1187 = vmatprep.subr.mxu0 0.0
        %1188 = vmatpush1.msra.mxu0 0.0
        %1189 = vmatprep.subr.mxu0 0.0
        %1190 = vmatpush1.msra.mxu0 0.0
        %1191 = vmatprep.subr.mxu0 0.0
        %1192 = vmatpush1.msra.mxu0 0.0
        %1193 = vmatprep.subr.mxu0 0.0
        %1194 = vmatpush1.msra.mxu0 0.0
        %1195 = vmatprep.subr.mxu0 0.0
        %1196 = vmatpush1.msra.mxu0 0.0
        %1197 = vmatprep.subr.mxu0 0.0
        %1198 = vmatpush1.msra.mxu0 0.0
        %1199 = vmatprep.subr.mxu0 0.0
        %1200 = vmatpush1.msra.mxu0 0.0
        %1201 = vmatprep.subr.mxu0 0.0
        %1202 = vmatpush1.msra.mxu0 0.0
        %1203 = vmatprep.subr.mxu0 0.0
        %1204 = vmatpush1.msra.mxu0 0.0
        %1205 = vmatprep.subr.mxu0 0.0
        %1206 = vmatpush1.msra.mxu0 0.0
        %1207 = vmatprep.subr.mxu0 0.0
        %1208 = vmatpush1.msra.mxu0 0.0
        %1209 = vmatprep.subr.mxu0 0.0
        %1210 = vmatpush1.msra.mxu0 0.0
        %1211 = vmatprep.mubr.f32.mxu0 0.0
        %1212 = vmatmul.mubr.f32.gmra.mrb[0].mxu0 %v1034
        %v1213 = vpop.f32.mrb[0].mxu0
        %v1214 = vadd.f32 %v1129, %v1213
        %v1215 = vpop.f32.mrb[0].mxu0
        %1216 = vmatprep.mubr.f32.mxu0 0.0
        %1217 = vmatmul.mubr.f32.gmra.mrb[0].mxu0 %v1035
        %v1218 = vpop.f32.mrb[0].mxu0
        %v1219 = vadd.f32 %v1134, %v1218
        %v1220 = vpop.f32.mrb[0].mxu0
        %1221 = vmatprep.mubr.f32.mxu0 0.0
        %1222 = vmatmul.mubr.f32.gmra.mrb[0].mxu0 %v1036
        %v1223 = vpop.f32.mrb[0].mxu0
        %v1224 = vadd.f32 %v1139, %v1223
        %v1225 = vpop.f32.mrb[0].mxu0
        %1226 = vmatprep.mubr.f32.mxu0 0.0
        %1227 = vmatmul.mubr.f32.gmra.mrb[0].mxu0 %v1037
        %v1228 = vpop.f32.mrb[0].mxu0
        %v1229 = vadd.f32 %v1144, %v1228
        %v1230 = vpop.f32.mrb[0].mxu0
        %1231 = vdwg.mxu0
        %v1232 = vld [vmem:[#allocation6 + $0x160] sm:$0xff]
        %v1233 = vld [vmem:[#allocation6 + $0x168] sm:$0xff]
        %v1234 = vld [vmem:[#allocation6 + $0x170] sm:$0xff]
        %v1235 = vld [vmem:[#allocation6 + $0x178] sm:$0xff]
        %v1236 = vld [vmem:[#allocation6 + $0x180] sm:$0xff]
        %v1237 = vld [vmem:[#allocation6 + $0x188] sm:$0xff]
        %v1238 = vld [vmem:[#allocation6 + $0x190] sm:$0xff]
        %v1239 = vld [vmem:[#allocation6 + $0x198] sm:$0xff]
        %v1240 = vld [vmem:[#allocation6 + $0x1a0] sm:$0xff]
        %v1241 = vld [vmem:[#allocation6 + $0x1a8] sm:$0xff]
        %v1242 = vld [vmem:[#allocation6 + $0x1b0] sm:$0xff]
        %v1243 = vld [vmem:[#allocation6 + $0x1b8] sm:$0xff]
        %v1244 = vld [vmem:[#allocation6 + $0x1c0] sm:$0xff]
        %v1245 = vld [vmem:[#allocation6 + $0x1c8] sm:$0xff]
        %v1246 = vld [vmem:[#allocation6 + $0x1d0] sm:$0xff]
        %v1247 = vld [vmem:[#allocation6 + $0x1d8] sm:$0xff]
        %v1248 = vlaneseq
        %v1249 = vshrl.u32 %v1248, 7
        %v1250 = vsub.s32 0, %v1249
        %v1251 = vrot.slane %v939, %v1250
        %v1252 = vmul.f32 %v719, %v1251
        %v1253 = vmul.f32 %v720, %v1251
        %v1254 = vmul.f32 %v721, %v1251
        %v1255 = vmul.f32 %v722, %v1251
        %1256 = vmatprep.subr.mxu0 0.0
        %1257 = vmatpush1.msra.mxu0 %v1232
        %1258 = vmatprep.subr.mxu0 0.0
        %1259 = vmatpush1.msra.mxu0 %v1233
        %1260 = vmatprep.subr.mxu0 0.0
        %1261 = vmatpush1.msra.mxu0 %v1234
        %1262 = vmatprep.subr.mxu0 0.0
        %1263 = vmatpush1.msra.mxu0 %v1235
        %1264 = vmatprep.subr.mxu0 0.0
        %1265 = vmatpush1.msra.mxu0 %v1236
        %1266 = vmatprep.subr.mxu0 0.0
        %1267 = vmatpush1.msra.mxu0 %v1237
        %1268 = vmatprep.subr.mxu0 0.0
        %1269 = vmatpush1.msra.mxu0 %v1238
        %1270 = vmatprep.subr.mxu0 0.0
        %1271 = vmatpush1.msra.mxu0 %v1239
        %1272 = vmatprep.subr.mxu0 0.0
        %1273 = vmatpush1.msra.mxu0 %v1240
        %1274 = vmatprep.subr.mxu0 0.0
        %1275 = vmatpush1.msra.mxu0 %v1241
        %1276 = vmatprep.subr.mxu0 0.0
        %1277 = vmatpush1.msra.mxu0 %v1242
        %1278 = vmatprep.subr.mxu0 0.0
        %1279 = vmatpush1.msra.mxu0 %v1243
        %1280 = vmatprep.subr.mxu0 0.0
        %1281 = vmatpush1.msra.mxu0 %v1244
        %1282 = vmatprep.subr.mxu0 0.0
        %1283 = vmatpush1.msra.mxu0 %v1245
        %1284 = vmatprep.subr.mxu0 0.0
        %1285 = vmatpush1.msra.mxu0 %v1246
        %1286 = vmatprep.subr.mxu0 0.0
        %1287 = vmatpush1.msra.mxu0 %v1247
        %1288 = vmatprep.subr.mxu0 0.0
        %1289 = vmatpush1.msra.mxu0 0.0
        %1290 = vmatprep.subr.mxu0 0.0
        %1291 = vmatpush1.msra.mxu0 0.0
        %1292 = vmatprep.subr.mxu0 0.0
        %1293 = vmatpush1.msra.mxu0 0.0
        %1294 = vmatprep.subr.mxu0 0.0
        %1295 = vmatpush1.msra.mxu0 0.0
        %1296 = vmatprep.subr.mxu0 0.0
        %1297 = vmatpush1.msra.mxu0 0.0
        %1298 = vmatprep.subr.mxu0 0.0
        %1299 = vmatpush1.msra.mxu0 0.0
        %1300 = vmatprep.subr.mxu0 0.0
        %1301 = vmatpush1.msra.mxu0 0.0
        %1302 = vmatprep.subr.mxu0 0.0
        %1303 = vmatpush1.msra.mxu0 0.0
        %1304 = vmatprep.subr.mxu0 0.0
        %1305 = vmatpush1.msra.mxu0 0.0
        %1306 = vmatprep.subr.mxu0 0.0
        %1307 = vmatpush1.msra.mxu0 0.0
        %1308 = vmatprep.subr.mxu0 0.0
        %1309 = vmatpush1.msra.mxu0 0.0
        %1310 = vmatprep.subr.mxu0 0.0
        %1311 = vmatpush1.msra.mxu0 0.0
        %1312 = vmatprep.subr.mxu0 0.0
        %1313 = vmatpush1.msra.mxu0 0.0
        %1314 = vmatprep.subr.mxu0 0.0
        %1315 = vmatpush1.msra.mxu0 0.0
        %1316 = vmatprep.subr.mxu0 0.0
        %1317 = vmatpush1.msra.mxu0 0.0
        %1318 = vmatprep.subr.mxu0 0.0
        %1319 = vmatpush1.msra.mxu0 0.0
        %1320 = vmatprep.mubr.f32.mxu0 0.0
        %1321 = vmatmul.mubr.f32.gmra.mrb[0].mxu0 %v1252
        %v1322 = vpop.f32.mrb[0].mxu0
        %v1323 = vadd.f32 0.0, %v1322
        %v1324 = vpop.f32.mrb[0].mxu0
        %1325 = vmatprep.mubr.f32.mxu0 0.0
        %1326 = vmatmul.mubr.f32.gmra.mrb[0].mxu0 %v1253
        %v1327 = vpop.f32.mrb[0].mxu0
        %v1328 = vadd.f32 0.0, %v1327
        %v1329 = vpop.f32.mrb[0].mxu0
        %1330 = vmatprep.mubr.f32.mxu0 0.0
        %1331 = vmatmul.mubr.f32.gmra.mrb[0].mxu0 %v1254
        %v1332 = vpop.f32.mrb[0].mxu0
        %v1333 = vadd.f32 0.0, %v1332
        %v1334 = vpop.f32.mrb[0].mxu0
        %1335 = vmatprep.mubr.f32.mxu0 0.0
        %1336 = vmatmul.mubr.f32.gmra.mrb[0].mxu0 %v1255
        %v1337 = vpop.f32.mrb[0].mxu0
        %v1338 = vadd.f32 0.0, %v1337
        %v1339 = vpop.f32.mrb[0].mxu0
        %1340 = vdwg.mxu0
        %v1341 = vadd.f32 %v1214, %v1323
        %v1342 = vadd.f32 %v1219, %v1328
        %v1343 = vadd.f32 %v1224, %v1333
        %v1344 = vadd.f32 %v1229, %v1338
        %v1345 = vld [vmem:[#allocation6 + $0x1e0] sm:$0xff]
        %v1346 = vld [vmem:[#allocation6 + $0x1e8] sm:$0xff]
        %v1347 = vld [vmem:[#allocation6 + $0x1f0] sm:$0xff]
        %v1348 = vld [vmem:[#allocation6 + $0x1f8] sm:$0xff]
        %v1349 = vld [vmem:[#allocation6 + $0x200] sm:$0xff]
        %v1350 = vld [vmem:[#allocation6 + $0x208] sm:$0xff]
        %v1351 = vld [vmem:[#allocation6 + $0x210] sm:$0xff]
        %v1352 = vld [vmem:[#allocation6 + $0x218] sm:$0xff]
        %v1353 = vld [vmem:[#allocation6 + $0x220] sm:$0xff]
        %v1354 = vld [vmem:[#allocation6 + $0x228] sm:$0xff]
        %v1355 = vld [vmem:[#allocation6 + $0x230] sm:$0xff]
        %v1356 = vld [vmem:[#allocation6 + $0x238] sm:$0xff]
        %v1357 = vld [vmem:[#allocation6 + $0x240] sm:$0xff]
        %v1358 = vld [vmem:[#allocation6 + $0x248] sm:$0xff]
        %v1359 = vld [vmem:[#allocation6 + $0x250] sm:$0xff]
        %v1360 = vld [vmem:[#allocation6 + $0x258] sm:$0xff]
        %v1361 = vlaneseq
        %v1362 = vshrl.u32 %v1361, 7
        %v1363 = vsub.s32 0, %v1362
        %v1364 = vrot.slane %v1011, %v1363
        %v1365 = vmul.f32 %v719, %v1364
        %v1366 = vmul.f32 %v720, %v1364
        %v1367 = vmul.f32 %v721, %v1364
        %v1368 = vmul.f32 %v722, %v1364
        %1369 = vmatprep.subr.mxu0 0.0
        %1370 = vmatpush1.msra.mxu0 %v1345
        %1371 = vmatprep.subr.mxu0 0.0
        %1372 = vmatpush1.msra.mxu0 %v1346
        %1373 = vmatprep.subr.mxu0 0.0
        %1374 = vmatpush1.msra.mxu0 %v1347
        %1375 = vmatprep.subr.mxu0 0.0
        %1376 = vmatpush1.msra.mxu0 %v1348
        %1377 = vmatprep.subr.mxu0 0.0
        %1378 = vmatpush1.msra.mxu0 %v1349
        %1379 = vmatprep.subr.mxu0 0.0
        %1380 = vmatpush1.msra.mxu0 %v1350
        %1381 = vmatprep.subr.mxu0 0.0
        %1382 = vmatpush1.msra.mxu0 %v1351
        %1383 = vmatprep.subr.mxu0 0.0
        %1384 = vmatpush1.msra.mxu0 %v1352
        %1385 = vmatprep.subr.mxu0 0.0
        %1386 = vmatpush1.msra.mxu0 %v1353
        %1387 = vmatprep.subr.mxu0 0.0
        %1388 = vmatpush1.msra.mxu0 %v1354
        %1389 = vmatprep.subr.mxu0 0.0
        %1390 = vmatpush1.msra.mxu0 %v1355
        %1391 = vmatprep.subr.mxu0 0.0
        %1392 = vmatpush1.msra.mxu0 %v1356
        %1393 = vmatprep.subr.mxu0 0.0
        %1394 = vmatpush1.msra.mxu0 %v1357
        %1395 = vmatprep.subr.mxu0 0.0
        %1396 = vmatpush1.msra.mxu0 %v1358
        %1397 = vmatprep.subr.mxu0 0.0
        %1398 = vmatpush1.msra.mxu0 %v1359
        %1399 = vmatprep.subr.mxu0 0.0
        %1400 = vmatpush1.msra.mxu0 %v1360
        %1401 = vmatprep.subr.mxu0 0.0
        %1402 = vmatpush1.msra.mxu0 0.0
        %1403 = vmatprep.subr.mxu0 0.0
        %1404 = vmatpush1.msra.mxu0 0.0
        %1405 = vmatprep.subr.mxu0 0.0
        %1406 = vmatpush1.msra.mxu0 0.0
        %1407 = vmatprep.subr.mxu0 0.0
        %1408 = vmatpush1.msra.mxu0 0.0
        %1409 = vmatprep.subr.mxu0 0.0
        %1410 = vmatpush1.msra.mxu0 0.0
        %1411 = vmatprep.subr.mxu0 0.0
        %1412 = vmatpush1.msra.mxu0 0.0
        %1413 = vmatprep.subr.mxu0 0.0
        %1414 = vmatpush1.msra.mxu0 0.0
        %1415 = vmatprep.subr.mxu0 0.0
        %1416 = vmatpush1.msra.mxu0 0.0
        %1417 = vmatprep.subr.mxu0 0.0
        %1418 = vmatpush1.msra.mxu0 0.0
        %1419 = vmatprep.subr.mxu0 0.0
        %1420 = vmatpush1.msra.mxu0 0.0
        %1421 = vmatprep.subr.mxu0 0.0
        %1422 = vmatpush1.msra.mxu0 0.0
        %1423 = vmatprep.subr.mxu0 0.0
        %1424 = vmatpush1.msra.mxu0 0.0
        %1425 = vmatprep.subr.mxu0 0.0
        %1426 = vmatpush1.msra.mxu0 0.0
        %1427 = vmatprep.subr.mxu0 0.0
        %1428 = vmatpush1.msra.mxu0 0.0
        %1429 = vmatprep.subr.mxu0 0.0
        %1430 = vmatpush1.msra.mxu0 0.0
        %1431 = vmatprep.subr.mxu0 0.0
        %1432 = vmatpush1.msra.mxu0 0.0
        %1433 = vmatprep.mubr.f32.mxu0 0.0
        %1434 = vmatmul.mubr.f32.gmra.mrb[0].mxu0 %v1365
        %v1435 = vpop.f32.mrb[0].mxu0
        %v1436 = vadd.f32 0.0, %v1435
        %v1437 = vpop.f32.mrb[0].mxu0
        %1438 = vmatprep.mubr.f32.mxu0 0.0
        %1439 = vmatmul.mubr.f32.gmra.mrb[0].mxu0 %v1366
        %v1440 = vpop.f32.mrb[0].mxu0
        %v1441 = vadd.f32 0.0, %v1440
        %v1442 = vpop.f32.mrb[0].mxu0
        %1443 = vmatprep.mubr.f32.mxu0 0.0
        %1444 = vmatmul.mubr.f32.gmra.mrb[0].mxu0 %v1367
        %v1445 = vpop.f32.mrb[0].mxu0
        %v1446 = vadd.f32 0.0, %v1445
        %v1447 = vpop.f32.mrb[0].mxu0
        %1448 = vmatprep.mubr.f32.mxu0 0.0
        %1449 = vmatmul.mubr.f32.gmra.mrb[0].mxu0 %v1368
        %v1450 = vpop.f32.mrb[0].mxu0
        %v1451 = vadd.f32 0.0, %v1450
        %v1452 = vpop.f32.mrb[0].mxu0
        %1453 = vdwg.mxu0
        %v1454 = vadd.f32 %v1341, %v1436
        %v1455 = vadd.f32 %v1342, %v1441
        %v1456 = vadd.f32 %v1343, %v1446
        %v1457 = vadd.f32 %v1344, %v1451
        %v1459 = vsel %vm301, %v274, 0
        %1461 = vmatprep.subr.mxu0 0.0
        %1462 = vmatpush1.msra.mxu0 %v1454
        %1463 = vmatprep.subr.mxu0 0.0
        %1464 = vmatpush1.msra.mxu0 %v1455
        %1465 = vmatprep.subr.mxu0 0.0
        %1466 = vmatpush1.msra.mxu0 %v1456
        %1467 = vmatprep.subr.mxu0 0.0
        %1468 = vmatpush1.msra.mxu0 %v1457
        %1469 = vmatprep.subr.mxu0 0.0
        %1470 = vmatpush1.msra.mxu0 0.0
        %1471 = vmatprep.subr.mxu0 0.0
        %1472 = vmatpush1.msra.mxu0 0.0
        %1473 = vmatprep.subr.mxu0 0.0
        %1474 = vmatpush1.msra.mxu0 0.0
        %1475 = vmatprep.subr.mxu0 0.0
        %1476 = vmatpush1.msra.mxu0 0.0
        %1477 = vmatprep.subr.mxu0 0.0
        %1478 = vmatpush1.msra.mxu0 0.0
        %1479 = vmatprep.subr.mxu0 0.0
        %1480 = vmatpush1.msra.mxu0 0.0
        %1481 = vmatprep.subr.mxu0 0.0
        %1482 = vmatpush1.msra.mxu0 0.0
        %1483 = vmatprep.subr.mxu0 0.0
        %1484 = vmatpush1.msra.mxu0 0.0
        %1485 = vmatprep.subr.mxu0 0.0
        %1486 = vmatpush1.msra.mxu0 0.0
        %1487 = vmatprep.subr.mxu0 0.0
        %1488 = vmatpush1.msra.mxu0 0.0
        %1489 = vmatprep.subr.mxu0 0.0
        %1490 = vmatpush1.msra.mxu0 0.0
        %1491 = vmatprep.subr.mxu0 0.0
        %1492 = vmatpush1.msra.mxu0 0.0
        %1493 = vmatprep.subr.mxu0 0.0
        %1494 = vmatpush1.msra.mxu0 0.0
        %1495 = vmatprep.subr.mxu0 0.0
        %1496 = vmatpush1.msra.mxu0 0.0
        %1497 = vmatprep.subr.mxu0 0.0
        %1498 = vmatpush1.msra.mxu0 0.0
        %1499 = vmatprep.subr.mxu0 0.0
        %1500 = vmatpush1.msra.mxu0 0.0
        %1501 = vmatprep.subr.mxu0 0.0
        %1502 = vmatpush1.msra.mxu0 0.0
        %1503 = vmatprep.subr.mxu0 0.0
        %1504 = vmatpush1.msra.mxu0 0.0
        %1505 = vmatprep.subr.mxu0 0.0
        %1506 = vmatpush1.msra.mxu0 0.0
        %1507 = vmatprep.subr.mxu0 0.0
        %1508 = vmatpush1.msra.mxu0 0.0
        %1509 = vmatprep.subr.mxu0 0.0
        %1510 = vmatpush1.msra.mxu0 0.0
        %1511 = vmatprep.subr.mxu0 0.0
        %1512 = vmatpush1.msra.mxu0 0.0
        %1513 = vmatprep.subr.mxu0 0.0
        %1514 = vmatpush1.msra.mxu0 0.0
        %1515 = vmatprep.subr.mxu0 0.0
        %1516 = vmatpush1.msra.mxu0 0.0
        %1517 = vmatprep.subr.mxu0 0.0
        %1518 = vmatpush1.msra.mxu0 0.0
        %1519 = vmatprep.subr.mxu0 0.0
        %1520 = vmatpush1.msra.mxu0 0.0
        %1521 = vmatprep.subr.mxu0 0.0
        %1522 = vmatpush1.msra.mxu0 0.0
        %1523 = vmatprep.subr.mxu0 0.0
        %1524 = vmatpush1.msra.mxu0 0.0
        %1525 = vmatprep.mubr.f32.mxu0 0.0
        %1526 = vmatmul.mubr.f32.gmra.mrb[0].mxu0 %v1459
        %v1527 = vpop.f32.mrb[0].mxu0
        %v1528 = vadd.f32 0.0, %v1527
        %v1529 = vpop.f32.mrb[0].mxu0
        %1530 = vdwg.mxu0
        %1531 = vmatprep.subr.mxu0 0.0
        %1532 = vmatpush1.msra.mxu0 %v281
        %1533 = vmatprep.subr.mxu0 0.0
        %1534 = vmatpush1.msra.mxu0 %v282
        %1535 = vmatprep.subr.mxu0 0.0
        %1536 = vmatpush1.msra.mxu0 %v283
        %1537 = vmatprep.subr.mxu0 0.0
        %1538 = vmatpush1.msra.mxu0 %v284
        %1539 = vmatprep.subr.mxu0 0.0
        %1540 = vmatpush1.msra.mxu0 %v285
        %1541 = vmatprep.subr.mxu0 0.0
        %1542 = vmatpush1.msra.mxu0 %v286
        %1543 = vmatprep.subr.mxu0 0.0
        %1544 = vmatpush1.msra.mxu0 %v287
        %1545 = vmatprep.subr.mxu0 0.0
        %1546 = vmatpush1.msra.mxu0 %v288
        %1547 = vmatprep.subr.mxu0 0.0
        %1548 = vmatpush1.msra.mxu0 %v289
        %1549 = vmatprep.subr.mxu0 0.0
        %1550 = vmatpush1.msra.mxu0 %v290
        %1551 = vmatprep.subr.mxu0 0.0
        %1552 = vmatpush1.msra.mxu0 %v291
        %1553 = vmatprep.subr.mxu0 0.0
        %1554 = vmatpush1.msra.mxu0 %v292
        %1555 = vmatprep.subr.mxu0 0.0
        %1556 = vmatpush1.msra.mxu0 %v293
        %1557 = vmatprep.subr.mxu0 0.0
        %1558 = vmatpush1.msra.mxu0 %v294
        %1559 = vmatprep.subr.mxu0 0.0
        %1560 = vmatpush1.msra.mxu0 %v295
        %1561 = vmatprep.subr.mxu0 0.0
        %1562 = vmatpush1.msra.mxu0 %v296
        %1563 = vmatprep.subr.mxu0 0.0
        %1564 = vmatpush1.msra.mxu0 0.0
        %1565 = vmatprep.subr.mxu0 0.0
        %1566 = vmatpush1.msra.mxu0 0.0
        %1567 = vmatprep.subr.mxu0 0.0
        %1568 = vmatpush1.msra.mxu0 0.0
        %1569 = vmatprep.subr.mxu0 0.0
        %1570 = vmatpush1.msra.mxu0 0.0
        %1571 = vmatprep.subr.mxu0 0.0
        %1572 = vmatpush1.msra.mxu0 0.0
        %1573 = vmatprep.subr.mxu0 0.0
        %1574 = vmatpush1.msra.mxu0 0.0
        %1575 = vmatprep.subr.mxu0 0.0
        %1576 = vmatpush1.msra.mxu0 0.0
        %1577 = vmatprep.subr.mxu0 0.0
        %1578 = vmatpush1.msra.mxu0 0.0
        %1579 = vmatprep.subr.mxu0 0.0
        %1580 = vmatpush1.msra.mxu0 0.0
        %1581 = vmatprep.subr.mxu0 0.0
        %1582 = vmatpush1.msra.mxu0 0.0
        %1583 = vmatprep.subr.mxu0 0.0
        %1584 = vmatpush1.msra.mxu0 0.0
        %1585 = vmatprep.subr.mxu0 0.0
        %1586 = vmatpush1.msra.mxu0 0.0
        %1587 = vmatprep.subr.mxu0 0.0
        %1588 = vmatpush1.msra.mxu0 0.0
        %1589 = vmatprep.subr.mxu0 0.0
        %1590 = vmatpush1.msra.mxu0 0.0
        %1591 = vmatprep.subr.mxu0 0.0
        %1592 = vmatpush1.msra.mxu0 0.0
        %1593 = vmatprep.subr.mxu0 0.0
        %1594 = vmatpush1.msra.mxu0 0.0
        %1595 = vmatprep.mubr.f32.mxu0 0.0
        %1596 = vmatmul.mubr.f32.gmra.mrb[0].mxu0 %v1528
        %v1597 = vpop.f32.mrb[0].mxu0
        %v1598 = vadd.f32 0.0, %v1597
        %v1599 = vpop.f32.mrb[0].mxu0
        %1600 = vdwg.mxu0
        %v1601 = vmul.f32 %v1598, 0.25
        %v1602 = vlaneseq
        %v1603 = vshrl.u32 %v1602, 7
        %v1604 = vsub.s32 0, %v1603
        %v1605 = vrot.slane %v379, %v1604
        %1610 = vrot.lane.b32.xlu0 %v375, 112
        %v1611 = vpop.permute.xlu0 %1610
        %1612 = vrot.lane.b32.xlu0 %v376, 112
        %v1613 = vpop.permute.xlu0 %1612
        %1614 = vrot.lane.b32.xlu0 %v377, 112
        %v1615 = vpop.permute.xlu0 %1614
        %1616 = vrot.lane.b32.xlu0 %v378, 112
        %v1617 = vpop.permute.xlu0 %1616
        %1623 = vrot.lane.b32.xlu0 %v1605, 112
        %v1624 = vpop.permute.xlu0 %1623
        %v1627 = vsel %vm301, %v1601, 0
        %1629 = vmatprep.subr.mxu0 0.0
        %1630 = vmatpush1.msra.mxu0 %v1611
        %1631 = vmatprep.subr.mxu0 0.0
        %1632 = vmatpush1.msra.mxu0 %v1613
        %1633 = vmatprep.subr.mxu0 0.0
        %1634 = vmatpush1.msra.mxu0 %v1615
        %1635 = vmatprep.subr.mxu0 0.0
        %1636 = vmatpush1.msra.mxu0 %v1617
        %1637 = vmatprep.subr.mxu0 0.0
        %1638 = vmatpush1.msra.mxu0 0.0
        %1639 = vmatprep.subr.mxu0 0.0
        %1640 = vmatpush1.msra.mxu0 0.0
        %1641 = vmatprep.subr.mxu0 0.0
        %1642 = vmatpush1.msra.mxu0 0.0
        %1643 = vmatprep.subr.mxu0 0.0
        %1644 = vmatpush1.msra.mxu0 0.0
        %1645 = vmatprep.subr.mxu0 0.0
        %1646 = vmatpush1.msra.mxu0 0.0
        %1647 = vmatprep.subr.mxu0 0.0
        %1648 = vmatpush1.msra.mxu0 0.0
        %1649 = vmatprep.subr.mxu0 0.0
        %1650 = vmatpush1.msra.mxu0 0.0
        %1651 = vmatprep.subr.mxu0 0.0
        %1652 = vmatpush1.msra.mxu0 0.0
        %1653 = vmatprep.subr.mxu0 0.0
        %1654 = vmatpush1.msra.mxu0 0.0
        %1655 = vmatprep.subr.mxu0 0.0
        %1656 = vmatpush1.msra.mxu0 0.0
        %1657 = vmatprep.subr.mxu0 0.0
        %1658 = vmatpush1.msra.mxu0 0.0
        %1659 = vmatprep.subr.mxu0 0.0
        %1660 = vmatpush1.msra.mxu0 0.0
        %1661 = vmatprep.subr.mxu0 0.0
        %1662 = vmatpush1.msra.mxu0 0.0
        %1663 = vmatprep.subr.mxu0 0.0
        %1664 = vmatpush1.msra.mxu0 0.0
        %1665 = vmatprep.subr.mxu0 0.0
        %1666 = vmatpush1.msra.mxu0 0.0
        %1667 = vmatprep.subr.mxu0 0.0
        %1668 = vmatpush1.msra.mxu0 0.0
        %1669 = vmatprep.subr.mxu0 0.0
        %1670 = vmatpush1.msra.mxu0 0.0
        %1671 = vmatprep.subr.mxu0 0.0
        %1672 = vmatpush1.msra.mxu0 0.0
        %1673 = vmatprep.subr.mxu0 0.0
        %1674 = vmatpush1.msra.mxu0 0.0
        %1675 = vmatprep.subr.mxu0 0.0
        %1676 = vmatpush1.msra.mxu0 0.0
        %1677 = vmatprep.subr.mxu0 0.0
        %1678 = vmatpush1.msra.mxu0 0.0
        %1679 = vmatprep.subr.mxu0 0.0
        %1680 = vmatpush1.msra.mxu0 0.0
        %1681 = vmatprep.subr.mxu0 0.0
        %1682 = vmatpush1.msra.mxu0 0.0
        %1683 = vmatprep.subr.mxu0 0.0
        %1684 = vmatpush1.msra.mxu0 0.0
        %1685 = vmatprep.subr.mxu0 0.0
        %1686 = vmatpush1.msra.mxu0 0.0
        %1687 = vmatprep.subr.mxu0 0.0
        %1688 = vmatpush1.msra.mxu0 0.0
        %1689 = vmatprep.subr.mxu0 0.0
        %1690 = vmatpush1.msra.mxu0 0.0
        %1691 = vmatprep.subr.mxu0 0.0
        %1692 = vmatpush1.msra.mxu0 0.0
        %1693 = vmatprep.mubr.f32.mxu0 0.0
        %1694 = vmatmul.mubr.f32.gmra.mrb[0].mxu0 %v1627
        %v1695 = vpop.f32.mrb[0].mxu0
        %v1696 = vadd.f32 %v1624, %v1695
        %v1697 = vpop.f32.mrb[0].mxu0
        %1698 = vdwg.mxu0
        %v1699 = vmax.f32 %v1696, 0.0
        %v1700 = vlaneseq
        %v1701 = vshrl.u32 %v1700, 7
        %v1702 = vsub.s32 0, %v1701
        %v1703 = vrot.slane %v382, %v1702
        %1706 = vrot.lane.b32.xlu0 %v380, 112
        %v1707 = vpop.permute.xlu0 %1706
        %1708 = vrot.lane.b32.xlu0 %v381, 112
        %v1709 = vpop.permute.xlu0 %1708
        %1713 = vrot.lane.b32.xlu0 %v1703, 112
        %v1714 = vpop.permute.xlu0 %1713
        %v1717 = vsel %vm457, %v1699, 0
        %1719 = vmatprep.subr.mxu0 0.0
        %1720 = vmatpush1.msra.mxu0 %v1707
        %1721 = vmatprep.subr.mxu0 0.0
        %1722 = vmatpush1.msra.mxu0 %v1709
        %1723 = vmatprep.subr.mxu0 0.0
        %1724 = vmatpush1.msra.mxu0 0.0
        %1725 = vmatprep.subr.mxu0 0.0
        %1726 = vmatpush1.msra.mxu0 0.0
        %1727 = vmatprep.subr.mxu0 0.0
        %1728 = vmatpush1.msra.mxu0 0.0
        %1729 = vmatprep.subr.mxu0 0.0
        %1730 = vmatpush1.msra.mxu0 0.0
        %1731 = vmatprep.subr.mxu0 0.0
        %1732 = vmatpush1.msra.mxu0 0.0
        %1733 = vmatprep.subr.mxu0 0.0
        %1734 = vmatpush1.msra.mxu0 0.0
        %1735 = vmatprep.subr.mxu0 0.0
        %1736 = vmatpush1.msra.mxu0 0.0
        %1737 = vmatprep.subr.mxu0 0.0
        %1738 = vmatpush1.msra.mxu0 0.0
        %1739 = vmatprep.subr.mxu0 0.0
        %1740 = vmatpush1.msra.mxu0 0.0
        %1741 = vmatprep.subr.mxu0 0.0
        %1742 = vmatpush1.msra.mxu0 0.0
        %1743 = vmatprep.subr.mxu0 0.0
        %1744 = vmatpush1.msra.mxu0 0.0
        %1745 = vmatprep.subr.mxu0 0.0
        %1746 = vmatpush1.msra.mxu0 0.0
        %1747 = vmatprep.subr.mxu0 0.0
        %1748 = vmatpush1.msra.mxu0 0.0
        %1749 = vmatprep.subr.mxu0 0.0
        %1750 = vmatpush1.msra.mxu0 0.0
        %1751 = vmatprep.subr.mxu0 0.0
        %1752 = vmatpush1.msra.mxu0 0.0
        %1753 = vmatprep.subr.mxu0 0.0
        %1754 = vmatpush1.msra.mxu0 0.0
        %1755 = vmatprep.subr.mxu0 0.0
        %1756 = vmatpush1.msra.mxu0 0.0
        %1757 = vmatprep.subr.mxu0 0.0
        %1758 = vmatpush1.msra.mxu0 0.0
        %1759 = vmatprep.subr.mxu0 0.0
        %1760 = vmatpush1.msra.mxu0 0.0
        %1761 = vmatprep.subr.mxu0 0.0
        %1762 = vmatpush1.msra.mxu0 0.0
        %1763 = vmatprep.subr.mxu0 0.0
        %1764 = vmatpush1.msra.mxu0 0.0
        %1765 = vmatprep.subr.mxu0 0.0
        %1766 = vmatpush1.msra.mxu0 0.0
        %1767 = vmatprep.subr.mxu0 0.0
        %1768 = vmatpush1.msra.mxu0 0.0
        %1769 = vmatprep.subr.mxu0 0.0
        %1770 = vmatpush1.msra.mxu0 0.0
        %1771 = vmatprep.subr.mxu0 0.0
        %1772 = vmatpush1.msra.mxu0 0.0
        %1773 = vmatprep.subr.mxu0 0.0
        %1774 = vmatpush1.msra.mxu0 0.0
        %1775 = vmatprep.subr.mxu0 0.0
        %1776 = vmatpush1.msra.mxu0 0.0
        %1777 = vmatprep.subr.mxu0 0.0
        %1778 = vmatpush1.msra.mxu0 0.0
        %1779 = vmatprep.subr.mxu0 0.0
        %1780 = vmatpush1.msra.mxu0 0.0
        %1781 = vmatprep.subr.mxu0 0.0
        %1782 = vmatpush1.msra.mxu0 0.0
        %1783 = vmatprep.mubr.f32.mxu0 0.0
        %1784 = vmatmul.mubr.f32.gmra.mrb[0].mxu0 %v1717
        %v1785 = vpop.f32.mrb[0].mxu0
        %v1786 = vadd.f32 %v1714, %v1785
        %v1787 = vpop.f32.mrb[0].mxu0
        %1788 = vdwg.mxu0
        %vm1789 = vcmask 125952
        %v1790 = vsel %vm1789, %v1786, -inf
        %1791 = vmax.xlane.f32.xlu0 %v1790
        %v1792 = vpop.xlane.xlu0 %1791
        %v1793 = vsub.f32 %v1786, %v1792
        %v1794 = vmul.f32 %v1793, 1.442695
        %v1795 = vpow.pop %v1794
        %v1797 = vsel %vm457, %v1795, 0
        %1799 = vmatprep.subr.mxu0 0.0
        %1800 = vmatpush1.msra.mxu0 %v279
        %1801 = vmatprep.subr.mxu0 0.0
        %1802 = vmatpush1.msra.mxu0 %v280
        %1803 = vmatprep.subr.mxu0 0.0
        %1804 = vmatpush1.msra.mxu0 0.0
        %1805 = vmatprep.subr.mxu0 0.0
        %1806 = vmatpush1.msra.mxu0 0.0
        %1807 = vmatprep.subr.mxu0 0.0
        %1808 = vmatpush1.msra.mxu0 0.0
        %1809 = vmatprep.subr.mxu0 0.0
        %1810 = vmatpush1.msra.mxu0 0.0
        %1811 = vmatprep.subr.mxu0 0.0
        %1812 = vmatpush1.msra.mxu0 0.0
        %1813 = vmatprep.subr.mxu0 0.0
        %1814 = vmatpush1.msra.mxu0 0.0
        %1815 = vmatprep.subr.mxu0 0.0
        %1816 = vmatpush1.msra.mxu0 0.0
        %1817 = vmatprep.subr.mxu0 0.0
        %1818 = vmatpush1.msra.mxu0 0.0
        %1819 = vmatprep.subr.mxu0 0.0
        %1820 = vmatpush1.msra.mxu0 0.0
        %1821 = vmatprep.subr.mxu0 0.0
        %1822 = vmatpush1.msra.mxu0 0.0
        %1823 = vmatprep.subr.mxu0 0.0
        %1824 = vmatpush1.msra.mxu0 0.0
        %1825 = vmatprep.subr.mxu0 0.0
        %1826 = vmatpush1.msra.mxu0 0.0
        %1827 = vmatprep.subr.mxu0 0.0
        %1828 = vmatpush1.msra.mxu0 0.0
        %1829 = vmatprep.subr.mxu0 0.0
        %1830 = vmatpush1.msra.mxu0 0.0
        %1831 = vmatprep.subr.mxu0 0.0
        %1832 = vmatpush1.msra.mxu0 0.0
        %1833 = vmatprep.subr.mxu0 0.0
        %1834 = vmatpush1.msra.mxu0 0.0
        %1835 = vmatprep.subr.mxu0 0.0
        %1836 = vmatpush1.msra.mxu0 0.0
        %1837 = vmatprep.subr.mxu0 0.0
        %1838 = vmatpush1.msra.mxu0 0.0
        %1839 = vmatprep.subr.mxu0 0.0
        %1840 = vmatpush1.msra.mxu0 0.0
        %1841 = vmatprep.subr.mxu0 0.0
        %1842 = vmatpush1.msra.mxu0 0.0
        %1843 = vmatprep.subr.mxu0 0.0
        %1844 = vmatpush1.msra.mxu0 0.0
        %1845 = vmatprep.subr.mxu0 0.0
        %1846 = vmatpush1.msra.mxu0 0.0
        %1847 = vmatprep.subr.mxu0 0.0
        %1848 = vmatpush1.msra.mxu0 0.0
        %1849 = vmatprep.subr.mxu0 0.0
        %1850 = vmatpush1.msra.mxu0 0.0
        %1851 = vmatprep.subr.mxu0 0.0
        %1852 = vmatpush1.msra.mxu0 0.0
        %1853 = vmatprep.subr.mxu0 0.0
        %1854 = vmatpush1.msra.mxu0 0.0
        %1855 = vmatprep.subr.mxu0 0.0
        %1856 = vmatpush1.msra.mxu0 0.0
        %1857 = vmatprep.subr.mxu0 0.0
        %1858 = vmatpush1.msra.mxu0 0.0
        %1859 = vmatprep.subr.mxu0 0.0
        %1860 = vmatpush1.msra.mxu0 0.0
        %1861 = vmatprep.subr.mxu0 0.0
        %1862 = vmatpush1.msra.mxu0 0.0
        %1863 = vmatprep.mubr.f32.mxu0 0.0
        %1864 = vmatmul.mubr.f32.gmra.mrb[0].mxu0 %v1797
        %v1865 = vpop.f32.mrb[0].mxu0
        %v1866 = vadd.f32 0.0, %v1865
        %v1867 = vpop.f32.mrb[0].mxu0
        %1868 = vdwg.mxu0
        %v1869 = vrcp.pop %v1866
        %v1870 = vmul.f32 %v1795, %v1869
        %v1871 = vld [vmem:[#allocation4 + $0x20] sm:$0xff]
        %v1872 = vld [vmem:[#allocation4 + $0x28] sm:$0xff]
        %v1873 = vld [vmem:[#allocation4 + $0x30] sm:$0xff]
        %v1874 = vld [vmem:[#allocation4 + $0x38] sm:$0xff]
        %v1875 = vld [vmem:[#allocation4 + $0x40] sm:$0xff]
        %v1876 = vld [vmem:[#allocation4 + $0x48] sm:$0xff]
        %v1877 = vld [vmem:[#allocation4 + $0x50] sm:$0xff]
        %v1878 = vld [vmem:[#allocation4 + $0x58] sm:$0xff]
        %v1879 = vld [vmem:[#allocation4 + $0x60] sm:$0xff]
        %v1880 = vld [vmem:[#allocation4 + $0x68] sm:$0xff]
        %v1881 = vld [vmem:[#allocation4 + $0x70] sm:$0xff]
        %v1882 = vld [vmem:[#allocation4 + $0x78] sm:$0xff]
        %v1883 = vld [vmem:[#allocation4 + $0x80] sm:$0xff]
        %v1884 = vld [vmem:[#allocation4 + $0x88] sm:$0xff]
        %v1885 = vld [vmem:[#allocation4 + $0x90] sm:$0xff]
        %v1886 = vld [vmem:[#allocation4 + $0x98] sm:$0xff]
        %v1887 = vld [vmem:[%s3 + $0x33] sm:$0x1]
        %v1888 = vlaneseq
        %v1889 = vshrl.u32 %v1888, 7
        %v1890 = vsub.s32 0, %v1889
        %v1891 = vrot.slane %v1887, %v1890
        %1892 = vmatprep.subr.mxu0 0.0
        %1893 = vmatpush1.msra.mxu0 %v1871
        %1894 = vmatprep.subr.mxu0 0.0
        %1895 = vmatpush1.msra.mxu0 %v1872
        %1896 = vmatprep.subr.mxu0 0.0
        %1897 = vmatpush1.msra.mxu0 %v1873
        %1898 = vmatprep.subr.mxu0 0.0
        %1899 = vmatpush1.msra.mxu0 %v1874
        %1900 = vmatprep.subr.mxu0 0.0
        %1901 = vmatpush1.msra.mxu0 %v1875
        %1902 = vmatprep.subr.mxu0 0.0
        %1903 = vmatpush1.msra.mxu0 %v1876
        %1904 = vmatprep.subr.mxu0 0.0
        %1905 = vmatpush1.msra.mxu0 %v1877
        %1906 = vmatprep.subr.mxu0 0.0
        %1907 = vmatpush1.msra.mxu0 %v1878
        %1908 = vmatprep.subr.mxu0 0.0
        %1909 = vmatpush1.msra.mxu0 %v1879
        %1910 = vmatprep.subr.mxu0 0.0
        %1911 = vmatpush1.msra.mxu0 %v1880
        %1912 = vmatprep.subr.mxu0 0.0
        %1913 = vmatpush1.msra.mxu0 %v1881
        %1914 = vmatprep.subr.mxu0 0.0
        %1915 = vmatpush1.msra.mxu0 %v1882
        %1916 = vmatprep.subr.mxu0 0.0
        %1917 = vmatpush1.msra.mxu0 %v1883
        %1918 = vmatprep.subr.mxu0 0.0
        %1919 = vmatpush1.msra.mxu0 %v1884
        %1920 = vmatprep.subr.mxu0 0.0
        %1921 = vmatpush1.msra.mxu0 %v1885
        %1922 = vmatprep.subr.mxu0 0.0
        %1923 = vmatpush1.msra.mxu0 %v1886
        %1924 = vmatprep.subr.mxu0 0.0
        %1925 = vmatpush1.msra.mxu0 0.0
        %1926 = vmatprep.subr.mxu0 0.0
        %1927 = vmatpush1.msra.mxu0 0.0
        %1928 = vmatprep.subr.mxu0 0.0
        %1929 = vmatpush1.msra.mxu0 0.0
        %1930 = vmatprep.subr.mxu0 0.0
        %1931 = vmatpush1.msra.mxu0 0.0
        %1932 = vmatprep.subr.mxu0 0.0
        %1933 = vmatpush1.msra.mxu0 0.0
        %1934 = vmatprep.subr.mxu0 0.0
        %1935 = vmatpush1.msra.mxu0 0.0
        %1936 = vmatprep.subr.mxu0 0.0
        %1937 = vmatpush1.msra.mxu0 0.0
        %1938 = vmatprep.subr.mxu0 0.0
        %1939 = vmatpush1.msra.mxu0 0.0
        %1940 = vmatprep.subr.mxu0 0.0
        %1941 = vmatpush1.msra.mxu0 0.0
        %1942 = vmatprep.subr.mxu0 0.0
        %1943 = vmatpush1.msra.mxu0 0.0
        %1944 = vmatprep.subr.mxu0 0.0
        %1945 = vmatpush1.msra.mxu0 0.0
        %1946 = vmatprep.subr.mxu0 0.0
        %1947 = vmatpush1.msra.mxu0 0.0
        %1948 = vmatprep.subr.mxu0 0.0
        %1949 = vmatpush1.msra.mxu0 0.0
        %1950 = vmatprep.subr.mxu0 0.0
        %1951 = vmatpush1.msra.mxu0 0.0
        %1952 = vmatprep.subr.mxu0 0.0
        %1953 = vmatpush1.msra.mxu0 0.0
        %1954 = vmatprep.subr.mxu0 0.0
        %1955 = vmatpush1.msra.mxu0 0.0
        %1956 = vmatprep.mubr.f32.mxu0 0.0
        %1957 = vmatmul.mubr.f32.gmra.mrb[0].mxu0 %v1454
        %v1958 = vpop.f32.mrb[0].mxu0
        %v1959 = vadd.f32 %v1891, %v1958
        %v1960 = vpop.f32.mrb[0].mxu0
        %1961 = vmatprep.mubr.f32.mxu0 0.0
        %1962 = vmatmul.mubr.f32.gmra.mrb[0].mxu0 %v1455
        %v1963 = vpop.f32.mrb[0].mxu0
        %v1964 = vadd.f32 %v1891, %v1963
        %v1965 = vpop.f32.mrb[0].mxu0
        %1966 = vmatprep.mubr.f32.mxu0 0.0
        %1967 = vmatmul.mubr.f32.gmra.mrb[0].mxu0 %v1456
        %v1968 = vpop.f32.mrb[0].mxu0
        %v1969 = vadd.f32 %v1891, %v1968
        %v1970 = vpop.f32.mrb[0].mxu0
        %1971 = vmatprep.mubr.f32.mxu0 0.0
        %1972 = vmatmul.mubr.f32.gmra.mrb[0].mxu0 %v1457
        %v1973 = vpop.f32.mrb[0].mxu0
        %v1974 = vadd.f32 %v1891, %v1973
        %v1975 = vpop.f32.mrb[0].mxu0
        %1976 = vdwg.mxu0
        %v1977 = vmax.f32 %v1959, 0.0
        %v1978 = vmax.f32 %v1964, 0.0
        %v1979 = vmax.f32 %v1969, 0.0
        %v1980 = vmax.f32 %v1974, 0.0
        %v1982 = vsel %vm457, %v1870, 0
        %1984 = vmatprep.subr.mxu0 0.0
        %1985 = vmatpush1.msra.mxu0 %v723
        %1986 = vmatprep.subr.mxu0 0.0
        %1987 = vmatpush1.msra.mxu0 %v724
        %1988 = vmatprep.subr.mxu0 0.0
        %1989 = vmatpush1.msra.mxu0 0.0
        %1990 = vmatprep.subr.mxu0 0.0
        %1991 = vmatpush1.msra.mxu0 0.0
        %1992 = vmatprep.subr.mxu0 0.0
        %1993 = vmatpush1.msra.mxu0 0.0
        %1994 = vmatprep.subr.mxu0 0.0
        %1995 = vmatpush1.msra.mxu0 0.0
        %1996 = vmatprep.subr.mxu0 0.0
        %1997 = vmatpush1.msra.mxu0 0.0
        %1998 = vmatprep.subr.mxu0 0.0
        %1999 = vmatpush1.msra.mxu0 0.0
        %2000 = vmatprep.subr.mxu0 0.0
        %2001 = vmatpush1.msra.mxu0 0.0
        %2002 = vmatprep.subr.mxu0 0.0
        %2003 = vmatpush1.msra.mxu0 0.0
        %2004 = vmatprep.subr.mxu0 0.0
        %2005 = vmatpush1.msra.mxu0 0.0
        %2006 = vmatprep.subr.mxu0 0.0
        %2007 = vmatpush1.msra.mxu0 0.0
        %2008 = vmatprep.subr.mxu0 0.0
        %2009 = vmatpush1.msra.mxu0 0.0
        %2010 = vmatprep.subr.mxu0 0.0
        %2011 = vmatpush1.msra.mxu0 0.0
        %2012 = vmatprep.subr.mxu0 0.0
        %2013 = vmatpush1.msra.mxu0 0.0
        %2014 = vmatprep.subr.mxu0 0.0
        %2015 = vmatpush1.msra.mxu0 0.0
        %2016 = vmatprep.subr.mxu0 0.0
        %2017 = vmatpush1.msra.mxu0 0.0
        %2018 = vmatprep.subr.mxu0 0.0
        %2019 = vmatpush1.msra.mxu0 0.0
        %2020 = vmatprep.subr.mxu0 0.0
        %2021 = vmatpush1.msra.mxu0 0.0
        %2022 = vmatprep.subr.mxu0 0.0
        %2023 = vmatpush1.msra.mxu0 0.0
        %2024 = vmatprep.subr.mxu0 0.0
        %2025 = vmatpush1.msra.mxu0 0.0
        %2026 = vmatprep.subr.mxu0 0.0
        %2027 = vmatpush1.msra.mxu0 0.0
        %2028 = vmatprep.subr.mxu0 0.0
        %2029 = vmatpush1.msra.mxu0 0.0
        %2030 = vmatprep.subr.mxu0 0.0
        %2031 = vmatpush1.msra.mxu0 0.0
        %2032 = vmatprep.subr.mxu0 0.0
        %2033 = vmatpush1.msra.mxu0 0.0
        %2034 = vmatprep.subr.mxu0 0.0
        %2035 = vmatpush1.msra.mxu0 0.0
        %2036 = vmatprep.subr.mxu0 0.0
        %2037 = vmatpush1.msra.mxu0 0.0
        %2038 = vmatprep.subr.mxu0 0.0
        %2039 = vmatpush1.msra.mxu0 0.0
        %2040 = vmatprep.subr.mxu0 0.0
        %2041 = vmatpush1.msra.mxu0 0.0
        %2042 = vmatprep.subr.mxu0 0.0
        %2043 = vmatpush1.msra.mxu0 0.0
        %2044 = vmatprep.subr.mxu0 0.0
        %2045 = vmatpush1.msra.mxu0 0.0
        %2046 = vmatprep.subr.mxu0 0.0
        %2047 = vmatpush1.msra.mxu0 0.0
        %2048 = vmatprep.mubr.f32.mxu0 0.0
        %2049 = vmatmul.mubr.f32.gmra.mrb[0].mxu0 %v1982
        %v2050 = vpop.f32.mrb[0].mxu0
        %v2051 = vadd.f32 0.0, %v2050
        %v2052 = vpop.f32.mrb[0].mxu0
        %2053 = vdwg.mxu0
        %vm2054 = vcmask 31744
        %v2056 = vsel %vm2054, %v275, 0
        %v2059 = vsel %vm2054, %v276, 0
        %v2062 = vsel %vm2054, %v277, 0
        %v2065 = vsel %vm2054, %v278, 0
        %vm2067 = vcmask 1043456
        %v2069 = vsel %vm2067, %v2051, 0
        %2071 = vmatprep.subr.mxu0 0.0
        %2072 = vmatpush1.msra.mxu0 %v2069
        %2073 = vmatprep.subr.mxu0 0.0
        %2074 = vmatpush1.msra.mxu0 0.0
        %2075 = vmatprep.subr.mxu0 0.0
        %2076 = vmatpush1.msra.mxu0 0.0
        %2077 = vmatprep.subr.mxu0 0.0
        %2078 = vmatpush1.msra.mxu0 0.0
        %2079 = vmatprep.subr.mxu0 0.0
        %2080 = vmatpush1.msra.mxu0 0.0
        %2081 = vmatprep.subr.mxu0 0.0
        %2082 = vmatpush1.msra.mxu0 0.0
        %2083 = vmatprep.subr.mxu0 0.0
        %2084 = vmatpush1.msra.mxu0 0.0
        %2085 = vmatprep.subr.mxu0 0.0
        %2086 = vmatpush1.msra.mxu0 0.0
        %2087 = vmatprep.subr.mxu0 0.0
        %2088 = vmatpush1.msra.mxu0 0.0
        %2089 = vmatprep.subr.mxu0 0.0
        %2090 = vmatpush1.msra.mxu0 0.0
        %2091 = vmatprep.subr.mxu0 0.0
        %2092 = vmatpush1.msra.mxu0 0.0
        %2093 = vmatprep.subr.mxu0 0.0
        %2094 = vmatpush1.msra.mxu0 0.0
        %2095 = vmatprep.subr.mxu0 0.0
        %2096 = vmatpush1.msra.mxu0 0.0
        %2097 = vmatprep.subr.mxu0 0.0
        %2098 = vmatpush1.msra.mxu0 0.0
        %2099 = vmatprep.subr.mxu0 0.0
        %2100 = vmatpush1.msra.mxu0 0.0
        %2101 = vmatprep.subr.mxu0 0.0
        %2102 = vmatpush1.msra.mxu0 0.0
        %2103 = vmatprep.subr.mxu0 0.0
        %2104 = vmatpush1.msra.mxu0 0.0
        %2105 = vmatprep.subr.mxu0 0.0
        %2106 = vmatpush1.msra.mxu0 0.0
        %2107 = vmatprep.subr.mxu0 0.0
        %2108 = vmatpush1.msra.mxu0 0.0
        %2109 = vmatprep.subr.mxu0 0.0
        %2110 = vmatpush1.msra.mxu0 0.0
        %2111 = vmatprep.subr.mxu0 0.0
        %2112 = vmatpush1.msra.mxu0 0.0
        %2113 = vmatprep.subr.mxu0 0.0
        %2114 = vmatpush1.msra.mxu0 0.0
        %2115 = vmatprep.subr.mxu0 0.0
        %2116 = vmatpush1.msra.mxu0 0.0
        %2117 = vmatprep.subr.mxu0 0.0
        %2118 = vmatpush1.msra.mxu0 0.0
        %2119 = vmatprep.subr.mxu0 0.0
        %2120 = vmatpush1.msra.mxu0 0.0
        %2121 = vmatprep.subr.mxu0 0.0
        %2122 = vmatpush1.msra.mxu0 0.0
        %2123 = vmatprep.subr.mxu0 0.0
        %2124 = vmatpush1.msra.mxu0 0.0
        %2125 = vmatprep.subr.mxu0 0.0
        %2126 = vmatpush1.msra.mxu0 0.0
        %2127 = vmatprep.subr.mxu0 0.0
        %2128 = vmatpush1.msra.mxu0 0.0
        %2129 = vmatprep.subr.mxu0 0.0
        %2130 = vmatpush1.msra.mxu0 0.0
        %2131 = vmatprep.subr.mxu0 0.0
        %2132 = vmatpush1.msra.mxu0 0.0
        %2133 = vmatprep.subr.mxu0 0.0
        %2134 = vmatpush1.msra.mxu0 0.0
        %2135 = vmatprep.mubr.f32.mxu0 0.0
        %2136 = vmatmul.mubr.f32.gmra.mrb[0].mxu0 %v2056
        %v2137 = vpop.f32.mrb[0].mxu0
        %v2138 = vadd.f32 0.0, %v2137
        %v2139 = vpop.f32.mrb[0].mxu0
        %2140 = vmatprep.mubr.f32.mxu0 0.0
        %2141 = vmatmul.mubr.f32.gmra.mrb[0].mxu0 %v2059
        %v2142 = vpop.f32.mrb[0].mxu0
        %v2143 = vadd.f32 0.0, %v2142
        %v2144 = vpop.f32.mrb[0].mxu0
        %2145 = vmatprep.mubr.f32.mxu0 0.0
        %2146 = vmatmul.mubr.f32.gmra.mrb[0].mxu0 %v2062
        %v2147 = vpop.f32.mrb[0].mxu0
        %v2148 = vadd.f32 0.0, %v2147
        %v2149 = vpop.f32.mrb[0].mxu0
        %2150 = vmatprep.mubr.f32.mxu0 0.0
        %2151 = vmatmul.mubr.f32.gmra.mrb[0].mxu0 %v2065
        %v2152 = vpop.f32.mrb[0].mxu0
        %v2153 = vadd.f32 0.0, %v2152
        %v2154 = vpop.f32.mrb[0].mxu0
        %2155 = vdwg.mxu0
        %2156 = vmatprep.subr.mxu0 0.0
        %2157 = vmatpush1.msra.mxu0 %v798
        %2158 = vmatprep.subr.mxu0 0.0
        %2159 = vmatpush1.msra.mxu0 %v799
        %2160 = vmatprep.subr.mxu0 0.0
        %2161 = vmatpush1.msra.mxu0 0.0
        %2162 = vmatprep.subr.mxu0 0.0
        %2163 = vmatpush1.msra.mxu0 0.0
        %2164 = vmatprep.subr.mxu0 0.0
        %2165 = vmatpush1.msra.mxu0 0.0
        %2166 = vmatprep.subr.mxu0 0.0
        %2167 = vmatpush1.msra.mxu0 0.0
        %2168 = vmatprep.subr.mxu0 0.0
        %2169 = vmatpush1.msra.mxu0 0.0
        %2170 = vmatprep.subr.mxu0 0.0
        %2171 = vmatpush1.msra.mxu0 0.0
        %2172 = vmatprep.subr.mxu0 0.0
        %2173 = vmatpush1.msra.mxu0 0.0
        %2174 = vmatprep.subr.mxu0 0.0
        %2175 = vmatpush1.msra.mxu0 0.0
        %2176 = vmatprep.subr.mxu0 0.0
        %2177 = vmatpush1.msra.mxu0 0.0
        %2178 = vmatprep.subr.mxu0 0.0
        %2179 = vmatpush1.msra.mxu0 0.0
        %2180 = vmatprep.subr.mxu0 0.0
        %2181 = vmatpush1.msra.mxu0 0.0
        %2182 = vmatprep.subr.mxu0 0.0
        %2183 = vmatpush1.msra.mxu0 0.0
        %2184 = vmatprep.subr.mxu0 0.0
        %2185 = vmatpush1.msra.mxu0 0.0
        %2186 = vmatprep.subr.mxu0 0.0
        %2187 = vmatpush1.msra.mxu0 0.0
        %2188 = vmatprep.subr.mxu0 0.0
        %2189 = vmatpush1.msra.mxu0 0.0
        %2190 = vmatprep.subr.mxu0 0.0
        %2191 = vmatpush1.msra.mxu0 0.0
        %2192 = vmatprep.subr.mxu0 0.0
        %2193 = vmatpush1.msra.mxu0 0.0
        %2194 = vmatprep.subr.mxu0 0.0
        %2195 = vmatpush1.msra.mxu0 0.0
        %2196 = vmatprep.subr.mxu0 0.0
        %2197 = vmatpush1.msra.mxu0 0.0
        %2198 = vmatprep.subr.mxu0 0.0
        %2199 = vmatpush1.msra.mxu0 0.0
        %2200 = vmatprep.subr.mxu0 0.0
        %2201 = vmatpush1.msra.mxu0 0.0
        %2202 = vmatprep.subr.mxu0 0.0
        %2203 = vmatpush1.msra.mxu0 0.0
        %2204 = vmatprep.subr.mxu0 0.0
        %2205 = vmatpush1.msra.mxu0 0.0
        %2206 = vmatprep.subr.mxu0 0.0
        %2207 = vmatpush1.msra.mxu0 0.0
        %2208 = vmatprep.subr.mxu0 0.0
        %2209 = vmatpush1.msra.mxu0 0.0
        %2210 = vmatprep.subr.mxu0 0.0
        %2211 = vmatpush1.msra.mxu0 0.0
        %2212 = vmatprep.subr.mxu0 0.0
        %2213 = vmatpush1.msra.mxu0 0.0
        %2214 = vmatprep.subr.mxu0 0.0
        %2215 = vmatpush1.msra.mxu0 0.0
        %2216 = vmatprep.subr.mxu0 0.0
        %2217 = vmatpush1.msra.mxu0 0.0
        %2218 = vmatprep.subr.mxu0 0.0
        %2219 = vmatpush1.msra.mxu0 0.0
        %2220 = vmatprep.mubr.f32.mxu0 0.0
        %2221 = vmatmul.mubr.f32.gmra.mrb[0].mxu0 %v1982
        %v2222 = vpop.f32.mrb[0].mxu0
        %v2223 = vadd.f32 0.0, %v2222
        %v2224 = vpop.f32.mrb[0].mxu0
        %2225 = vdwg.mxu0
        %v2227 = vsel %vm2067, %v2223, 0
        %2229 = vmatprep.subr.mxu0 0.0
        %2230 = vmatpush1.msra.mxu0 %v2227
        %2231 = vmatprep.subr.mxu0 0.0
        %2232 = vmatpush1.msra.mxu0 0.0
        %2233 = vmatprep.subr.mxu0 0.0
        %2234 = vmatpush1.msra.mxu0 0.0
        %2235 = vmatprep.subr.mxu0 0.0
        %2236 = vmatpush1.msra.mxu0 0.0
        %2237 = vmatprep.subr.mxu0 0.0
        %2238 = vmatpush1.msra.mxu0 0.0
        %2239 = vmatprep.subr.mxu0 0.0
        %2240 = vmatpush1.msra.mxu0 0.0
        %2241 = vmatprep.subr.mxu0 0.0
        %2242 = vmatpush1.msra.mxu0 0.0
        %2243 = vmatprep.subr.mxu0 0.0
        %2244 = vmatpush1.msra.mxu0 0.0
        %2245 = vmatprep.subr.mxu0 0.0
        %2246 = vmatpush1.msra.mxu0 0.0
        %2247 = vmatprep.subr.mxu0 0.0
        %2248 = vmatpush1.msra.mxu0 0.0
        %2249 = vmatprep.subr.mxu0 0.0
        %2250 = vmatpush1.msra.mxu0 0.0
        %2251 = vmatprep.subr.mxu0 0.0
        %2252 = vmatpush1.msra.mxu0 0.0
        %2253 = vmatprep.subr.mxu0 0.0
        %2254 = vmatpush1.msra.mxu0 0.0
        %2255 = vmatprep.subr.mxu0 0.0
        %2256 = vmatpush1.msra.mxu0 0.0
        %2257 = vmatprep.subr.mxu0 0.0
        %2258 = vmatpush1.msra.mxu0 0.0
        %2259 = vmatprep.subr.mxu0 0.0
        %2260 = vmatpush1.msra.mxu0 0.0
        %2261 = vmatprep.subr.mxu0 0.0
        %2262 = vmatpush1.msra.mxu0 0.0
        %2263 = vmatprep.subr.mxu0 0.0
        %2264 = vmatpush1.msra.mxu0 0.0
        %2265 = vmatprep.subr.mxu0 0.0
        %2266 = vmatpush1.msra.mxu0 0.0
        %2267 = vmatprep.subr.mxu0 0.0
        %2268 = vmatpush1.msra.mxu0 0.0
        %2269 = vmatprep.subr.mxu0 0.0
        %2270 = vmatpush1.msra.mxu0 0.0
        %2271 = vmatprep.subr.mxu0 0.0
        %2272 = vmatpush1.msra.mxu0 0.0
        %2273 = vmatprep.subr.mxu0 0.0
        %2274 = vmatpush1.msra.mxu0 0.0
        %2275 = vmatprep.subr.mxu0 0.0
        %2276 = vmatpush1.msra.mxu0 0.0
        %2277 = vmatprep.subr.mxu0 0.0
        %2278 = vmatpush1.msra.mxu0 0.0
        %2279 = vmatprep.subr.mxu0 0.0
        %2280 = vmatpush1.msra.mxu0 0.0
        %2281 = vmatprep.subr.mxu0 0.0
        %2282 = vmatpush1.msra.mxu0 0.0
        %2283 = vmatprep.subr.mxu0 0.0
        %2284 = vmatpush1.msra.mxu0 0.0
        %2285 = vmatprep.subr.mxu0 0.0
        %2286 = vmatpush1.msra.mxu0 0.0
        %2287 = vmatprep.subr.mxu0 0.0
        %2288 = vmatpush1.msra.mxu0 0.0
        %2289 = vmatprep.subr.mxu0 0.0
        %2290 = vmatpush1.msra.mxu0 0.0
        %2291 = vmatprep.subr.mxu0 0.0
        %2292 = vmatpush1.msra.mxu0 0.0
        %2293 = vmatprep.mubr.f32.mxu0 0.0
        %2294 = vmatmul.mubr.f32.gmra.mrb[0].mxu0 %v2056
        %v2295 = vpop.f32.mrb[0].mxu0
        %v2296 = vadd.f32 0.0, %v2295
        %v2297 = vpop.f32.mrb[0].mxu0
        %2298 = vmatprep.mubr.f32.mxu0 0.0
        %2299 = vmatmul.mubr.f32.gmra.mrb[0].mxu0 %v2059
        %v2300 = vpop.f32.mrb[0].mxu0
        %v2301 = vadd.f32 0.0, %v2300
        %v2302 = vpop.f32.mrb[0].mxu0
        %2303 = vmatprep.mubr.f32.mxu0 0.0
        %2304 = vmatmul.mubr.f32.gmra.mrb[0].mxu0 %v2062
        %v2305 = vpop.f32.mrb[0].mxu0
        %v2306 = vadd.f32 0.0, %v2305
        %v2307 = vpop.f32.mrb[0].mxu0
        %2308 = vmatprep.mubr.f32.mxu0 0.0
        %2309 = vmatmul.mubr.f32.gmra.mrb[0].mxu0 %v2065
        %v2310 = vpop.f32.mrb[0].mxu0
        %v2311 = vadd.f32 0.0, %v2310
        %v2312 = vpop.f32.mrb[0].mxu0
        %2313 = vdwg.mxu0
        %2314 = vmatprep.subr.mxu0 0.0
        %2315 = vmatpush1.msra.mxu0 %v870
        %2316 = vmatprep.subr.mxu0 0.0
        %2317 = vmatpush1.msra.mxu0 %v871
        %2318 = vmatprep.subr.mxu0 0.0
        %2319 = vmatpush1.msra.mxu0 0.0
        %2320 = vmatprep.subr.mxu0 0.0
        %2321 = vmatpush1.msra.mxu0 0.0
        %2322 = vmatprep.subr.mxu0 0.0
        %2323 = vmatpush1.msra.mxu0 0.0
        %2324 = vmatprep.subr.mxu0 0.0
        %2325 = vmatpush1.msra.mxu0 0.0
        %2326 = vmatprep.subr.mxu0 0.0
        %2327 = vmatpush1.msra.mxu0 0.0
        %2328 = vmatprep.subr.mxu0 0.0
        %2329 = vmatpush1.msra.mxu0 0.0
        %2330 = vmatprep.subr.mxu0 0.0
        %2331 = vmatpush1.msra.mxu0 0.0
        %2332 = vmatprep.subr.mxu0 0.0
        %2333 = vmatpush1.msra.mxu0 0.0
        %2334 = vmatprep.subr.mxu0 0.0
        %2335 = vmatpush1.msra.mxu0 0.0
        %2336 = vmatprep.subr.mxu0 0.0
        %2337 = vmatpush1.msra.mxu0 0.0
        %2338 = vmatprep.subr.mxu0 0.0
        %2339 = vmatpush1.msra.mxu0 0.0
        %2340 = vmatprep.subr.mxu0 0.0
        %2341 = vmatpush1.msra.mxu0 0.0
        %2342 = vmatprep.subr.mxu0 0.0
        %2343 = vmatpush1.msra.mxu0 0.0
        %2344 = vmatprep.subr.mxu0 0.0
        %2345 = vmatpush1.msra.mxu0 0.0
        %2346 = vmatprep.subr.mxu0 0.0
        %2347 = vmatpush1.msra.mxu0 0.0
        %2348 = vmatprep.subr.mxu0 0.0
        %2349 = vmatpush1.msra.mxu0 0.0
        %2350 = vmatprep.subr.mxu0 0.0
        %2351 = vmatpush1.msra.mxu0 0.0
        %2352 = vmatprep.subr.mxu0 0.0
        %2353 = vmatpush1.msra.mxu0 0.0
        %2354 = vmatprep.subr.mxu0 0.0
        %2355 = vmatpush1.msra.mxu0 0.0
        %2356 = vmatprep.subr.mxu0 0.0
        %2357 = vmatpush1.msra.mxu0 0.0
        %2358 = vmatprep.subr.mxu0 0.0
        %2359 = vmatpush1.msra.mxu0 0.0
        %2360 = vmatprep.subr.mxu0 0.0
        %2361 = vmatpush1.msra.mxu0 0.0
        %2362 = vmatprep.subr.mxu0 0.0
        %2363 = vmatpush1.msra.mxu0 0.0
        %2364 = vmatprep.subr.mxu0 0.0
        %2365 = vmatpush1.msra.mxu0 0.0
        %2366 = vmatprep.subr.mxu0 0.0
        %2367 = vmatpush1.msra.mxu0 0.0
        %2368 = vmatprep.subr.mxu0 0.0
        %2369 = vmatpush1.msra.mxu0 0.0
        %2370 = vmatprep.subr.mxu0 0.0
        %2371 = vmatpush1.msra.mxu0 0.0
        %2372 = vmatprep.subr.mxu0 0.0
        %2373 = vmatpush1.msra.mxu0 0.0
        %2374 = vmatprep.subr.mxu0 0.0
        %2375 = vmatpush1.msra.mxu0 0.0
        %2376 = vmatprep.subr.mxu0 0.0
        %2377 = vmatpush1.msra.mxu0 0.0
        %2378 = vmatprep.mubr.f32.mxu0 0.0
        %2379 = vmatmul.mubr.f32.gmra.mrb[0].mxu0 %v1982
        %v2380 = vpop.f32.mrb[0].mxu0
        %v2381 = vadd.f32 0.0, %v2380
        %v2382 = vpop.f32.mrb[0].mxu0
        %2383 = vdwg.mxu0
        %v2385 = vsel %vm2067, %v2381, 0
        %2387 = vmatprep.subr.mxu0 0.0
        %2388 = vmatpush1.msra.mxu0 %v2385
        %2389 = vmatprep.subr.mxu0 0.0
        %2390 = vmatpush1.msra.mxu0 0.0
        %2391 = vmatprep.subr.mxu0 0.0
        %2392 = vmatpush1.msra.mxu0 0.0
        %2393 = vmatprep.subr.mxu0 0.0
        %2394 = vmatpush1.msra.mxu0 0.0
        %2395 = vmatprep.subr.mxu0 0.0
        %2396 = vmatpush1.msra.mxu0 0.0
        %2397 = vmatprep.subr.mxu0 0.0
        %2398 = vmatpush1.msra.mxu0 0.0
        %2399 = vmatprep.subr.mxu0 0.0
        %2400 = vmatpush1.msra.mxu0 0.0
        %2401 = vmatprep.subr.mxu0 0.0
        %2402 = vmatpush1.msra.mxu0 0.0
        %2403 = vmatprep.subr.mxu0 0.0
        %2404 = vmatpush1.msra.mxu0 0.0
        %2405 = vmatprep.subr.mxu0 0.0
        %2406 = vmatpush1.msra.mxu0 0.0
        %2407 = vmatprep.subr.mxu0 0.0
        %2408 = vmatpush1.msra.mxu0 0.0
        %2409 = vmatprep.subr.mxu0 0.0
        %2410 = vmatpush1.msra.mxu0 0.0
        %2411 = vmatprep.subr.mxu0 0.0
        %2412 = vmatpush1.msra.mxu0 0.0
        %2413 = vmatprep.subr.mxu0 0.0
        %2414 = vmatpush1.msra.mxu0 0.0
        %2415 = vmatprep.subr.mxu0 0.0
        %2416 = vmatpush1.msra.mxu0 0.0
        %2417 = vmatprep.subr.mxu0 0.0
        %2418 = vmatpush1.msra.mxu0 0.0
        %2419 = vmatprep.subr.mxu0 0.0
        %2420 = vmatpush1.msra.mxu0 0.0
        %2421 = vmatprep.subr.mxu0 0.0
        %2422 = vmatpush1.msra.mxu0 0.0
        %2423 = vmatprep.subr.mxu0 0.0
        %2424 = vmatpush1.msra.mxu0 0.0
        %2425 = vmatprep.subr.mxu0 0.0
        %2426 = vmatpush1.msra.mxu0 0.0
        %2427 = vmatprep.subr.mxu0 0.0
        %2428 = vmatpush1.msra.mxu0 0.0
        %2429 = vmatprep.subr.mxu0 0.0
        %2430 = vmatpush1.msra.mxu0 0.0
        %2431 = vmatprep.subr.mxu0 0.0
        %2432 = vmatpush1.msra.mxu0 0.0
        %2433 = vmatprep.subr.mxu0 0.0
        %2434 = vmatpush1.msra.mxu0 0.0
        %2435 = vmatprep.subr.mxu0 0.0
        %2436 = vmatpush1.msra.mxu0 0.0
        %2437 = vmatprep.subr.mxu0 0.0
        %2438 = vmatpush1.msra.mxu0 0.0
        %2439 = vmatprep.subr.mxu0 0.0
        %2440 = vmatpush1.msra.mxu0 0.0
        %2441 = vmatprep.subr.mxu0 0.0
        %2442 = vmatpush1.msra.mxu0 0.0
        %2443 = vmatprep.subr.mxu0 0.0
        %2444 = vmatpush1.msra.mxu0 0.0
        %2445 = vmatprep.subr.mxu0 0.0
        %2446 = vmatpush1.msra.mxu0 0.0
        %2447 = vmatprep.subr.mxu0 0.0
        %2448 = vmatpush1.msra.mxu0 0.0
        %2449 = vmatprep.subr.mxu0 0.0
        %2450 = vmatpush1.msra.mxu0 0.0
        %2451 = vmatprep.mubr.f32.mxu0 0.0
        %2452 = vmatmul.mubr.f32.gmra.mrb[0].mxu0 %v2056
        %v2453 = vpop.f32.mrb[0].mxu0
        %v2454 = vadd.f32 0.0, %v2453
        %v2455 = vpop.f32.mrb[0].mxu0
        %2456 = vmatprep.mubr.f32.mxu0 0.0
        %2457 = vmatmul.mubr.f32.gmra.mrb[0].mxu0 %v2059
        %v2458 = vpop.f32.mrb[0].mxu0
        %v2459 = vadd.f32 0.0, %v2458
        %v2460 = vpop.f32.mrb[0].mxu0
        %2461 = vmatprep.mubr.f32.mxu0 0.0
        %2462 = vmatmul.mubr.f32.gmra.mrb[0].mxu0 %v2062
        %v2463 = vpop.f32.mrb[0].mxu0
        %v2464 = vadd.f32 0.0, %v2463
        %v2465 = vpop.f32.mrb[0].mxu0
        %2466 = vmatprep.mubr.f32.mxu0 0.0
        %2467 = vmatmul.mubr.f32.gmra.mrb[0].mxu0 %v2065
        %v2468 = vpop.f32.mrb[0].mxu0
        %v2469 = vadd.f32 0.0, %v2468
        %v2470 = vpop.f32.mrb[0].mxu0
        %2471 = vdwg.mxu0
        %2472 = vmatprep.subr.mxu0 0.0
        %2473 = vmatpush1.msra.mxu0 %v942
        %2474 = vmatprep.subr.mxu0 0.0
        %2475 = vmatpush1.msra.mxu0 %v943
        %2476 = vmatprep.subr.mxu0 0.0
        %2477 = vmatpush1.msra.mxu0 0.0
        %2478 = vmatprep.subr.mxu0 0.0
        %2479 = vmatpush1.msra.mxu0 0.0
        %2480 = vmatprep.subr.mxu0 0.0
        %2481 = vmatpush1.msra.mxu0 0.0
        %2482 = vmatprep.subr.mxu0 0.0
        %2483 = vmatpush1.msra.mxu0 0.0
        %2484 = vmatprep.subr.mxu0 0.0
        %2485 = vmatpush1.msra.mxu0 0.0
        %2486 = vmatprep.subr.mxu0 0.0
        %2487 = vmatpush1.msra.mxu0 0.0
        %2488 = vmatprep.subr.mxu0 0.0
        %2489 = vmatpush1.msra.mxu0 0.0
        %2490 = vmatprep.subr.mxu0 0.0
        %2491 = vmatpush1.msra.mxu0 0.0
        %2492 = vmatprep.subr.mxu0 0.0
        %2493 = vmatpush1.msra.mxu0 0.0
        %2494 = vmatprep.subr.mxu0 0.0
        %2495 = vmatpush1.msra.mxu0 0.0
        %2496 = vmatprep.subr.mxu0 0.0
        %2497 = vmatpush1.msra.mxu0 0.0
        %2498 = vmatprep.subr.mxu0 0.0
        %2499 = vmatpush1.msra.mxu0 0.0
        %2500 = vmatprep.subr.mxu0 0.0
        %2501 = vmatpush1.msra.mxu0 0.0
        %2502 = vmatprep.subr.mxu0 0.0
        %2503 = vmatpush1.msra.mxu0 0.0
        %2504 = vmatprep.subr.mxu0 0.0
        %2505 = vmatpush1.msra.mxu0 0.0
        %2506 = vmatprep.subr.mxu0 0.0
        %2507 = vmatpush1.msra.mxu0 0.0
        %2508 = vmatprep.subr.mxu0 0.0
        %2509 = vmatpush1.msra.mxu0 0.0
        %2510 = vmatprep.subr.mxu0 0.0
        %2511 = vmatpush1.msra.mxu0 0.0
        %2512 = vmatprep.subr.mxu0 0.0
        %2513 = vmatpush1.msra.mxu0 0.0
        %2514 = vmatprep.subr.mxu0 0.0
        %2515 = vmatpush1.msra.mxu0 0.0
        %2516 = vmatprep.subr.mxu0 0.0
        %2517 = vmatpush1.msra.mxu0 0.0
        %2518 = vmatprep.subr.mxu0 0.0
        %2519 = vmatpush1.msra.mxu0 0.0
        %2520 = vmatprep.subr.mxu0 0.0
        %2521 = vmatpush1.msra.mxu0 0.0
        %2522 = vmatprep.subr.mxu0 0.0
        %2523 = vmatpush1.msra.mxu0 0.0
        %2524 = vmatprep.subr.mxu0 0.0
        %2525 = vmatpush1.msra.mxu0 0.0
        %2526 = vmatprep.subr.mxu0 0.0
        %2527 = vmatpush1.msra.mxu0 0.0
        %2528 = vmatprep.subr.mxu0 0.0
        %2529 = vmatpush1.msra.mxu0 0.0
        %2530 = vmatprep.subr.mxu0 0.0
        %2531 = vmatpush1.msra.mxu0 0.0
        %2532 = vmatprep.subr.mxu0 0.0
        %2533 = vmatpush1.msra.mxu0 0.0
        %2534 = vmatprep.subr.mxu0 0.0
        %2535 = vmatpush1.msra.mxu0 0.0
        %2536 = vmatprep.mubr.f32.mxu0 0.0
        %2537 = vmatmul.mubr.f32.gmra.mrb[0].mxu0 %v1982
        %v2538 = vpop.f32.mrb[0].mxu0
        %v2539 = vadd.f32 0.0, %v2538
        %v2540 = vpop.f32.mrb[0].mxu0
        %2541 = vdwg.mxu0
        %v2543 = vsel %vm2067, %v2539, 0
        %2545 = vmatprep.subr.mxu0 0.0
        %2546 = vmatpush1.msra.mxu0 %v2543
        %2547 = vmatprep.subr.mxu0 0.0
        %2548 = vmatpush1.msra.mxu0 0.0
        %2549 = vmatprep.subr.mxu0 0.0
        %2550 = vmatpush1.msra.mxu0 0.0
        %2551 = vmatprep.subr.mxu0 0.0
        %2552 = vmatpush1.msra.mxu0 0.0
        %2553 = vmatprep.subr.mxu0 0.0
        %2554 = vmatpush1.msra.mxu0 0.0
        %2555 = vmatprep.subr.mxu0 0.0
        %2556 = vmatpush1.msra.mxu0 0.0
        %2557 = vmatprep.subr.mxu0 0.0
        %2558 = vmatpush1.msra.mxu0 0.0
        %2559 = vmatprep.subr.mxu0 0.0
        %2560 = vmatpush1.msra.mxu0 0.0
        %2561 = vmatprep.subr.mxu0 0.0
        %2562 = vmatpush1.msra.mxu0 0.0
        %2563 = vmatprep.subr.mxu0 0.0
        %2564 = vmatpush1.msra.mxu0 0.0
        %2565 = vmatprep.subr.mxu0 0.0
        %2566 = vmatpush1.msra.mxu0 0.0
        %2567 = vmatprep.subr.mxu0 0.0
        %2568 = vmatpush1.msra.mxu0 0.0
        %2569 = vmatprep.subr.mxu0 0.0
        %2570 = vmatpush1.msra.mxu0 0.0
        %2571 = vmatprep.subr.mxu0 0.0
        %2572 = vmatpush1.msra.mxu0 0.0
        %2573 = vmatprep.subr.mxu0 0.0
        %2574 = vmatpush1.msra.mxu0 0.0
        %2575 = vmatprep.subr.mxu0 0.0
        %2576 = vmatpush1.msra.mxu0 0.0
        %2577 = vmatprep.subr.mxu0 0.0
        %2578 = vmatpush1.msra.mxu0 0.0
        %2579 = vmatprep.subr.mxu0 0.0
        %2580 = vmatpush1.msra.mxu0 0.0
        %2581 = vmatprep.subr.mxu0 0.0
        %2582 = vmatpush1.msra.mxu0 0.0
        %2583 = vmatprep.subr.mxu0 0.0
        %2584 = vmatpush1.msra.mxu0 0.0
        %2585 = vmatprep.subr.mxu0 0.0
        %2586 = vmatpush1.msra.mxu0 0.0
        %2587 = vmatprep.subr.mxu0 0.0
        %2588 = vmatpush1.msra.mxu0 0.0
        %2589 = vmatprep.subr.mxu0 0.0
        %2590 = vmatpush1.msra.mxu0 0.0
        %2591 = vmatprep.subr.mxu0 0.0
        %2592 = vmatpush1.msra.mxu0 0.0
        %2593 = vmatprep.subr.mxu0 0.0
        %2594 = vmatpush1.msra.mxu0 0.0
        %2595 = vmatprep.subr.mxu0 0.0
        %2596 = vmatpush1.msra.mxu0 0.0
        %2597 = vmatprep.subr.mxu0 0.0
        %2598 = vmatpush1.msra.mxu0 0.0
        %2599 = vmatprep.subr.mxu0 0.0
        %2600 = vmatpush1.msra.mxu0 0.0
        %2601 = vmatprep.subr.mxu0 0.0
        %2602 = vmatpush1.msra.mxu0 0.0
        %2603 = vmatprep.subr.mxu0 0.0
        %2604 = vmatpush1.msra.mxu0 0.0
        %2605 = vmatprep.subr.mxu0 0.0
        %2606 = vmatpush1.msra.mxu0 0.0
        %2607 = vmatprep.subr.mxu0 0.0
        %2608 = vmatpush1.msra.mxu0 0.0
        %2609 = vmatprep.mubr.f32.mxu0 0.0
        %2610 = vmatmul.mubr.f32.gmra.mrb[0].mxu0 %v2056
        %v2611 = vpop.f32.mrb[0].mxu0
        %v2612 = vadd.f32 0.0, %v2611
        %v2613 = vpop.f32.mrb[0].mxu0
        %2614 = vmatprep.mubr.f32.mxu0 0.0
        %2615 = vmatmul.mubr.f32.gmra.mrb[0].mxu0 %v2059
        %v2616 = vpop.f32.mrb[0].mxu0
        %v2617 = vadd.f32 0.0, %v2616
        %v2618 = vpop.f32.mrb[0].mxu0
        %2619 = vmatprep.mubr.f32.mxu0 0.0
        %2620 = vmatmul.mubr.f32.gmra.mrb[0].mxu0 %v2062
        %v2621 = vpop.f32.mrb[0].mxu0
        %v2622 = vadd.f32 0.0, %v2621
        %v2623 = vpop.f32.mrb[0].mxu0
        %2624 = vmatprep.mubr.f32.mxu0 0.0
        %2625 = vmatmul.mubr.f32.gmra.mrb[0].mxu0 %v2065
        %v2626 = vpop.f32.mrb[0].mxu0
        %v2627 = vadd.f32 0.0, %v2626
        %v2628 = vpop.f32.mrb[0].mxu0
        %2629 = vdwg.mxu0
        %v2630 = vmul.f32 %v1977, %v2138
        %v2631 = vmul.f32 %v1978, %v2143
        %v2632 = vmul.f32 %v1979, %v2148
        %v2633 = vmul.f32 %v1980, %v2153
        %v2634 = vmul.f32 %v1977, %v2296
        %v2635 = vmul.f32 %v1978, %v2301
        %v2636 = vmul.f32 %v1979, %v2306
        %v2637 = vmul.f32 %v1980, %v2311
        %2638 = vmatprep.subr.mxu0 0.0
        %2639 = vmatpush1.msra.mxu0 %v1038
        %2640 = vmatprep.subr.mxu0 0.0
        %2641 = vmatpush1.msra.mxu0 %v1039
        %2642 = vmatprep.subr.mxu0 0.0
        %2643 = vmatpush1.msra.mxu0 %v1040
        %2644 = vmatprep.subr.mxu0 0.0
        %2645 = vmatpush1.msra.mxu0 %v1041
        %2646 = vmatprep.subr.mxu0 0.0
        %2647 = vmatpush1.msra.mxu0 %v1042
        %2648 = vmatprep.subr.mxu0 0.0
        %2649 = vmatpush1.msra.mxu0 %v1043
        %2650 = vmatprep.subr.mxu0 0.0
        %2651 = vmatpush1.msra.mxu0 %v1044
        %2652 = vmatprep.subr.mxu0 0.0
        %2653 = vmatpush1.msra.mxu0 %v1045
        %2654 = vmatprep.subr.mxu0 0.0
        %2655 = vmatpush1.msra.mxu0 %v1046
        %2656 = vmatprep.subr.mxu0 0.0
        %2657 = vmatpush1.msra.mxu0 %v1047
        %2658 = vmatprep.subr.mxu0 0.0
        %2659 = vmatpush1.msra.mxu0 %v1048
        %2660 = vmatprep.subr.mxu0 0.0
        %2661 = vmatpush1.msra.mxu0 %v1049
        %2662 = vmatprep.subr.mxu0 0.0
        %2663 = vmatpush1.msra.mxu0 %v1050
        %2664 = vmatprep.subr.mxu0 0.0
        %2665 = vmatpush1.msra.mxu0 %v1051
        %2666 = vmatprep.subr.mxu0 0.0
        %2667 = vmatpush1.msra.mxu0 %v1052
        %2668 = vmatprep.subr.mxu0 0.0
        %2669 = vmatpush1.msra.mxu0 %v1053
        %2670 = vmatprep.subr.mxu0 0.0
        %2671 = vmatpush1.msra.mxu0 0.0
        %2672 = vmatprep.subr.mxu0 0.0
        %2673 = vmatpush1.msra.mxu0 0.0
        %2674 = vmatprep.subr.mxu0 0.0
        %2675 = vmatpush1.msra.mxu0 0.0
        %2676 = vmatprep.subr.mxu0 0.0
        %2677 = vmatpush1.msra.mxu0 0.0
        %2678 = vmatprep.subr.mxu0 0.0
        %2679 = vmatpush1.msra.mxu0 0.0
        %2680 = vmatprep.subr.mxu0 0.0
        %2681 = vmatpush1.msra.mxu0 0.0
        %2682 = vmatprep.subr.mxu0 0.0
        %2683 = vmatpush1.msra.mxu0 0.0
        %2684 = vmatprep.subr.mxu0 0.0
        %2685 = vmatpush1.msra.mxu0 0.0
        %2686 = vmatprep.subr.mxu0 0.0
        %2687 = vmatpush1.msra.mxu0 0.0
        %2688 = vmatprep.subr.mxu0 0.0
        %2689 = vmatpush1.msra.mxu0 0.0
        %2690 = vmatprep.subr.mxu0 0.0
        %2691 = vmatpush1.msra.mxu0 0.0
        %2692 = vmatprep.subr.mxu0 0.0
        %2693 = vmatpush1.msra.mxu0 0.0
        %2694 = vmatprep.subr.mxu0 0.0
        %2695 = vmatpush1.msra.mxu0 0.0
        %2696 = vmatprep.subr.mxu0 0.0
        %2697 = vmatpush1.msra.mxu0 0.0
        %2698 = vmatprep.subr.mxu0 0.0
        %2699 = vmatpush1.msra.mxu0 0.0
        %2700 = vmatprep.subr.mxu0 0.0
        %2701 = vmatpush1.msra.mxu0 0.0
        %2702 = vmatprep.mubr.f32.mxu0 0.0
        %2703 = vmatmul.mubr.f32.gmra.mrb[0].mxu0 %v2634
        %v2704 = vpop.f32.mrb[0].mxu0
        %v2705 = vadd.f32 0.0, %v2704
        %v2706 = vpop.f32.mrb[0].mxu0
        %2707 = vmatprep.mubr.f32.mxu0 0.0
        %2708 = vmatmul.mubr.f32.gmra.mrb[0].mxu0 %v2635
        %v2709 = vpop.f32.mrb[0].mxu0
        %v2710 = vadd.f32 0.0, %v2709
        %v2711 = vpop.f32.mrb[0].mxu0
        %2712 = vmatprep.mubr.f32.mxu0 0.0
        %2713 = vmatmul.mubr.f32.gmra.mrb[0].mxu0 %v2636
        %v2714 = vpop.f32.mrb[0].mxu0
        %v2715 = vadd.f32 0.0, %v2714
        %v2716 = vpop.f32.mrb[0].mxu0
        %2717 = vmatprep.mubr.f32.mxu0 0.0
        %2718 = vmatmul.mubr.f32.gmra.mrb[0].mxu0 %v2637
        %v2719 = vpop.f32.mrb[0].mxu0
        %v2720 = vadd.f32 0.0, %v2719
        %v2721 = vpop.f32.mrb[0].mxu0
        %2722 = vdwg.mxu0
        %2723 = vmatprep.subr.mxu0 0.0
        %2724 = vmatpush1.msra.mxu0 %v1014
        %2725 = vmatprep.subr.mxu0 0.0
        %2726 = vmatpush1.msra.mxu0 %v1015
        %2727 = vmatprep.subr.mxu0 0.0
        %2728 = vmatpush1.msra.mxu0 %v1016
        %2729 = vmatprep.subr.mxu0 0.0
        %2730 = vmatpush1.msra.mxu0 %v1017
        %2731 = vmatprep.subr.mxu0 0.0
        %2732 = vmatpush1.msra.mxu0 %v1018
        %2733 = vmatprep.subr.mxu0 0.0
        %2734 = vmatpush1.msra.mxu0 %v1019
        %2735 = vmatprep.subr.mxu0 0.0
        %2736 = vmatpush1.msra.mxu0 %v1020
        %2737 = vmatprep.subr.mxu0 0.0
        %2738 = vmatpush1.msra.mxu0 %v1021
        %2739 = vmatprep.subr.mxu0 0.0
        %2740 = vmatpush1.msra.mxu0 %v1022
        %2741 = vmatprep.subr.mxu0 0.0
        %2742 = vmatpush1.msra.mxu0 %v1023
        %2743 = vmatprep.subr.mxu0 0.0
        %2744 = vmatpush1.msra.mxu0 %v1024
        %2745 = vmatprep.subr.mxu0 0.0
        %2746 = vmatpush1.msra.mxu0 %v1025
        %2747 = vmatprep.subr.mxu0 0.0
        %2748 = vmatpush1.msra.mxu0 %v1026
        %2749 = vmatprep.subr.mxu0 0.0
        %2750 = vmatpush1.msra.mxu0 %v1027
        %2751 = vmatprep.subr.mxu0 0.0
        %2752 = vmatpush1.msra.mxu0 %v1028
        %2753 = vmatprep.subr.mxu0 0.0
        %2754 = vmatpush1.msra.mxu0 %v1029
        %2755 = vmatprep.subr.mxu0 0.0
        %2756 = vmatpush1.msra.mxu0 0.0
        %2757 = vmatprep.subr.mxu0 0.0
        %2758 = vmatpush1.msra.mxu0 0.0
        %2759 = vmatprep.subr.mxu0 0.0
        %2760 = vmatpush1.msra.mxu0 0.0
        %2761 = vmatprep.subr.mxu0 0.0
        %2762 = vmatpush1.msra.mxu0 0.0
        %2763 = vmatprep.subr.mxu0 0.0
        %2764 = vmatpush1.msra.mxu0 0.0
        %2765 = vmatprep.subr.mxu0 0.0
        %2766 = vmatpush1.msra.mxu0 0.0
        %2767 = vmatprep.subr.mxu0 0.0
        %2768 = vmatpush1.msra.mxu0 0.0
        %2769 = vmatprep.subr.mxu0 0.0
        %2770 = vmatpush1.msra.mxu0 0.0
        %2771 = vmatprep.subr.mxu0 0.0
        %2772 = vmatpush1.msra.mxu0 0.0
        %2773 = vmatprep.subr.mxu0 0.0
        %2774 = vmatpush1.msra.mxu0 0.0
        %2775 = vmatprep.subr.mxu0 0.0
        %2776 = vmatpush1.msra.mxu0 0.0
        %2777 = vmatprep.subr.mxu0 0.0
        %2778 = vmatpush1.msra.mxu0 0.0
        %2779 = vmatprep.subr.mxu0 0.0
        %2780 = vmatpush1.msra.mxu0 0.0
        %2781 = vmatprep.subr.mxu0 0.0
        %2782 = vmatpush1.msra.mxu0 0.0
        %2783 = vmatprep.subr.mxu0 0.0
        %2784 = vmatpush1.msra.mxu0 0.0
        %2785 = vmatprep.subr.mxu0 0.0
        %2786 = vmatpush1.msra.mxu0 0.0
        %2787 = vmatprep.mubr.f32.mxu0 0.0
        %2788 = vmatmul.mubr.f32.gmra.mrb[0].mxu0 %v2630
        %v2789 = vpop.f32.mrb[0].mxu0
        %v2790 = vadd.f32 %v2705, %v2789
        %v2791 = vpop.f32.mrb[0].mxu0
        %2792 = vmatprep.mubr.f32.mxu0 0.0
        %2793 = vmatmul.mubr.f32.gmra.mrb[0].mxu0 %v2631
        %v2794 = vpop.f32.mrb[0].mxu0
        %v2795 = vadd.f32 %v2710, %v2794
        %v2796 = vpop.f32.mrb[0].mxu0
        %2797 = vmatprep.mubr.f32.mxu0 0.0
        %2798 = vmatmul.mubr.f32.gmra.mrb[0].mxu0 %v2632
        %v2799 = vpop.f32.mrb[0].mxu0
        %v2800 = vadd.f32 %v2715, %v2799
        %v2801 = vpop.f32.mrb[0].mxu0
        %2802 = vmatprep.mubr.f32.mxu0 0.0
        %2803 = vmatmul.mubr.f32.gmra.mrb[0].mxu0 %v2633
        %v2804 = vpop.f32.mrb[0].mxu0
        %v2805 = vadd.f32 %v2720, %v2804
        %v2806 = vpop.f32.mrb[0].mxu0
        %2807 = vdwg.mxu0
        %v2808 = vmul.f32 %v1977, %v2454
        %v2809 = vmul.f32 %v1978, %v2459
        %v2810 = vmul.f32 %v1979, %v2464
        %v2811 = vmul.f32 %v1980, %v2469
        %2812 = vmatprep.subr.mxu0 0.0
        %2813 = vmatpush1.msra.mxu0 %v1232
        %2814 = vmatprep.subr.mxu0 0.0
        %2815 = vmatpush1.msra.mxu0 %v1233
        %2816 = vmatprep.subr.mxu0 0.0
        %2817 = vmatpush1.msra.mxu0 %v1234
        %2818 = vmatprep.subr.mxu0 0.0
        %2819 = vmatpush1.msra.mxu0 %v1235
        %2820 = vmatprep.subr.mxu0 0.0
        %2821 = vmatpush1.msra.mxu0 %v1236
        %2822 = vmatprep.subr.mxu0 0.0
        %2823 = vmatpush1.msra.mxu0 %v1237
        %2824 = vmatprep.subr.mxu0 0.0
        %2825 = vmatpush1.msra.mxu0 %v1238
        %2826 = vmatprep.subr.mxu0 0.0
        %2827 = vmatpush1.msra.mxu0 %v1239
        %2828 = vmatprep.subr.mxu0 0.0
        %2829 = vmatpush1.msra.mxu0 %v1240
        %2830 = vmatprep.subr.mxu0 0.0
        %2831 = vmatpush1.msra.mxu0 %v1241
        %2832 = vmatprep.subr.mxu0 0.0
        %2833 = vmatpush1.msra.mxu0 %v1242
        %2834 = vmatprep.subr.mxu0 0.0
        %2835 = vmatpush1.msra.mxu0 %v1243
        %2836 = vmatprep.subr.mxu0 0.0
        %2837 = vmatpush1.msra.mxu0 %v1244
        %2838 = vmatprep.subr.mxu0 0.0
        %2839 = vmatpush1.msra.mxu0 %v1245
        %2840 = vmatprep.subr.mxu0 0.0
        %2841 = vmatpush1.msra.mxu0 %v1246
        %2842 = vmatprep.subr.mxu0 0.0
        %2843 = vmatpush1.msra.mxu0 %v1247
        %2844 = vmatprep.subr.mxu0 0.0
        %2845 = vmatpush1.msra.mxu0 0.0
        %2846 = vmatprep.subr.mxu0 0.0
        %2847 = vmatpush1.msra.mxu0 0.0
        %2848 = vmatprep.subr.mxu0 0.0
        %2849 = vmatpush1.msra.mxu0 0.0
        %2850 = vmatprep.subr.mxu0 0.0
        %2851 = vmatpush1.msra.mxu0 0.0
        %2852 = vmatprep.subr.mxu0 0.0
        %2853 = vmatpush1.msra.mxu0 0.0
        %2854 = vmatprep.subr.mxu0 0.0
        %2855 = vmatpush1.msra.mxu0 0.0
        %2856 = vmatprep.subr.mxu0 0.0
        %2857 = vmatpush1.msra.mxu0 0.0
        %2858 = vmatprep.subr.mxu0 0.0
        %2859 = vmatpush1.msra.mxu0 0.0
        %2860 = vmatprep.subr.mxu0 0.0
        %2861 = vmatpush1.msra.mxu0 0.0
        %2862 = vmatprep.subr.mxu0 0.0
        %2863 = vmatpush1.msra.mxu0 0.0
        %2864 = vmatprep.subr.mxu0 0.0
        %2865 = vmatpush1.msra.mxu0 0.0
        %2866 = vmatprep.subr.mxu0 0.0
        %2867 = vmatpush1.msra.mxu0 0.0
        %2868 = vmatprep.subr.mxu0 0.0
        %2869 = vmatpush1.msra.mxu0 0.0
        %2870 = vmatprep.subr.mxu0 0.0
        %2871 = vmatpush1.msra.mxu0 0.0
        %2872 = vmatprep.subr.mxu0 0.0
        %2873 = vmatpush1.msra.mxu0 0.0
        %2874 = vmatprep.subr.mxu0 0.0
        %2875 = vmatpush1.msra.mxu0 0.0
        %2876 = vmatprep.mubr.f32.mxu0 0.0
        %2877 = vmatmul.mubr.f32.gmra.mrb[0].mxu0 %v2808
        %v2878 = vpop.f32.mrb[0].mxu0
        %v2879 = vadd.f32 0.0, %v2878
        %v2880 = vpop.f32.mrb[0].mxu0
        %2881 = vmatprep.mubr.f32.mxu0 0.0
        %2882 = vmatmul.mubr.f32.gmra.mrb[0].mxu0 %v2809
        %v2883 = vpop.f32.mrb[0].mxu0
        %v2884 = vadd.f32 0.0, %v2883
        %v2885 = vpop.f32.mrb[0].mxu0
        %2886 = vmatprep.mubr.f32.mxu0 0.0
        %2887 = vmatmul.mubr.f32.gmra.mrb[0].mxu0 %v2810
        %v2888 = vpop.f32.mrb[0].mxu0
        %v2889 = vadd.f32 0.0, %v2888
        %v2890 = vpop.f32.mrb[0].mxu0
        %2891 = vmatprep.mubr.f32.mxu0 0.0
        %2892 = vmatmul.mubr.f32.gmra.mrb[0].mxu0 %v2811
        %v2893 = vpop.f32.mrb[0].mxu0
        %v2894 = vadd.f32 0.0, %v2893
        %v2895 = vpop.f32.mrb[0].mxu0
        %2896 = vdwg.mxu0
        %v2897 = vadd.f32 %v2790, %v2879
        %v2898 = vadd.f32 %v2795, %v2884
        %v2899 = vadd.f32 %v2800, %v2889
        %v2900 = vadd.f32 %v2805, %v2894
        %v2901 = vmul.f32 %v1977, %v2612
        %v2902 = vmul.f32 %v1978, %v2617
        %v2903 = vmul.f32 %v1979, %v2622
        %v2904 = vmul.f32 %v1980, %v2627
        %2905 = vmatprep.subr.mxu0 0.0
        %2906 = vmatpush1.msra.mxu0 %v1345
        %2907 = vmatprep.subr.mxu0 0.0
        %2908 = vmatpush1.msra.mxu0 %v1346
        %2909 = vmatprep.subr.mxu0 0.0
        %2910 = vmatpush1.msra.mxu0 %v1347
        %2911 = vmatprep.subr.mxu0 0.0
        %2912 = vmatpush1.msra.mxu0 %v1348
        %2913 = vmatprep.subr.mxu0 0.0
        %2914 = vmatpush1.msra.mxu0 %v1349
        %2915 = vmatprep.subr.mxu0 0.0
        %2916 = vmatpush1.msra.mxu0 %v1350
        %2917 = vmatprep.subr.mxu0 0.0
        %2918 = vmatpush1.msra.mxu0 %v1351
        %2919 = vmatprep.subr.mxu0 0.0
        %2920 = vmatpush1.msra.mxu0 %v1352
        %2921 = vmatprep.subr.mxu0 0.0
        %2922 = vmatpush1.msra.mxu0 %v1353
        %2923 = vmatprep.subr.mxu0 0.0
        %2924 = vmatpush1.msra.mxu0 %v1354
        %2925 = vmatprep.subr.mxu0 0.0
        %2926 = vmatpush1.msra.mxu0 %v1355
        %2927 = vmatprep.subr.mxu0 0.0
        %2928 = vmatpush1.msra.mxu0 %v1356
        %2929 = vmatprep.subr.mxu0 0.0
        %2930 = vmatpush1.msra.mxu0 %v1357
        %2931 = vmatprep.subr.mxu0 0.0
        %2932 = vmatpush1.msra.mxu0 %v1358
        %2933 = vmatprep.subr.mxu0 0.0
        %2934 = vmatpush1.msra.mxu0 %v1359
        %2935 = vmatprep.subr.mxu0 0.0
        %2936 = vmatpush1.msra.mxu0 %v1360
        %2937 = vmatprep.subr.mxu0 0.0
        %2938 = vmatpush1.msra.mxu0 0.0
        %2939 = vmatprep.subr.mxu0 0.0
        %2940 = vmatpush1.msra.mxu0 0.0
        %2941 = vmatprep.subr.mxu0 0.0
        %2942 = vmatpush1.msra.mxu0 0.0
        %2943 = vmatprep.subr.mxu0 0.0
        %2944 = vmatpush1.msra.mxu0 0.0
        %2945 = vmatprep.subr.mxu0 0.0
        %2946 = vmatpush1.msra.mxu0 0.0
        %2947 = vmatprep.subr.mxu0 0.0
        %2948 = vmatpush1.msra.mxu0 0.0
        %2949 = vmatprep.subr.mxu0 0.0
        %2950 = vmatpush1.msra.mxu0 0.0
        %2951 = vmatprep.subr.mxu0 0.0
        %2952 = vmatpush1.msra.mxu0 0.0
        %2953 = vmatprep.subr.mxu0 0.0
        %2954 = vmatpush1.msra.mxu0 0.0
        %2955 = vmatprep.subr.mxu0 0.0
        %2956 = vmatpush1.msra.mxu0 0.0
        %2957 = vmatprep.subr.mxu0 0.0
        %2958 = vmatpush1.msra.mxu0 0.0
        %2959 = vmatprep.subr.mxu0 0.0
        %2960 = vmatpush1.msra.mxu0 0.0
        %2961 = vmatprep.subr.mxu0 0.0
        %2962 = vmatpush1.msra.mxu0 0.0
        %2963 = vmatprep.subr.mxu0 0.0
        %2964 = vmatpush1.msra.mxu0 0.0
        %2965 = vmatprep.subr.mxu0 0.0
        %2966 = vmatpush1.msra.mxu0 0.0
        %2967 = vmatprep.subr.mxu0 0.0
        %2968 = vmatpush1.msra.mxu0 0.0
        %2969 = vmatprep.mubr.f32.mxu0 0.0
        %2970 = vmatmul.mubr.f32.gmra.mrb[0].mxu0 %v2901
        %v2971 = vpop.f32.mrb[0].mxu0
        %v2972 = vadd.f32 0.0, %v2971
        %v2973 = vpop.f32.mrb[0].mxu0
        %2974 = vmatprep.mubr.f32.mxu0 0.0
        %2975 = vmatmul.mubr.f32.gmra.mrb[0].mxu0 %v2902
        %v2976 = vpop.f32.mrb[0].mxu0
        %v2977 = vadd.f32 0.0, %v2976
        %v2978 = vpop.f32.mrb[0].mxu0
        %2979 = vmatprep.mubr.f32.mxu0 0.0
        %2980 = vmatmul.mubr.f32.gmra.mrb[0].mxu0 %v2903
        %v2981 = vpop.f32.mrb[0].mxu0
        %v2982 = vadd.f32 0.0, %v2981
        %v2983 = vpop.f32.mrb[0].mxu0
        %2984 = vmatprep.mubr.f32.mxu0 0.0
        %2985 = vmatmul.mubr.f32.gmra.mrb[0].mxu0 %v2904
        %v2986 = vpop.f32.mrb[0].mxu0
        %v2987 = vadd.f32 0.0, %v2986
        %v2988 = vpop.f32.mrb[0].mxu0
        %2989 = vdwg.mxu0
        %v2990 = vadd.f32 %v2897, %v2972
        %v2991 = vadd.f32 %v2898, %v2977
        %v2992 = vadd.f32 %v2899, %v2982
        %v2993 = vadd.f32 %v2900, %v2987
        %2994 = vmatprep.subr.mxu0 0.0
        %2995 = vmatpush1.msra.mxu0 %v2990
        %2996 = vmatprep.subr.mxu0 0.0
        %2997 = vmatpush1.msra.mxu0 %v2991
        %2998 = vmatprep.subr.mxu0 0.0
        %2999 = vmatpush1.msra.mxu0 %v2992
        %3000 = vmatprep.subr.mxu0 0.0
        %3001 = vmatpush1.msra.mxu0 %v2993
        %3002 = vmatprep.subr.mxu0 0.0
        %3003 = vmatpush1.msra.mxu0 0.0
        %3004 = vmatprep.subr.mxu0 0.0
        %3005 = vmatpush1.msra.mxu0 0.0
        %3006 = vmatprep.subr.mxu0 0.0
        %3007 = vmatpush1.msra.mxu0 0.0
        %3008 = vmatprep.subr.mxu0 0.0
        %3009 = vmatpush1.msra.mxu0 0.0
        %3010 = vmatprep.subr.mxu0 0.0
        %3011 = vmatpush1.msra.mxu0 0.0
        %3012 = vmatprep.subr.mxu0 0.0
        %3013 = vmatpush1.msra.mxu0 0.0
        %3014 = vmatprep.subr.mxu0 0.0
        %3015 = vmatpush1.msra.mxu0 0.0
        %3016 = vmatprep.subr.mxu0 0.0
        %3017 = vmatpush1.msra.mxu0 0.0
        %3018 = vmatprep.subr.mxu0 0.0
        %3019 = vmatpush1.msra.mxu0 0.0
        %3020 = vmatprep.subr.mxu0 0.0
        %3021 = vmatpush1.msra.mxu0 0.0
        %3022 = vmatprep.subr.mxu0 0.0
        %3023 = vmatpush1.msra.mxu0 0.0
        %3024 = vmatprep.subr.mxu0 0.0
        %3025 = vmatpush1.msra.mxu0 0.0
        %3026 = vmatprep.subr.mxu0 0.0
        %3027 = vmatpush1.msra.mxu0 0.0
        %3028 = vmatprep.subr.mxu0 0.0
        %3029 = vmatpush1.msra.mxu0 0.0
        %3030 = vmatprep.subr.mxu0 0.0
        %3031 = vmatpush1.msra.mxu0 0.0
        %3032 = vmatprep.subr.mxu0 0.0
        %3033 = vmatpush1.msra.mxu0 0.0
        %3034 = vmatprep.subr.mxu0 0.0
        %3035 = vmatpush1.msra.mxu0 0.0
        %3036 = vmatprep.subr.mxu0 0.0
        %3037 = vmatpush1.msra.mxu0 0.0
        %3038 = vmatprep.subr.mxu0 0.0
        %3039 = vmatpush1.msra.mxu0 0.0
        %3040 = vmatprep.subr.mxu0 0.0
        %3041 = vmatpush1.msra.mxu0 0.0
        %3042 = vmatprep.subr.mxu0 0.0
        %3043 = vmatpush1.msra.mxu0 0.0
        %3044 = vmatprep.subr.mxu0 0.0
        %3045 = vmatpush1.msra.mxu0 0.0
        %3046 = vmatprep.subr.mxu0 0.0
        %3047 = vmatpush1.msra.mxu0 0.0
        %3048 = vmatprep.subr.mxu0 0.0
        %3049 = vmatpush1.msra.mxu0 0.0
        %3050 = vmatprep.subr.mxu0 0.0
        %3051 = vmatpush1.msra.mxu0 0.0
        %3052 = vmatprep.subr.mxu0 0.0
        %3053 = vmatpush1.msra.mxu0 0.0
        %3054 = vmatprep.subr.mxu0 0.0
        %3055 = vmatpush1.msra.mxu0 0.0
        %3056 = vmatprep.subr.mxu0 0.0
        %3057 = vmatpush1.msra.mxu0 0.0
        %3058 = vmatprep.mubr.f32.mxu0 0.0
        %3059 = vmatmul.mubr.f32.gmra.mrb[0].mxu0 %v1459
        %v3060 = vpop.f32.mrb[0].mxu0
        %v3061 = vadd.f32 0.0, %v3060
        %v3062 = vpop.f32.mrb[0].mxu0
        %3063 = vdwg.mxu0
        %3064 = vmatprep.subr.mxu0 0.0
        %3065 = vmatpush1.msra.mxu0 %v281
        %3066 = vmatprep.subr.mxu0 0.0
        %3067 = vmatpush1.msra.mxu0 %v282
        %3068 = vmatprep.subr.mxu0 0.0
        %3069 = vmatpush1.msra.mxu0 %v283
        %3070 = vmatprep.subr.mxu0 0.0
        %3071 = vmatpush1.msra.mxu0 %v284
        %3072 = vmatprep.subr.mxu0 0.0
        %3073 = vmatpush1.msra.mxu0 %v285
        %3074 = vmatprep.subr.mxu0 0.0
        %3075 = vmatpush1.msra.mxu0 %v286
        %3076 = vmatprep.subr.mxu0 0.0
        %3077 = vmatpush1.msra.mxu0 %v287
        %3078 = vmatprep.subr.mxu0 0.0
        %3079 = vmatpush1.msra.mxu0 %v288
        %3080 = vmatprep.subr.mxu0 0.0
        %3081 = vmatpush1.msra.mxu0 %v289
        %3082 = vmatprep.subr.mxu0 0.0
        %3083 = vmatpush1.msra.mxu0 %v290
        %3084 = vmatprep.subr.mxu0 0.0
        %3085 = vmatpush1.msra.mxu0 %v291
        %3086 = vmatprep.subr.mxu0 0.0
        %3087 = vmatpush1.msra.mxu0 %v292
        %3088 = vmatprep.subr.mxu0 0.0
        %3089 = vmatpush1.msra.mxu0 %v293
        %3090 = vmatprep.subr.mxu0 0.0
        %3091 = vmatpush1.msra.mxu0 %v294
        %3092 = vmatprep.subr.mxu0 0.0
        %3093 = vmatpush1.msra.mxu0 %v295
        %3094 = vmatprep.subr.mxu0 0.0
        %3095 = vmatpush1.msra.mxu0 %v296
        %3096 = vmatprep.subr.mxu0 0.0
        %3097 = vmatpush1.msra.mxu0 0.0
        %3098 = vmatprep.subr.mxu0 0.0
        %3099 = vmatpush1.msra.mxu0 0.0
        %3100 = vmatprep.subr.mxu0 0.0
        %3101 = vmatpush1.msra.mxu0 0.0
        %3102 = vmatprep.subr.mxu0 0.0
        %3103 = vmatpush1.msra.mxu0 0.0
        %3104 = vmatprep.subr.mxu0 0.0
        %3105 = vmatpush1.msra.mxu0 0.0
        %3106 = vmatprep.subr.mxu0 0.0
        %3107 = vmatpush1.msra.mxu0 0.0
        %3108 = vmatprep.subr.mxu0 0.0
        %3109 = vmatpush1.msra.mxu0 0.0
        %3110 = vmatprep.subr.mxu0 0.0
        %3111 = vmatpush1.msra.mxu0 0.0
        %3112 = vmatprep.subr.mxu0 0.0
        %3113 = vmatpush1.msra.mxu0 0.0
        %3114 = vmatprep.subr.mxu0 0.0
        %3115 = vmatpush1.msra.mxu0 0.0
        %3116 = vmatprep.subr.mxu0 0.0
        %3117 = vmatpush1.msra.mxu0 0.0
        %3118 = vmatprep.subr.mxu0 0.0
        %3119 = vmatpush1.msra.mxu0 0.0
        %3120 = vmatprep.subr.mxu0 0.0
        %3121 = vmatpush1.msra.mxu0 0.0
        %3122 = vmatprep.subr.mxu0 0.0
        %3123 = vmatpush1.msra.mxu0 0.0
        %3124 = vmatprep.subr.mxu0 0.0
        %3125 = vmatpush1.msra.mxu0 0.0
        %3126 = vmatprep.subr.mxu0 0.0
        %3127 = vmatpush1.msra.mxu0 0.0
        %3128 = vmatprep.mubr.f32.mxu0 0.0
        %3129 = vmatmul.mubr.f32.gmra.mrb[0].mxu0 %v3061
        %v3130 = vpop.f32.mrb[0].mxu0
        %v3131 = vadd.f32 0.0, %v3130
        %v3132 = vpop.f32.mrb[0].mxu0
        %3133 = vdwg.mxu0
        %v3134 = vmul.f32 %v3131, 0.25
        %3135 = vrot.lane.b32.xlu0 %v375, 96
        %v3136 = vpop.permute.xlu0 %3135
        %3137 = vrot.lane.b32.xlu0 %v376, 96
        %v3138 = vpop.permute.xlu0 %3137
        %3139 = vrot.lane.b32.xlu0 %v377, 96
        %v3140 = vpop.permute.xlu0 %3139
        %3141 = vrot.lane.b32.xlu0 %v378, 96
        %v3142 = vpop.permute.xlu0 %3141
        %3147 = vrot.lane.b32.xlu0 %v1605, 96
        %v3148 = vpop.permute.xlu0 %3147
        %v3151 = vsel %vm301, %v3134, 0
        %3153 = vmatprep.subr.mxu0 0.0
        %3154 = vmatpush1.msra.mxu0 %v3136
        %3155 = vmatprep.subr.mxu0 0.0
        %3156 = vmatpush1.msra.mxu0 %v3138
        %3157 = vmatprep.subr.mxu0 0.0
        %3158 = vmatpush1.msra.mxu0 %v3140
        %3159 = vmatprep.subr.mxu0 0.0
        %3160 = vmatpush1.msra.mxu0 %v3142
        %3161 = vmatprep.subr.mxu0 0.0
        %3162 = vmatpush1.msra.mxu0 0.0
        %3163 = vmatprep.subr.mxu0 0.0
        %3164 = vmatpush1.msra.mxu0 0.0
        %3165 = vmatprep.subr.mxu0 0.0
        %3166 = vmatpush1.msra.mxu0 0.0
        %3167 = vmatprep.subr.mxu0 0.0
        %3168 = vmatpush1.msra.mxu0 0.0
        %3169 = vmatprep.subr.mxu0 0.0
        %3170 = vmatpush1.msra.mxu0 0.0
        %3171 = vmatprep.subr.mxu0 0.0
        %3172 = vmatpush1.msra.mxu0 0.0
        %3173 = vmatprep.subr.mxu0 0.0
        %3174 = vmatpush1.msra.mxu0 0.0
        %3175 = vmatprep.subr.mxu0 0.0
        %3176 = vmatpush1.msra.mxu0 0.0
        %3177 = vmatprep.subr.mxu0 0.0
        %3178 = vmatpush1.msra.mxu0 0.0
        %3179 = vmatprep.subr.mxu0 0.0
        %3180 = vmatpush1.msra.mxu0 0.0
        %3181 = vmatprep.subr.mxu0 0.0
        %3182 = vmatpush1.msra.mxu0 0.0
        %3183 = vmatprep.subr.mxu0 0.0
        %3184 = vmatpush1.msra.mxu0 0.0
        %3185 = vmatprep.subr.mxu0 0.0
        %3186 = vmatpush1.msra.mxu0 0.0
        %3187 = vmatprep.subr.mxu0 0.0
        %3188 = vmatpush1.msra.mxu0 0.0
        %3189 = vmatprep.subr.mxu0 0.0
        %3190 = vmatpush1.msra.mxu0 0.0
        %3191 = vmatprep.subr.mxu0 0.0
        %3192 = vmatpush1.msra.mxu0 0.0
        %3193 = vmatprep.subr.mxu0 0.0
        %3194 = vmatpush1.msra.mxu0 0.0
        %3195 = vmatprep.subr.mxu0 0.0
        %3196 = vmatpush1.msra.mxu0 0.0
        %3197 = vmatprep.subr.mxu0 0.0
        %3198 = vmatpush1.msra.mxu0 0.0
        %3199 = vmatprep.subr.mxu0 0.0
        %3200 = vmatpush1.msra.mxu0 0.0
        %3201 = vmatprep.subr.mxu0 0.0
        %3202 = vmatpush1.msra.mxu0 0.0
        %3203 = vmatprep.subr.mxu0 0.0
        %3204 = vmatpush1.msra.mxu0 0.0
        %3205 = vmatprep.subr.mxu0 0.0
        %3206 = vmatpush1.msra.mxu0 0.0
        %3207 = vmatprep.subr.mxu0 0.0
        %3208 = vmatpush1.msra.mxu0 0.0
        %3209 = vmatprep.subr.mxu0 0.0
        %3210 = vmatpush1.msra.mxu0 0.0
        %3211 = vmatprep.subr.mxu0 0.0
        %3212 = vmatpush1.msra.mxu0 0.0
        %3213 = vmatprep.subr.mxu0 0.0
        %3214 = vmatpush1.msra.mxu0 0.0
        %3215 = vmatprep.subr.mxu0 0.0
        %3216 = vmatpush1.msra.mxu0 0.0
        %3217 = vmatprep.mubr.f32.mxu0 0.0
        %3218 = vmatmul.mubr.f32.gmra.mrb[0].mxu0 %v3151
        %v3219 = vpop.f32.mrb[0].mxu0
        %v3220 = vadd.f32 %v3148, %v3219
        %v3221 = vpop.f32.mrb[0].mxu0
        %3222 = vdwg.mxu0
        %v3223 = vmax.f32 %v3220, 0.0
        %3224 = vrot.lane.b32.xlu0 %v380, 96
        %v3225 = vpop.permute.xlu0 %3224
        %3226 = vrot.lane.b32.xlu0 %v381, 96
        %v3227 = vpop.permute.xlu0 %3226
        %3230 = vrot.lane.b32.xlu0 %v1703, 96
        %v3231 = vpop.permute.xlu0 %3230
        %v3234 = vsel %vm457, %v3223, 0
        %3236 = vmatprep.subr.mxu0 0.0
        %3237 = vmatpush1.msra.mxu0 %v3225
        %3238 = vmatprep.subr.mxu0 0.0
        %3239 = vmatpush1.msra.mxu0 %v3227
        %3240 = vmatprep.subr.mxu0 0.0
        %3241 = vmatpush1.msra.mxu0 0.0
        %3242 = vmatprep.subr.mxu0 0.0
        %3243 = vmatpush1.msra.mxu0 0.0
        %3244 = vmatprep.subr.mxu0 0.0
        %3245 = vmatpush1.msra.mxu0 0.0
        %3246 = vmatprep.subr.mxu0 0.0
        %3247 = vmatpush1.msra.mxu0 0.0
        %3248 = vmatprep.subr.mxu0 0.0
        %3249 = vmatpush1.msra.mxu0 0.0
        %3250 = vmatprep.subr.mxu0 0.0
        %3251 = vmatpush1.msra.mxu0 0.0
        %3252 = vmatprep.subr.mxu0 0.0
        %3253 = vmatpush1.msra.mxu0 0.0
        %3254 = vmatprep.subr.mxu0 0.0
        %3255 = vmatpush1.msra.mxu0 0.0
        %3256 = vmatprep.subr.mxu0 0.0
        %3257 = vmatpush1.msra.mxu0 0.0
        %3258 = vmatprep.subr.mxu0 0.0
        %3259 = vmatpush1.msra.mxu0 0.0
        %3260 = vmatprep.subr.mxu0 0.0
        %3261 = vmatpush1.msra.mxu0 0.0
        %3262 = vmatprep.subr.mxu0 0.0
        %3263 = vmatpush1.msra.mxu0 0.0
        %3264 = vmatprep.subr.mxu0 0.0
        %3265 = vmatpush1.msra.mxu0 0.0
        %3266 = vmatprep.subr.mxu0 0.0
        %3267 = vmatpush1.msra.mxu0 0.0
        %3268 = vmatprep.subr.mxu0 0.0
        %3269 = vmatpush1.msra.mxu0 0.0
        %3270 = vmatprep.subr.mxu0 0.0
        %3271 = vmatpush1.msra.mxu0 0.0
        %3272 = vmatprep.subr.mxu0 0.0
        %3273 = vmatpush1.msra.mxu0 0.0
        %3274 = vmatprep.subr.mxu0 0.0
        %3275 = vmatpush1.msra.mxu0 0.0
        %3276 = vmatprep.subr.mxu0 0.0
        %3277 = vmatpush1.msra.mxu0 0.0
        %3278 = vmatprep.subr.mxu0 0.0
        %3279 = vmatpush1.msra.mxu0 0.0
        %3280 = vmatprep.subr.mxu0 0.0
        %3281 = vmatpush1.msra.mxu0 0.0
        %3282 = vmatprep.subr.mxu0 0.0
        %3283 = vmatpush1.msra.mxu0 0.0
        %3284 = vmatprep.subr.mxu0 0.0
        %3285 = vmatpush1.msra.mxu0 0.0
        %3286 = vmatprep.subr.mxu0 0.0
        %3287 = vmatpush1.msra.mxu0 0.0
        %3288 = vmatprep.subr.mxu0 0.0
        %3289 = vmatpush1.msra.mxu0 0.0
        %3290 = vmatprep.subr.mxu0 0.0
        %3291 = vmatpush1.msra.mxu0 0.0
        %3292 = vmatprep.subr.mxu0 0.0
        %3293 = vmatpush1.msra.mxu0 0.0
        %3294 = vmatprep.subr.mxu0 0.0
        %3295 = vmatpush1.msra.mxu0 0.0
        %3296 = vmatprep.subr.mxu0 0.0
        %3297 = vmatpush1.msra.mxu0 0.0
        %3298 = vmatprep.subr.mxu0 0.0
        %3299 = vmatpush1.msra.mxu0 0.0
        %3300 = vmatprep.mubr.f32.mxu0 0.0
        %3301 = vmatmul.mubr.f32.gmra.mrb[0].mxu0 %v3234
        %v3302 = vpop.f32.mrb[0].mxu0
        %v3303 = vadd.f32 %v3231, %v3302
        %v3304 = vpop.f32.mrb[0].mxu0
        %3305 = vdwg.mxu0
        %vm3306 = vcmask 27648
        %v3307 = vsel %vm3306, %v3303, -inf
        %3308 = vmax.xlane.f32.xlu0 %v3307
        %v3309 = vpop.xlane.xlu0 %3308
        %v3310 = vsub.f32 %v3303, %v3309
        %v3311 = vmul.f32 %v3310, 1.442695
        %v3312 = vpow.pop %v3311
        %v3313 = vsel %vm3306, %v3312, 0.0
        %3314 = vadd.xlane.f32.xlu0 %v3313
        %v3315 = vpop.xlane.xlu0 %3314
        %v3316 = vrcp.pop %v3315
        %v3317 = vmul.f32 %v3312, %v3316
        %v3318 = vsel %vm1789, %v1870, 0.0
        %v3319 = vrot.slane %v3318, 4
        %v3320 = vadd.f32 %v3318, %v3319
        %v3321 = vrot.slane %v3320, 2
        %v3322 = vadd.f32 %v3320, %v3321
        %v3323 = vrot.slane %v3322, 1
        %v3324 = vadd.f32 %v3322, %v3323
        %v3325 = vrcp.pop 4.0
        %v3326 = vmul.f32 %v3324, %v3325
        %v3327 = vsel %vm3306, %v3317, 0.0
        %v3328 = vrot.slane %v3327, 4
        %v3329 = vadd.f32 %v3327, %v3328
        %v3330 = vrot.slane %v3329, 2
        %v3331 = vadd.f32 %v3329, %v3330
        %v3332 = vrot.slane %v3331, 1
        %v3333 = vadd.f32 %v3331, %v3332
        %v3334 = vmul.f32 %v3333, %v3325
        %v3335 = vld [vmem:[#allocation4 + $0x120] sm:$0xff]
        %v3336 = vld [vmem:[#allocation4 + $0x128] sm:$0xff]
        %v3337 = vld [vmem:[#allocation4 + $0x130] sm:$0xff]
        %v3338 = vld [vmem:[#allocation4 + $0x138] sm:$0xff]
        %v3340 = vsel %vm457, %v3326, 0
        %3342 = vmatprep.subr.mxu0 0.0
        %3343 = vmatpush1.msra.mxu0 %v3337
        %3344 = vmatprep.subr.mxu0 0.0
        %3345 = vmatpush1.msra.mxu0 %v3338
        %3346 = vmatprep.subr.mxu0 0.0
        %3347 = vmatpush1.msra.mxu0 0.0
        %3348 = vmatprep.subr.mxu0 0.0
        %3349 = vmatpush1.msra.mxu0 0.0
        %3350 = vmatprep.subr.mxu0 0.0
        %3351 = vmatpush1.msra.mxu0 0.0
        %3352 = vmatprep.subr.mxu0 0.0
        %3353 = vmatpush1.msra.mxu0 0.0
        %3354 = vmatprep.subr.mxu0 0.0
        %3355 = vmatpush1.msra.mxu0 0.0
        %3356 = vmatprep.subr.mxu0 0.0
        %3357 = vmatpush1.msra.mxu0 0.0
        %3358 = vmatprep.subr.mxu0 0.0
        %3359 = vmatpush1.msra.mxu0 0.0
        %3360 = vmatprep.subr.mxu0 0.0
        %3361 = vmatpush1.msra.mxu0 0.0
        %3362 = vmatprep.subr.mxu0 0.0
        %3363 = vmatpush1.msra.mxu0 0.0
        %3364 = vmatprep.subr.mxu0 0.0
        %3365 = vmatpush1.msra.mxu0 0.0
        %3366 = vmatprep.subr.mxu0 0.0
        %3367 = vmatpush1.msra.mxu0 0.0
        %3368 = vmatprep.subr.mxu0 0.0
        %3369 = vmatpush1.msra.mxu0 0.0
        %3370 = vmatprep.subr.mxu0 0.0
        %3371 = vmatpush1.msra.mxu0 0.0
        %3372 = vmatprep.subr.mxu0 0.0
        %3373 = vmatpush1.msra.mxu0 0.0
        %3374 = vmatprep.subr.mxu0 0.0
        %3375 = vmatpush1.msra.mxu0 0.0
        %3376 = vmatprep.subr.mxu0 0.0
        %3377 = vmatpush1.msra.mxu0 0.0
        %3378 = vmatprep.subr.mxu0 0.0
        %3379 = vmatpush1.msra.mxu0 0.0
        %3380 = vmatprep.subr.mxu0 0.0
        %3381 = vmatpush1.msra.mxu0 0.0
        %3382 = vmatprep.subr.mxu0 0.0
        %3383 = vmatpush1.msra.mxu0 0.0
        %3384 = vmatprep.subr.mxu0 0.0
        %3385 = vmatpush1.msra.mxu0 0.0
        %3386 = vmatprep.subr.mxu0 0.0
        %3387 = vmatpush1.msra.mxu0 0.0
        %3388 = vmatprep.subr.mxu0 0.0
        %3389 = vmatpush1.msra.mxu0 0.0
        %3390 = vmatprep.subr.mxu0 0.0
        %3391 = vmatpush1.msra.mxu0 0.0
        %3392 = vmatprep.subr.mxu0 0.0
        %3393 = vmatpush1.msra.mxu0 0.0
        %3394 = vmatprep.subr.mxu0 0.0
        %3395 = vmatpush1.msra.mxu0 0.0
        %3396 = vmatprep.subr.mxu0 0.0
        %3397 = vmatpush1.msra.mxu0 0.0
        %3398 = vmatprep.subr.mxu0 0.0
        %3399 = vmatpush1.msra.mxu0 0.0
        %3400 = vmatprep.subr.mxu0 0.0
        %3401 = vmatpush1.msra.mxu0 0.0
        %3402 = vmatprep.subr.mxu0 0.0
        %3403 = vmatpush1.msra.mxu0 0.0
        %3404 = vmatprep.subr.mxu0 0.0
        %3405 = vmatpush1.msra.mxu0 0.0
        %3406 = vmatprep.mubr.f32.mxu0 0.0
        %3407 = vmatmul.mubr.f32.gmra.mrb[0].mxu0 %v3340
        %v3408 = vpop.f32.mrb[0].mxu0
        %v3409 = vadd.f32 0.0, %v3408
        %v3410 = vpop.f32.mrb[0].mxu0
        %3411 = vdwg.mxu0
        %3412 = vmatprep.subr.mxu0 0.0
        %3413 = vmatpush1.msra.mxu0 %v3335
        %3414 = vmatprep.subr.mxu0 0.0
        %3415 = vmatpush1.msra.mxu0 %v3336
        %3416 = vmatprep.subr.mxu0 0.0
        %3417 = vmatpush1.msra.mxu0 0.0
        %3418 = vmatprep.subr.mxu0 0.0
        %3419 = vmatpush1.msra.mxu0 0.0
        %3420 = vmatprep.subr.mxu0 0.0
        %3421 = vmatpush1.msra.mxu0 0.0
        %3422 = vmatprep.subr.mxu0 0.0
        %3423 = vmatpush1.msra.mxu0 0.0
        %3424 = vmatprep.subr.mxu0 0.0
        %3425 = vmatpush1.msra.mxu0 0.0
        %3426 = vmatprep.subr.mxu0 0.0
        %3427 = vmatpush1.msra.mxu0 0.0
        %3428 = vmatprep.subr.mxu0 0.0
        %3429 = vmatpush1.msra.mxu0 0.0
        %3430 = vmatprep.subr.mxu0 0.0
        %3431 = vmatpush1.msra.mxu0 0.0
        %3432 = vmatprep.subr.mxu0 0.0
        %3433 = vmatpush1.msra.mxu0 0.0
        %3434 = vmatprep.subr.mxu0 0.0
        %3435 = vmatpush1.msra.mxu0 0.0
        %3436 = vmatprep.subr.mxu0 0.0
        %3437 = vmatpush1.msra.mxu0 0.0
        %3438 = vmatprep.subr.mxu0 0.0
        %3439 = vmatpush1.msra.mxu0 0.0
        %3440 = vmatprep.subr.mxu0 0.0
        %3441 = vmatpush1.msra.mxu0 0.0
        %3442 = vmatprep.subr.mxu0 0.0
        %3443 = vmatpush1.msra.mxu0 0.0
        %3444 = vmatprep.subr.mxu0 0.0
        %3445 = vmatpush1.msra.mxu0 0.0
        %3446 = vmatprep.subr.mxu0 0.0
        %3447 = vmatpush1.msra.mxu0 0.0
        %3448 = vmatprep.subr.mxu0 0.0
        %3449 = vmatpush1.msra.mxu0 0.0
        %3450 = vmatprep.subr.mxu0 0.0
        %3451 = vmatpush1.msra.mxu0 0.0
        %3452 = vmatprep.subr.mxu0 0.0
        %3453 = vmatpush1.msra.mxu0 0.0
        %3454 = vmatprep.subr.mxu0 0.0
        %3455 = vmatpush1.msra.mxu0 0.0
        %3456 = vmatprep.subr.mxu0 0.0
        %3457 = vmatpush1.msra.mxu0 0.0
        %3458 = vmatprep.subr.mxu0 0.0
        %3459 = vmatpush1.msra.mxu0 0.0
        %3460 = vmatprep.subr.mxu0 0.0
        %3461 = vmatpush1.msra.mxu0 0.0
        %3462 = vmatprep.subr.mxu0 0.0
        %3463 = vmatpush1.msra.mxu0 0.0
        %3464 = vmatprep.subr.mxu0 0.0
        %3465 = vmatpush1.msra.mxu0 0.0
        %3466 = vmatprep.subr.mxu0 0.0
        %3467 = vmatpush1.msra.mxu0 0.0
        %3468 = vmatprep.subr.mxu0 0.0
        %3469 = vmatpush1.msra.mxu0 0.0
        %3470 = vmatprep.subr.mxu0 0.0
        %3471 = vmatpush1.msra.mxu0 0.0
        %3472 = vmatprep.subr.mxu0 0.0
        %3473 = vmatpush1.msra.mxu0 0.0
        %3474 = vmatprep.subr.mxu0 0.0
        %3475 = vmatpush1.msra.mxu0 0.0
        %3476 = vmatprep.mubr.f32.mxu0 0.0
        %3477 = vmatmul.mubr.f32.gmra.mrb[0].mxu0 %v726
        %v3478 = vpop.f32.mrb[0].mxu0
        %v3479 = vadd.f32 %v3409, %v3478
        %v3480 = vpop.f32.mrb[0].mxu0
        %3481 = vdwg.mxu0
        %v3482 = vld [vmem:[#allocation4 + $0x140] sm:$0xf]
        %v3484 = vsel %vm2054, %v3334, 0
        %v3487 = vsel %vm2067, %v3482, 0
        %3489 = vmatprep.subr.mxu0 0.0
        %3490 = vmatpush1.msra.mxu0 %v3487
        %3491 = vmatprep.subr.mxu0 0.0
        %3492 = vmatpush1.msra.mxu0 0.0
        %3493 = vmatprep.subr.mxu0 0.0
        %3494 = vmatpush1.msra.mxu0 0.0
        %3495 = vmatprep.subr.mxu0 0.0
        %3496 = vmatpush1.msra.mxu0 0.0
        %3497 = vmatprep.subr.mxu0 0.0
        %3498 = vmatpush1.msra.mxu0 0.0
        %3499 = vmatprep.subr.mxu0 0.0
        %3500 = vmatpush1.msra.mxu0 0.0
        %3501 = vmatprep.subr.mxu0 0.0
        %3502 = vmatpush1.msra.mxu0 0.0
        %3503 = vmatprep.subr.mxu0 0.0
        %3504 = vmatpush1.msra.mxu0 0.0
        %3505 = vmatprep.subr.mxu0 0.0
        %3506 = vmatpush1.msra.mxu0 0.0
        %3507 = vmatprep.subr.mxu0 0.0
        %3508 = vmatpush1.msra.mxu0 0.0
        %3509 = vmatprep.subr.mxu0 0.0
        %3510 = vmatpush1.msra.mxu0 0.0
        %3511 = vmatprep.subr.mxu0 0.0
        %3512 = vmatpush1.msra.mxu0 0.0
        %3513 = vmatprep.subr.mxu0 0.0
        %3514 = vmatpush1.msra.mxu0 0.0
        %3515 = vmatprep.subr.mxu0 0.0
        %3516 = vmatpush1.msra.mxu0 0.0
        %3517 = vmatprep.subr.mxu0 0.0
        %3518 = vmatpush1.msra.mxu0 0.0
        %3519 = vmatprep.subr.mxu0 0.0
        %3520 = vmatpush1.msra.mxu0 0.0
        %3521 = vmatprep.subr.mxu0 0.0
        %3522 = vmatpush1.msra.mxu0 0.0
        %3523 = vmatprep.subr.mxu0 0.0
        %3524 = vmatpush1.msra.mxu0 0.0
        %3525 = vmatprep.subr.mxu0 0.0
        %3526 = vmatpush1.msra.mxu0 0.0
        %3527 = vmatprep.subr.mxu0 0.0
        %3528 = vmatpush1.msra.mxu0 0.0
        %3529 = vmatprep.subr.mxu0 0.0
        %3530 = vmatpush1.msra.mxu0 0.0
        %3531 = vmatprep.subr.mxu0 0.0
        %3532 = vmatpush1.msra.mxu0 0.0
        %3533 = vmatprep.subr.mxu0 0.0
        %3534 = vmatpush1.msra.mxu0 0.0
        %3535 = vmatprep.subr.mxu0 0.0
        %3536 = vmatpush1.msra.mxu0 0.0
        %3537 = vmatprep.subr.mxu0 0.0
        %3538 = vmatpush1.msra.mxu0 0.0
        %3539 = vmatprep.subr.mxu0 0.0
        %3540 = vmatpush1.msra.mxu0 0.0
        %3541 = vmatprep.subr.mxu0 0.0
        %3542 = vmatpush1.msra.mxu0 0.0
        %3543 = vmatprep.subr.mxu0 0.0
        %3544 = vmatpush1.msra.mxu0 0.0
        %3545 = vmatprep.subr.mxu0 0.0
        %3546 = vmatpush1.msra.mxu0 0.0
        %3547 = vmatprep.subr.mxu0 0.0
        %3548 = vmatpush1.msra.mxu0 0.0
        %3549 = vmatprep.subr.mxu0 0.0
        %3550 = vmatpush1.msra.mxu0 0.0
        %3551 = vmatprep.subr.mxu0 0.0
        %3552 = vmatpush1.msra.mxu0 0.0
        %3553 = vmatprep.mubr.f32.mxu0 0.0
        %3554 = vmatmul.mubr.f32.gmra.mrb[0].mxu0 %v3484
        %v3555 = vpop.f32.mrb[0].mxu0
        %v3556 = vadd.f32 0.0, %v3555
        %v3557 = vpop.f32.mrb[0].mxu0
        %3558 = vdwg.mxu0
        %v3559 = vadd.f32 %v3479, %v3556
        %v3560 = vld [vmem:[%s3 + $0x35] sm:$0x1]
        %v3561 = vadd.f32 %v3559, %v3560
        %v3562 = vmul.f32 %v3561, %v3561
        %vm3563 = vcmask 1040384
        %v3564 = vsel %vm3563, %v3562, 0.0
        %3565 = vadd.xlane.f32.xlu0 %v3564
        %v3566 = vpop.xlane.xlu0 %3565
        %v3567 = vmax.f32 %v3566, 1e-24
        %v3568 = vrsqrt.pop %v3567
        %v3569 = vmul.f32 %v3561, %v3568
        %v3570 = vlaneseq
        %v3571 = vshrl.u32 %v3570, 7
        %v3572 = vsub.s32 0, %v3571
        %v3573 = vrot.slane %v3569, %v3572
        %3574 = vst [vmem:[%s272] sm:$0xff] %v3573
        %p3575 = scmp.lt.s32.totalorder %s20, 3
        %s3576 = scalar_select %p3575, %s20, 3
        %s3577 = smul.addr %s3576, 8
        %s3578 = scalar_lea.vmem %s5, %s3577
        // Predicated region
        $region53: #{interaction_module_forward.1} parent=39 // pred_check
          %p3579 = pneg %p148
        $region54: #{interaction_module_forward.1} parent=39 // pred_check_branch
          %3581 = sbr.rel (%p3579) target = $region56
        $region55: #{interaction_module_forward.1} parent=39 // pred_region
          _
        $region56: #{interaction_module_forward.1} parent=39 // pred_fallthru
          _
      $region40: #{interaction_module_forward.1} parent=5 // pred_fallthru
        _
      %p3582 = scmp.le.s32.totalorder 2, %s15
      // Predicated region
      $region57: #{interaction_module_forward.1} parent=5 // pred_check
        %p3583 = pneg %p3582
      $region58: #{interaction_module_forward.1} parent=5 // pred_check_branch
        %3585 = sbr.rel (%p3583) target = $region60
      $region59: #{interaction_module_forward.1} parent=5 // pred_region
        %s3586 = ssub.s32 %s15, 2
        // Predicated region
        $region61: #{interaction_module_forward.1} parent=59 // pred_check
          %p3587 = pneg %p154
        $region62: #{interaction_module_forward.1} parent=59 // pred_check_branch
          %3589 = sbr.rel (%p3587) target = $region64
        $region63: #{interaction_module_forward.1} parent=59 // pred_region
          %p3590 = scmp.lt.s32.totalorder %s21, 3
          %s3591 = scalar_select %p3590, %s21, 3
          %s3592 = smul.addr %s3591, 8
          %s3593 = scalar_lea.vmem %s5, %s3592
        $region64: #{interaction_module_forward.1} parent=59 // pred_fallthru
          _
      $region60: #{interaction_module_forward.1} parent=5 // pred_fallthru
        _
    $region6: #{interaction_module_forward.1} parent=1 // loop_footer
      %s19 = sadd.s32 1, %s15
    $region7: #{interaction_module_forward.1} parent=1 // loop_footer_branch
      %14 = sbr.rel target = $region3
    $region8: #{interaction_module_forward.1} parent=1 // loop_exit
      _
    %3594 = vsyncpa [#allocation3], 1
    %s3595 = scalar_lea.sflag [#allocation3], 1
    %3596 = vsyncpa %s3595, 1
    %3597 = vsyncpa [#allocation5], 1

</llo_original>
